<compile_context>
chip_gen: v7x
topology: tpu7x:2x2x1
jax: 0.10.0
libtpu: 0.0.40
codegen_flags: <defaults>
</compile_context>

<pallas_src>
import jax
import jax.numpy as jnp
from jax.experimental import pallas as pl
from jax.experimental.pallas import tpu as pltpu

# ---------------- small synthetic ViT config ----------------
IMG_SIZE = 16
PATCH = 4
IN_CHANS = 3
EMBED_DIM = 32
DEPTH = 2
NUM_HEADS = 4
NUM_CLASSES = 16
MLP_HIDDEN = EMBED_DIM * 4
GRID_SIZE = IMG_SIZE // PATCH
NUM_PATCHES = GRID_SIZE * GRID_SIZE
SEQ = NUM_PATCHES + 1
HEAD_DIM = EMBED_DIM // NUM_HEADS          # power of two (used for head-mask xor trick)
PATCH_DIM = IN_CHANS * PATCH * PATCH
LN_EPS = 1e-5
LANE = 128                                 # classifier output padded to a full lane row

# Row layout of the packed per-layer "vectors" operand (DEPTH, NUM_VEC_ROWS, D).
ROW_LN1_G = 0
ROW_LN1_B = 1
ROW_BQ = 2
ROW_BK = 3
ROW_BV = 4
ROW_TEMP = 5          # per-head temperature repeated HEAD_DIM times
ROW_PROJ_B = 6
ROW_LPI_W1 = 7        # rows 7..9   (prev, center, next taps)
ROW_LPI_B1 = 10
ROW_LPI_W2 = 11       # rows 11..13
ROW_LPI_B2 = 14
ROW_LN2_G = 15
ROW_LN2_B = 16
ROW_FC2_B = 17
NUM_VEC_ROWS = 18


# ---------------- fused whole-forward Pallas kernel ----------------
def vit_kernel(patches_ref, embed_w_ref, embed_add_ref, attn_w_ref, vecs_ref,
               mlp_w1_ref, mlp_b1_ref, mlp_w2_ref, final_norm_ref,
               head_w_ref, head_b_ref, out_ref):
    f32 = jnp.float32

    def layernorm(v, g, b):
        mu = jnp.mean(v, axis=-1, keepdims=True)
        var = jnp.mean((v - mu) ** 2, axis=-1, keepdims=True)
        return (v - mu) * jax.lax.rsqrt(var + LN_EPS) * g + b

    def l2norm_tokens(v):
        # column-wise (per-channel) L2 normalization over the token axis.
        ss = jnp.sum(v * v, axis=0, keepdims=True)
        return v * jax.lax.rsqrt(jnp.maximum(ss, 1e-24))

    # ---- patch embedding: one matmul; cls token, pos embed & bias folded into add ----
    x = jnp.dot(patches_ref[0], embed_w_ref[...],
                preferred_element_type=f32) + embed_add_ref[...]          # (SEQ, D)

    # ---- constants built once from iota (no HBM constants, no per-step DMA) ----
    r = jax.lax.broadcasted_iota(jnp.int32, (SEQ, SEQ), 0)
    c = jax.lax.broadcasted_iota(jnp.int32, (SEQ, SEQ), 1)
    shift_prev = (r == c + 1).astype(f32)      # row n selects token n-1 (0 at n=0)
    shift_next = (c == r + 1).astype(f32)      # row n selects token n+1 (0 at n=N-1)

    hr = jax.lax.broadcasted_iota(jnp.int32, (EMBED_DIM, EMBED_DIM), 0)
    hc = jax.lax.broadcasted_iota(jnp.int32, (EMBED_DIM, EMBED_DIM), 1)
    # same head  <=>  (i ^ j) < HEAD_DIM   (valid since HEAD_DIM is a power of two)
    head_mask = jnp.bitwise_xor(hr, hc) < HEAD_DIM

    for l in range(DEPTH):
        vecs = vecs_ref[l]                      # (NUM_VEC_ROWS, D)
        row = lambda i: vecs[i:i + 1]           # (1, D)

        # ---------- LN1 + XCA (all heads at once, D stays on the lane axis) ----------
        xn = layernorm(x, row(ROW_LN1_G), row(ROW_LN1_B))
        q = jnp.dot(xn, attn_w_ref[4 * l + 0], preferred_element_type=f32) + row(ROW_BQ)
        k = jnp.dot(xn, attn_w_ref[4 * l + 1], preferred_element_type=f32) + row(ROW_BK)
        v = jnp.dot(xn, attn_w_ref[4 * l + 2], preferred_element_type=f32) + row(ROW_BV)
        qn = l2norm_tokens(q)
        kn = l2norm_tokens(k)
        # cross-covariance gram (D, D) = qn^T @ kn (contract the token axis)
        g = jax.lax.dot_general(qn, kn, (((0,), (0,)), ((), ())),
                                preferred_element_type=f32)
        g = g * row(ROW_TEMP)                   # per-head learnable temperature
        g = jnp.where(head_mask, g, -jnp.inf)   # restrict softmax to each head's block
        g = g - jnp.max(g, axis=-1, keepdims=True)
        e = jnp.exp(g)
        s = e * pl.reciprocal(jnp.sum(e, axis=-1, keepdims=True), approx=True)
        # out(N, D): per head  v_h @ softmax_h^T  ==  v @ s^T  (s is block-diagonal)
        a = jax.lax.dot_general(v, s, (((1,), (1,)), ((), ())),
                                preferred_element_type=f32)
        a = jnp.dot(a, attn_w_ref[4 * l + 3], preferred_element_type=f32) + row(ROW_PROJ_B)

        # ---------- LPI: 3-tap depthwise conv over tokens (Conv -> GELU -> Conv) ------
        def dwconv3(inp, w3, b1):
            xp = jnp.dot(shift_prev, inp, preferred_element_type=f32)
            xq = jnp.dot(shift_next, inp, preferred_element_type=f32)
            return w3[0:1] * xp + w3[1:2] * inp + w3[2:3] * xq + b1

        h = jax.nn.gelu(dwconv3(a, vecs[ROW_LPI_W1:ROW_LPI_W1 + 3], row(ROW_LPI_B1)))
        a = dwconv3(h, vecs[ROW_LPI_W2:ROW_LPI_W2 + 3], row(ROW_LPI_B2))

        # ---------- residual (dropout == identity at inference) ----------
        if l == DEPTH - 1:
            # Only the cls token feeds the classifier: shrink the residual
            # stream to (1, D) before the last LN2 + MLP (saves the two
            # largest matmuls over the remaining 16 tokens).
            x = a[0:1] + x[0:1]
        else:
            x = a + x

        # ---------- LN2 + MLP + residual ----------
        xn2 = layernorm(x, row(ROW_LN2_G), row(ROW_LN2_B))
        hmid = jax.nn.gelu(jnp.dot(xn2, mlp_w1_ref[l], preferred_element_type=f32)
                           + mlp_b1_ref[l])
        x = jnp.dot(hmid, mlp_w2_ref[l], preferred_element_type=f32) + row(ROW_FC2_B) + x

    # ---------- final LayerNorm + classifier head on the cls token ----------
    # x is already (1, D) after the last layer's cls-only residual.
    xf = layernorm(x, final_norm_ref[0:1], final_norm_ref[1:2])
    logits = jnp.dot(xf, head_w_ref[...],
                     preferred_element_type=f32) + head_b_ref[...]        # (1, LANE)
    out_ref[0] = logits.astype(out_ref.dtype)                             # unmasked 128-lane store


# ---------------- parameters ----------------
def init_params(key):
    keys = iter(jax.random.split(key, 64))

    def w(shape):
        return (0.02 * jax.random.normal(next(keys), shape)).astype(jnp.float32)

    params = dict(
        patch_w=w((PATCH_DIM, EMBED_DIM)),
        patch_b=jnp.zeros((EMBED_DIM,), jnp.float32),
        cls_token=w((1, 1, EMBED_DIM)),
        pos_embed=w((1, SEQ, EMBED_DIM)),
        norm_g=jnp.ones((EMBED_DIM,), jnp.float32),
        norm_b=jnp.zeros((EMBED_DIM,), jnp.float32),
        head_w=w((EMBED_DIM, NUM_CLASSES)),
        head_b=jnp.zeros((NUM_CLASSES,), jnp.float32),
        layers=[],
    )
    for _ in range(DEPTH):
        params["layers"].append(
            dict(
                ln1_g=jnp.ones((EMBED_DIM,), jnp.float32),
                ln1_b=jnp.zeros((EMBED_DIM,), jnp.float32),
                qkv_w=w((EMBED_DIM, 3 * EMBED_DIM)),
                qkv_b=jnp.zeros((3 * EMBED_DIM,), jnp.float32),
                temp=jnp.ones((NUM_HEADS,), jnp.float32),
                proj_w=w((EMBED_DIM, EMBED_DIM)),
                proj_b=jnp.zeros((EMBED_DIM,), jnp.float32),
                lpi_w1=w((3, EMBED_DIM)),
                lpi_b1=jnp.zeros((EMBED_DIM,), jnp.float32),
                lpi_w2=w((3, EMBED_DIM)),
                lpi_b2=jnp.zeros((EMBED_DIM,), jnp.float32),
                ln2_g=jnp.ones((EMBED_DIM,), jnp.float32),
                ln2_b=jnp.zeros((EMBED_DIM,), jnp.float32),
                fc1_w=w((EMBED_DIM, MLP_HIDDEN)),
                fc1_b=jnp.zeros((MLP_HIDDEN,), jnp.float32),
                fc2_w=w((MLP_HIDDEN, EMBED_DIM)),
                fc2_b=jnp.zeros((EMBED_DIM,), jnp.float32),
            )
        )
    return params


# ---------------- forward: wrapper-side layout glue + ONE pallas_call ----------------
def vit_forward(x, params):
    bsz = x.shape[0]
    f32 = jnp.float32
    D = EMBED_DIM

    # Patch extraction (pure layout glue): NCHW -> (B, NUM_PATCHES, C*P*P),
    # then prepend a zero "cls patch" row so patch-proj + cls + pos is one matmul + add.
    xp = x.reshape(bsz, IN_CHANS, GRID_SIZE, PATCH, GRID_SIZE, PATCH)
    xp = xp.transpose(0, 2, 4, 1, 3, 5).reshape(bsz, NUM_PATCHES, PATCH_DIM)
    patches = jnp.concatenate([jnp.zeros((bsz, 1, PATCH_DIM), f32), xp], axis=1)  # (B, SEQ, CPP)

    # embed_add: row 0 = cls_token + pos[0]; rows 1.. = patch bias + pos[1:]
    add_rows = jnp.concatenate(
        [params["cls_token"].reshape(1, D),
         jnp.broadcast_to(params["patch_b"], (NUM_PATCHES, D))], axis=0)
    embed_add = params["pos_embed"][0] + add_rows                                  # (SEQ, D)

    layers = params["layers"]
    attn_w = jnp.stack([w for lyr in layers for w in
                        (lyr["qkv_w"][:, 0:D], lyr["qkv_w"][:, D:2 * D],
                         lyr["qkv_w"][:, 2 * D:3 * D], lyr["proj_w"])])            # (DEPTH*4, D, D)

    def vec_rows(lyr):
        qkv_b = lyr["qkv_b"]
        return jnp.stack([
            lyr["ln1_g"], lyr["ln1_b"],
            qkv_b[0:D], qkv_b[D:2 * D], qkv_b[2 * D:3 * D],
            jnp.repeat(lyr["temp"], HEAD_DIM),
            lyr["proj_b"],
            lyr["lpi_w1"][0], lyr["lpi_w1"][1], lyr["lpi_w1"][2],
            lyr["lpi_b1"],
            lyr["lpi_w2"][0], lyr["lpi_w2"][1], lyr["lpi_w2"][2],
            lyr["lpi_b2"],
            lyr["ln2_g"], lyr["ln2_b"],
            lyr["fc2_b"],
        ])

    vecs = jnp.stack([vec_rows(lyr) for lyr in layers])                            # (DEPTH, NUM_VEC_ROWS, D)
    mlp_w1 = jnp.stack([lyr["fc1_w"] for lyr in layers])                           # (DEPTH, D, MLP_HIDDEN)
    mlp_b1 = jnp.stack([lyr["fc1_b"].reshape(1, MLP_HIDDEN) for lyr in layers])    # (DEPTH, 1, MLP_HIDDEN)
    mlp_w2 = jnp.stack([lyr["fc2_w"] for lyr in layers])                           # (DEPTH, MLP_HIDDEN, D)
    final_norm = jnp.stack([params["norm_g"], params["norm_b"]])                   # (2, D)

    # Classifier weights zero-padded to a full 128-lane row -> unmasked output store.
    head_w = jnp.zeros((D, LANE), f32).at[:, :NUM_CLASSES].set(params["head_w"])
    head_b = jnp.zeros((1, LANE), f32).at[:, :NUM_CLASSES].set(params["head_b"])

    full = lambda shape: pl.BlockSpec(shape, lambda b: (0,) * len(shape))

    out = pl.pallas_call(
        vit_kernel,
        out_shape=jax.ShapeDtypeStruct((bsz, 1, LANE), f32),
        grid=(bsz,),
        in_specs=[
            pl.BlockSpec((1, SEQ, PATCH_DIM), lambda b: (b, 0, 0)),
            full((PATCH_DIM, EMBED_DIM)),
            full((SEQ, EMBED_DIM)),
            full((DEPTH * 4, EMBED_DIM, EMBED_DIM)),
            full((DEPTH, NUM_VEC_ROWS, EMBED_DIM)),
            full((DEPTH, EMBED_DIM, MLP_HIDDEN)),
            full((DEPTH, 1, MLP_HIDDEN)),
            full((DEPTH, MLP_HIDDEN, EMBED_DIM)),
            full((2, EMBED_DIM)),
            full((EMBED_DIM, LANE)),
            full((1, LANE)),
        ],
        out_specs=pl.BlockSpec((1, 1, LANE), lambda b: (b, 0, 0)),
        compiler_params=pltpu.CompilerParams(dimension_semantics=("parallel",)),
    )(patches, params["patch_w"], embed_add, attn_w, vecs,
      mlp_w1, mlp_b1, mlp_w2, final_norm, head_w, head_b)
    return out[:, 0, :NUM_CLASSES]


# ---------------- pure-JAX reference (same semantics, for verification) ----------------
def vit_reference(x, params):
    bsz = x.shape[0]
    D = EMBED_DIM

    xp = x.reshape(bsz, IN_CHANS, GRID_SIZE, PATCH, GRID_SIZE, PATCH)
    xp = xp.transpose(0, 2, 4, 1, 3, 5).reshape(bsz, NUM_PATCHES, PATCH_DIM)
    tok = jnp.einsum("bnp,pd->bnd", xp, params["patch_w"]) + params["patch_b"]
    cls = jnp.broadcast_to(params["cls_token"], (bsz, 1, D))
    h = jnp.concatenate([cls, tok], axis=1) + params["pos_embed"]

    def ln(v, g, b):
        mu = jnp.mean(v, -1, keepdims=True)
        var = jnp.mean((v - mu) ** 2, -1, keepdims=True)
        return (v - mu) * jax.lax.rsqrt(var + LN_EPS) * g + b

    def split_heads(t):
        return t.reshape(bsz, SEQ, NUM_HEADS, HEAD_DIM).transpose(0, 2, 1, 3)

    for lyr in params["layers"]:
        xn = ln(h, lyr["ln1_g"], lyr["ln1_b"])
        q = xn @ lyr["qkv_w"][:, 0:D] + lyr["qkv_b"][0:D]
        k = xn @ lyr["qkv_w"][:, D:2 * D] + lyr["qkv_b"][D:2 * D]
        v = xn @ lyr["qkv_w"][:, 2 * D:3 * D] + lyr["qkv_b"][2 * D:3 * D]
        qh, kh, vh = split_heads(q), split_heads(k), split_heads(v)
        qh = qh / jnp.sqrt(jnp.maximum(jnp.sum(qh * qh, axis=2, keepdims=True), 1e-24))
        kh = kh / jnp.sqrt(jnp.maximum(jnp.sum(kh * kh, axis=2, keepdims=True), 1e-24))
        attn = jnp.einsum("bhnc,bhnd->bhcd", qh, kh) * lyr["temp"][None, :, None, None]
        attn = jax.nn.softmax(attn, axis=-1)
        oh = jnp.einsum("bhcd,bhnd->bhnc", attn, vh)
        a = oh.transpose(0, 2, 1, 3).reshape(bsz, SEQ, D)
        a = a @ lyr["proj_w"] + lyr["proj_b"]

        def dwconv3(t, w3, b):
            prev = jnp.pad(t, ((0, 0), (1, 0), (0, 0)))[:, :-1, :]
            nxt = jnp.pad(t, ((0, 0), (0, 1), (0, 0)))[:, 1:, :]
            return w3[0] * prev + w3[1] * t + w3[2] * nxt + b

        a = jax.nn.gelu(dwconv3(a, lyr["lpi_w1"], lyr["lpi_b1"]))
        a = dwconv3(a, lyr["lpi_w2"], lyr["lpi_b2"])
        h = a + h
        xn2 = ln(h, lyr["ln2_g"], lyr["ln2_b"])
        m = jax.nn.gelu(xn2 @ lyr["fc1_w"] + lyr["fc1_b"]) @ lyr["fc2_w"] + lyr["fc2_b"]
        h = m + h

    hf = ln(h[:, 0], params["norm_g"], params["norm_b"])
    return hf @ params["head_w"] + params["head_b"]


if __name__ == "__main__":
    key = jax.random.PRNGKey(0)
    pkey, xkey = jax.random.split(key)
    params = init_params(pkey)
    x = jax.random.normal(xkey, (2, IN_CHANS, IMG_SIZE, IMG_SIZE), jnp.float32)

    logits = jax.jit(vit_forward)(x, params)
    jax.block_until_ready(logits)
    assert logits.shape == (2, NUM_CLASSES)
    assert bool(jnp.all(jnp.isfinite(logits)))

    ref = vit_reference(x, params)
    assert bool(jnp.allclose(logits, ref, rtol=1e-2, atol=1e-2)), float(
        jnp.max(jnp.abs(logits - ref)))
    print("KERNEL_OK")
</pallas_src>

<mosaic_0001>
module attributes {stable_mosaic.version = 11 : i64} {
  func.func @vit_kernel(%arg0: i32, %arg1: memref<1x17x48xf32, #tpu.memory_space<vmem>>, %arg2: memref<48x32xf32, #tpu.memory_space<vmem>>, %arg3: memref<17x32xf32, #tpu.memory_space<vmem>>, %arg4: memref<8x32x32xf32, #tpu.memory_space<vmem>>, %arg5: memref<2x18x32xf32, #tpu.memory_space<vmem>>, %arg6: memref<2x32x128xf32, #tpu.memory_space<vmem>>, %arg7: memref<2x1x128xf32, #tpu.memory_space<vmem>>, %arg8: memref<2x128x32xf32, #tpu.memory_space<vmem>>, %arg9: memref<2x32xf32, #tpu.memory_space<vmem>>, %arg10: memref<32x128xf32, #tpu.memory_space<vmem>>, %arg11: memref<1x128xf32, #tpu.memory_space<vmem>>, %arg12: memref<1x1x128xf32, #tpu.memory_space<vmem>>) attributes {dimension_semantics = [#tpu.dimension_semantics<parallel>], iteration_bounds = array<i64: 2>, scalar_prefetch = 0 : i64, scratch_operands = 0 : i64, tpu.core_type = #tpu.core_type<tc>, window_params = [{transform_indices = @transform_0, window_bounds = array<i64: 1, 17, 48>}, {pipeline_mode = #tpu.pipeline_mode<synchronous>, transform_indices = @transform_1, window_bounds = array<i64: 48, 32>}, {pipeline_mode = #tpu.pipeline_mode<synchronous>, transform_indices = @transform_2, window_bounds = array<i64: 17, 32>}, {pipeline_mode = #tpu.pipeline_mode<synchronous>, transform_indices = @transform_3, window_bounds = array<i64: 8, 32, 32>}, {pipeline_mode = #tpu.pipeline_mode<synchronous>, transform_indices = @transform_4, window_bounds = array<i64: 2, 18, 32>}, {pipeline_mode = #tpu.pipeline_mode<synchronous>, transform_indices = @transform_5, window_bounds = array<i64: 2, 32, 128>}, {pipeline_mode = #tpu.pipeline_mode<synchronous>, transform_indices = @transform_6, window_bounds = array<i64: 2, 1, 128>}, {pipeline_mode = #tpu.pipeline_mode<synchronous>, transform_indices = @transform_7, window_bounds = array<i64: 2, 128, 32>}, {pipeline_mode = #tpu.pipeline_mode<synchronous>, transform_indices = @transform_8, window_bounds = array<i64: 2, 32>}, {pipeline_mode = #tpu.pipeline_mode<synchronous>, transform_indices = @transform_9, window_bounds = array<i64: 32, 128>}, {pipeline_mode = #tpu.pipeline_mode<synchronous>, transform_indices = @transform_10, window_bounds = array<i64: 1, 128>}, {transform_indices = @transform_11, window_bounds = array<i64: 1, 1, 128>}]} {
    %c0 = arith.constant 0 : index
    %c0_0 = arith.constant 0 : index
    %c0_1 = arith.constant 0 : index
    %0 = vector.load %arg1[%c0, %c0_0, %c0_1] : memref<1x17x48xf32, #tpu.memory_space<vmem>>, vector<1x17x48xf32>
    %1 = vector.shape_cast %0 : vector<1x17x48xf32> to vector<17x48xf32>
    %c0_2 = arith.constant 0 : index
    %c0_3 = arith.constant 0 : index
    %2 = vector.load %arg2[%c0_2, %c0_3] : memref<48x32xf32, #tpu.memory_space<vmem>>, vector<48x32xf32>
    %cst = arith.constant dense<0.000000e+00> : vector<17x32xf32>
    %3 = tpu.matmul %1, %2, %cst {dimension_numbers = #tpu.dot_dimension_numbers<[1], [0], [0], [1], [0, 0, 1, 1], [], []>} : vector<17x48xf32>, vector<48x32xf32>, vector<17x32xf32> -> vector<17x32xf32>
    %c0_4 = arith.constant 0 : index
    %c0_5 = arith.constant 0 : index
    %4 = vector.load %arg3[%c0_4, %c0_5] : memref<17x32xf32, #tpu.memory_space<vmem>>, vector<17x32xf32>
    %5 = arith.addf %3, %4 : vector<17x32xf32>
    %6 = tpu.iota {dimensions = array<i32: 0>} : vector<17x17xi32>
    %7 = tpu.iota {dimensions = array<i32: 1>} : vector<17x17xi32>
    %c1_i32 = arith.constant 1 : i32
    %8 = vector.broadcast %c1_i32 : i32 to vector<17x17xi32>
    %9 = arith.addi %7, %8 : vector<17x17xi32>
    %10 = arith.cmpi eq, %6, %9 : vector<17x17xi32>
    %11 = arith.extui %10 : vector<17x17xi1> to vector<17x17xi32>
    %12 = arith.sitofp %11 : vector<17x17xi32> to vector<17x17xf32>
    %c1_i32_6 = arith.constant 1 : i32
    %13 = vector.broadcast %c1_i32_6 : i32 to vector<17x17xi32>
    %14 = arith.addi %6, %13 : vector<17x17xi32>
    %15 = arith.cmpi eq, %7, %14 : vector<17x17xi32>
    %16 = arith.extui %15 : vector<17x17xi1> to vector<17x17xi32>
    %17 = arith.sitofp %16 : vector<17x17xi32> to vector<17x17xf32>
    %18 = tpu.iota {dimensions = array<i32: 0>} : vector<32x32xi32>
    %19 = tpu.iota {dimensions = array<i32: 1>} : vector<32x32xi32>
    %20 = arith.xori %18, %19 : vector<32x32xi32>
    %c8_i32 = arith.constant 8 : i32
    %21 = vector.broadcast %c8_i32 : i32 to vector<32x32xi32>
    %22 = arith.cmpi slt, %20, %21 : vector<32x32xi32>
    %c0_7 = arith.constant 0 : index
    %c0_8 = arith.constant 0 : index
    %c0_9 = arith.constant 0 : index
    %23 = vector.load %arg5[%c0_7, %c0_8, %c0_9] : memref<2x18x32xf32, #tpu.memory_space<vmem>>, vector<1x18x32xf32>
    %24 = vector.shape_cast %23 : vector<1x18x32xf32> to vector<18x32xf32>
    %25 = vector.extract_strided_slice %24 {offsets = [0, 0], sizes = [1, 32], strides = [1, 1]} : vector<18x32xf32> to vector<1x32xf32>
    %26 = vector.extract_strided_slice %24 {offsets = [1, 0], sizes = [1, 32], strides = [1, 1]} : vector<18x32xf32> to vector<1x32xf32>
    %cst_10 = arith.constant dense<0.000000e+00> : vector<17xf32>
    %27 = vector.multi_reduction <add>, %5, %cst_10 [1] : vector<17x32xf32> to vector<17xf32>
    %28 = vector.shape_cast %27 : vector<17xf32> to vector<17x1xf32>
    %cst_11 = arith.constant 3.200000e+01 : f32
    %29 = vector.broadcast %cst_11 : f32 to vector<17x1xf32>
    %30 = arith.divf %28, %29 : vector<17x1xf32>
    %31 = vector.broadcast %30 : vector<17x1xf32> to vector<17x32xf32>
    %32 = arith.subf %5, %31 : vector<17x32xf32>
    %33 = arith.mulf %32, %32 : vector<17x32xf32>
    %cst_12 = arith.constant dense<0.000000e+00> : vector<17xf32>
    %34 = vector.multi_reduction <add>, %33, %cst_12 [1] : vector<17x32xf32> to vector<17xf32>
    %35 = vector.shape_cast %34 : vector<17xf32> to vector<17x1xf32>
    %cst_13 = arith.constant 3.200000e+01 : f32
    %36 = vector.broadcast %cst_13 : f32 to vector<17x1xf32>
    %37 = arith.divf %35, %36 : vector<17x1xf32>
    %38 = vector.broadcast %30 : vector<17x1xf32> to vector<17x32xf32>
    %39 = arith.subf %5, %38 : vector<17x32xf32>
    %cst_14 = arith.constant 9.99999974E-6 : f32
    %40 = vector.broadcast %cst_14 : f32 to vector<17x1xf32>
    %41 = arith.addf %37, %40 : vector<17x1xf32>
    %42 = math.rsqrt %41 : vector<17x1xf32>
    %43 = vector.broadcast %42 : vector<17x1xf32> to vector<17x32xf32>
    %44 = arith.mulf %39, %43 : vector<17x32xf32>
    %45 = vector.broadcast %25 : vector<1x32xf32> to vector<17x32xf32>
    %46 = arith.mulf %44, %45 : vector<17x32xf32>
    %47 = vector.broadcast %26 : vector<1x32xf32> to vector<17x32xf32>
    %48 = arith.addf %46, %47 : vector<17x32xf32>
    %c0_15 = arith.constant 0 : index
    %c0_16 = arith.constant 0 : index
    %c0_17 = arith.constant 0 : index
    %49 = vector.load %arg4[%c0_15, %c0_16, %c0_17] : memref<8x32x32xf32, #tpu.memory_space<vmem>>, vector<1x32x32xf32>
    %50 = vector.shape_cast %49 : vector<1x32x32xf32> to vector<32x32xf32>
    %cst_18 = arith.constant dense<0.000000e+00> : vector<17x32xf32>
    %51 = tpu.matmul %48, %50, %cst_18 {dimension_numbers = #tpu.dot_dimension_numbers<[1], [0], [0], [1], [0, 0, 1, 1], [], []>} : vector<17x32xf32>, vector<32x32xf32>, vector<17x32xf32> -> vector<17x32xf32>
    %52 = vector.extract_strided_slice %24 {offsets = [2, 0], sizes = [1, 32], strides = [1, 1]} : vector<18x32xf32> to vector<1x32xf32>
    %53 = vector.broadcast %52 : vector<1x32xf32> to vector<17x32xf32>
    %54 = arith.addf %51, %53 : vector<17x32xf32>
    %c1 = arith.constant 1 : index
    %c0_19 = arith.constant 0 : index
    %c0_20 = arith.constant 0 : index
    %55 = vector.load %arg4[%c1, %c0_19, %c0_20] : memref<8x32x32xf32, #tpu.memory_space<vmem>>, vector<1x32x32xf32>
    %56 = vector.shape_cast %55 : vector<1x32x32xf32> to vector<32x32xf32>
    %cst_21 = arith.constant dense<0.000000e+00> : vector<17x32xf32>
    %57 = tpu.matmul %48, %56, %cst_21 {dimension_numbers = #tpu.dot_dimension_numbers<[1], [0], [0], [1], [0, 0, 1, 1], [], []>} : vector<17x32xf32>, vector<32x32xf32>, vector<17x32xf32> -> vector<17x32xf32>
    %58 = vector.extract_strided_slice %24 {offsets = [3, 0], sizes = [1, 32], strides = [1, 1]} : vector<18x32xf32> to vector<1x32xf32>
    %59 = vector.broadcast %58 : vector<1x32xf32> to vector<17x32xf32>
    %60 = arith.addf %57, %59 : vector<17x32xf32>
    %c2 = arith.constant 2 : index
    %c0_22 = arith.constant 0 : index
    %c0_23 = arith.constant 0 : index
    %61 = vector.load %arg4[%c2, %c0_22, %c0_23] : memref<8x32x32xf32, #tpu.memory_space<vmem>>, vector<1x32x32xf32>
    %62 = vector.shape_cast %61 : vector<1x32x32xf32> to vector<32x32xf32>
    %cst_24 = arith.constant dense<0.000000e+00> : vector<17x32xf32>
    %63 = tpu.matmul %48, %62, %cst_24 {dimension_numbers = #tpu.dot_dimension_numbers<[1], [0], [0], [1], [0, 0, 1, 1], [], []>} : vector<17x32xf32>, vector<32x32xf32>, vector<17x32xf32> -> vector<17x32xf32>
    %64 = vector.extract_strided_slice %24 {offsets = [4, 0], sizes = [1, 32], strides = [1, 1]} : vector<18x32xf32> to vector<1x32xf32>
    %65 = vector.broadcast %64 : vector<1x32xf32> to vector<17x32xf32>
    %66 = arith.addf %63, %65 : vector<17x32xf32>
    %67 = arith.mulf %54, %54 : vector<17x32xf32>
    %cst_25 = arith.constant dense<0.000000e+00> : vector<32xf32>
    %68 = vector.multi_reduction <add>, %67, %cst_25 [0] : vector<17x32xf32> to vector<32xf32>
    %69 = vector.shape_cast %68 : vector<32xf32> to vector<1x32xf32>
    %cst_26 = arith.constant 1.000000e-24 : f32
    %70 = vector.broadcast %cst_26 : f32 to vector<1x32xf32>
    %71 = arith.maximumf %69, %70 : vector<1x32xf32>
    %72 = math.rsqrt %71 : vector<1x32xf32>
    %73 = vector.broadcast %72 : vector<1x32xf32> to vector<17x32xf32>
    %74 = arith.mulf %54, %73 : vector<17x32xf32>
    %75 = arith.mulf %60, %60 : vector<17x32xf32>
    %cst_27 = arith.constant dense<0.000000e+00> : vector<32xf32>
    %76 = vector.multi_reduction <add>, %75, %cst_27 [0] : vector<17x32xf32> to vector<32xf32>
    %77 = vector.shape_cast %76 : vector<32xf32> to vector<1x32xf32>
    %cst_28 = arith.constant 1.000000e-24 : f32
    %78 = vector.broadcast %cst_28 : f32 to vector<1x32xf32>
    %79 = arith.maximumf %77, %78 : vector<1x32xf32>
    %80 = math.rsqrt %79 : vector<1x32xf32>
    %81 = vector.broadcast %80 : vector<1x32xf32> to vector<17x32xf32>
    %82 = arith.mulf %60, %81 : vector<17x32xf32>
    %cst_29 = arith.constant dense<0.000000e+00> : vector<32x32xf32>
    %83 = tpu.matmul %74, %82, %cst_29 {dimension_numbers = #tpu.dot_dimension_numbers<[0], [0], [1], [1], [0, 1, 1, 1], [], []>} : vector<17x32xf32>, vector<17x32xf32>, vector<32x32xf32> -> vector<32x32xf32>
    %84 = vector.extract_strided_slice %24 {offsets = [5, 0], sizes = [1, 32], strides = [1, 1]} : vector<18x32xf32> to vector<1x32xf32>
    %85 = vector.broadcast %84 : vector<1x32xf32> to vector<32x32xf32>
    %86 = arith.mulf %83, %85 : vector<32x32xf32>
    %cst_30 = arith.constant 0xFF800000 : f32
    %87 = vector.broadcast %cst_30 : f32 to vector<32x32xf32>
    %88 = arith.select %22, %86, %87 : vector<32x32xi1>, vector<32x32xf32>
    %cst_31 = arith.constant dense<0xFF800000> : vector<32xf32>
    %89 = vector.multi_reduction <maximumf>, %88, %cst_31 [1] : vector<32x32xf32> to vector<32xf32>
    %90 = vector.shape_cast %89 : vector<32xf32> to vector<32x1xf32>
    %91 = vector.broadcast %90 : vector<32x1xf32> to vector<32x32xf32>
    %92 = arith.subf %88, %91 : vector<32x32xf32>
    %93 = math.exp %92 : vector<32x32xf32>
    %cst_32 = arith.constant dense<0.000000e+00> : vector<32xf32>
    %94 = vector.multi_reduction <add>, %93, %cst_32 [1] : vector<32x32xf32> to vector<32xf32>
    %95 = vector.shape_cast %94 : vector<32xf32> to vector<32x1xf32>
    %96 = tpu.reciprocal %95 {approx = true} : vector<32x1xf32> -> vector<32x1xf32>
    %97 = vector.broadcast %96 : vector<32x1xf32> to vector<32x32xf32>
    %98 = arith.mulf %93, %97 : vector<32x32xf32>
    %cst_33 = arith.constant dense<0.000000e+00> : vector<17x32xf32>
    %99 = tpu.matmul %66, %98, %cst_33 {dimension_numbers = #tpu.dot_dimension_numbers<[1], [1], [0], [0], [0, 0, 1, 0], [], []>} : vector<17x32xf32>, vector<32x32xf32>, vector<17x32xf32> -> vector<17x32xf32>
    %c3 = arith.constant 3 : index
    %c0_34 = arith.constant 0 : index
    %c0_35 = arith.constant 0 : index
    %100 = vector.load %arg4[%c3, %c0_34, %c0_35] : memref<8x32x32xf32, #tpu.memory_space<vmem>>, vector<1x32x32xf32>
    %101 = vector.shape_cast %100 : vector<1x32x32xf32> to vector<32x32xf32>
    %cst_36 = arith.constant dense<0.000000e+00> : vector<17x32xf32>
    %102 = tpu.matmul %99, %101, %cst_36 {dimension_numbers = #tpu.dot_dimension_numbers<[1], [0], [0], [1], [0, 0, 1, 1], [], []>} : vector<17x32xf32>, vector<32x32xf32>, vector<17x32xf32> -> vector<17x32xf32>
    %103 = vector.extract_strided_slice %24 {offsets = [6, 0], sizes = [1, 32], strides = [1, 1]} : vector<18x32xf32> to vector<1x32xf32>
    %104 = vector.broadcast %103 : vector<1x32xf32> to vector<17x32xf32>
    %105 = arith.addf %102, %104 : vector<17x32xf32>
    %106 = vector.extract_strided_slice %24 {offsets = [7, 0], sizes = [3, 32], strides = [1, 1]} : vector<18x32xf32> to vector<3x32xf32>
    %107 = vector.extract_strided_slice %24 {offsets = [10, 0], sizes = [1, 32], strides = [1, 1]} : vector<18x32xf32> to vector<1x32xf32>
    %cst_37 = arith.constant dense<0.000000e+00> : vector<17x32xf32>
    %108 = tpu.matmul %12, %105, %cst_37 {dimension_numbers = #tpu.dot_dimension_numbers<[1], [0], [0], [1], [0, 0, 1, 1], [], []>} : vector<17x17xf32>, vector<17x32xf32>, vector<17x32xf32> -> vector<17x32xf32>
    %cst_38 = arith.constant dense<0.000000e+00> : vector<17x32xf32>
    %109 = tpu.matmul %17, %105, %cst_38 {dimension_numbers = #tpu.dot_dimension_numbers<[1], [0], [0], [1], [0, 0, 1, 1], [], []>} : vector<17x17xf32>, vector<17x32xf32>, vector<17x32xf32> -> vector<17x32xf32>
    %110 = vector.extract_strided_slice %106 {offsets = [0, 0], sizes = [1, 32], strides = [1, 1]} : vector<3x32xf32> to vector<1x32xf32>
    %111 = vector.broadcast %110 : vector<1x32xf32> to vector<17x32xf32>
    %112 = arith.mulf %111, %108 : vector<17x32xf32>
    %113 = vector.extract_strided_slice %106 {offsets = [1, 0], sizes = [1, 32], strides = [1, 1]} : vector<3x32xf32> to vector<1x32xf32>
    %114 = vector.broadcast %113 : vector<1x32xf32> to vector<17x32xf32>
    %115 = arith.mulf %114, %105 : vector<17x32xf32>
    %116 = arith.addf %112, %115 : vector<17x32xf32>
    %117 = vector.extract_strided_slice %106 {offsets = [2, 0], sizes = [1, 32], strides = [1, 1]} : vector<3x32xf32> to vector<1x32xf32>
    %118 = vector.broadcast %117 : vector<1x32xf32> to vector<17x32xf32>
    %119 = arith.mulf %118, %109 : vector<17x32xf32>
    %120 = arith.addf %116, %119 : vector<17x32xf32>
    %121 = vector.broadcast %107 : vector<1x32xf32> to vector<17x32xf32>
    %122 = arith.addf %120, %121 : vector<17x32xf32>
    %123 = arith.mulf %122, %122 : vector<17x32xf32>
    %124 = arith.mulf %122, %123 : vector<17x32xf32>
    %cst_39 = arith.constant 4.471500e-02 : f32
    %125 = vector.broadcast %cst_39 : f32 to vector<17x32xf32>
    %126 = arith.mulf %125, %124 : vector<17x32xf32>
    %127 = arith.addf %122, %126 : vector<17x32xf32>
    %cst_40 = arith.constant 0.797884583 : f32
    %128 = vector.broadcast %cst_40 : f32 to vector<17x32xf32>
    %129 = arith.mulf %128, %127 : vector<17x32xf32>
    %130 = math.tanh %129 : vector<17x32xf32>
    %cst_41 = arith.constant 1.000000e+00 : f32
    %131 = vector.broadcast %cst_41 : f32 to vector<17x32xf32>
    %132 = arith.addf %131, %130 : vector<17x32xf32>
    %cst_42 = arith.constant 5.000000e-01 : f32
    %133 = vector.broadcast %cst_42 : f32 to vector<17x32xf32>
    %134 = arith.mulf %133, %132 : vector<17x32xf32>
    %135 = arith.mulf %122, %134 : vector<17x32xf32>
    %136 = vector.extract_strided_slice %24 {offsets = [11, 0], sizes = [3, 32], strides = [1, 1]} : vector<18x32xf32> to vector<3x32xf32>
    %137 = vector.extract_strided_slice %24 {offsets = [14, 0], sizes = [1, 32], strides = [1, 1]} : vector<18x32xf32> to vector<1x32xf32>
    %cst_43 = arith.constant dense<0.000000e+00> : vector<17x32xf32>
    %138 = tpu.matmul %12, %135, %cst_43 {dimension_numbers = #tpu.dot_dimension_numbers<[1], [0], [0], [1], [0, 0, 1, 1], [], []>} : vector<17x17xf32>, vector<17x32xf32>, vector<17x32xf32> -> vector<17x32xf32>
    %cst_44 = arith.constant dense<0.000000e+00> : vector<17x32xf32>
    %139 = tpu.matmul %17, %135, %cst_44 {dimension_numbers = #tpu.dot_dimension_numbers<[1], [0], [0], [1], [0, 0, 1, 1], [], []>} : vector<17x17xf32>, vector<17x32xf32>, vector<17x32xf32> -> vector<17x32xf32>
    %140 = vector.extract_strided_slice %136 {offsets = [0, 0], sizes = [1, 32], strides = [1, 1]} : vector<3x32xf32> to vector<1x32xf32>
    %141 = vector.broadcast %140 : vector<1x32xf32> to vector<17x32xf32>
    %142 = arith.mulf %141, %138 : vector<17x32xf32>
    %143 = vector.extract_strided_slice %136 {offsets = [1, 0], sizes = [1, 32], strides = [1, 1]} : vector<3x32xf32> to vector<1x32xf32>
    %144 = vector.broadcast %143 : vector<1x32xf32> to vector<17x32xf32>
    %145 = arith.mulf %144, %135 : vector<17x32xf32>
    %146 = arith.addf %142, %145 : vector<17x32xf32>
    %147 = vector.extract_strided_slice %136 {offsets = [2, 0], sizes = [1, 32], strides = [1, 1]} : vector<3x32xf32> to vector<1x32xf32>
    %148 = vector.broadcast %147 : vector<1x32xf32> to vector<17x32xf32>
    %149 = arith.mulf %148, %139 : vector<17x32xf32>
    %150 = arith.addf %146, %149 : vector<17x32xf32>
    %151 = vector.broadcast %137 : vector<1x32xf32> to vector<17x32xf32>
    %152 = arith.addf %150, %151 : vector<17x32xf32>
    %153 = arith.addf %152, %5 : vector<17x32xf32>
    %154 = vector.extract_strided_slice %24 {offsets = [15, 0], sizes = [1, 32], strides = [1, 1]} : vector<18x32xf32> to vector<1x32xf32>
    %155 = vector.extract_strided_slice %24 {offsets = [16, 0], sizes = [1, 32], strides = [1, 1]} : vector<18x32xf32> to vector<1x32xf32>
    %cst_45 = arith.constant dense<0.000000e+00> : vector<17xf32>
    %156 = vector.multi_reduction <add>, %153, %cst_45 [1] : vector<17x32xf32> to vector<17xf32>
    %157 = vector.shape_cast %156 : vector<17xf32> to vector<17x1xf32>
    %cst_46 = arith.constant 3.200000e+01 : f32
    %158 = vector.broadcast %cst_46 : f32 to vector<17x1xf32>
    %159 = arith.divf %157, %158 : vector<17x1xf32>
    %160 = vector.broadcast %159 : vector<17x1xf32> to vector<17x32xf32>
    %161 = arith.subf %153, %160 : vector<17x32xf32>
    %162 = arith.mulf %161, %161 : vector<17x32xf32>
    %cst_47 = arith.constant dense<0.000000e+00> : vector<17xf32>
    %163 = vector.multi_reduction <add>, %162, %cst_47 [1] : vector<17x32xf32> to vector<17xf32>
    %164 = vector.shape_cast %163 : vector<17xf32> to vector<17x1xf32>
    %cst_48 = arith.constant 3.200000e+01 : f32
    %165 = vector.broadcast %cst_48 : f32 to vector<17x1xf32>
    %166 = arith.divf %164, %165 : vector<17x1xf32>
    %167 = vector.broadcast %159 : vector<17x1xf32> to vector<17x32xf32>
    %168 = arith.subf %153, %167 : vector<17x32xf32>
    %cst_49 = arith.constant 9.99999974E-6 : f32
    %169 = vector.broadcast %cst_49 : f32 to vector<17x1xf32>
    %170 = arith.addf %166, %169 : vector<17x1xf32>
    %171 = math.rsqrt %170 : vector<17x1xf32>
    %172 = vector.broadcast %171 : vector<17x1xf32> to vector<17x32xf32>
    %173 = arith.mulf %168, %172 : vector<17x32xf32>
    %174 = vector.broadcast %154 : vector<1x32xf32> to vector<17x32xf32>
    %175 = arith.mulf %173, %174 : vector<17x32xf32>
    %176 = vector.broadcast %155 : vector<1x32xf32> to vector<17x32xf32>
    %177 = arith.addf %175, %176 : vector<17x32xf32>
    %c0_50 = arith.constant 0 : index
    %c0_51 = arith.constant 0 : index
    %c0_52 = arith.constant 0 : index
    %178 = vector.load %arg6[%c0_50, %c0_51, %c0_52] : memref<2x32x128xf32, #tpu.memory_space<vmem>>, vector<1x32x128xf32>
    %179 = vector.shape_cast %178 : vector<1x32x128xf32> to vector<32x128xf32>
    %cst_53 = arith.constant dense<0.000000e+00> : vector<17x128xf32>
    %180 = tpu.matmul %177, %179, %cst_53 {dimension_numbers = #tpu.dot_dimension_numbers<[1], [0], [0], [1], [0, 0, 1, 1], [], []>} : vector<17x32xf32>, vector<32x128xf32>, vector<17x128xf32> -> vector<17x128xf32>
    %c0_54 = arith.constant 0 : index
    %c0_55 = arith.constant 0 : index
    %c0_56 = arith.constant 0 : index
    %181 = vector.load %arg7[%c0_54, %c0_55, %c0_56] : memref<2x1x128xf32, #tpu.memory_space<vmem>>, vector<1x1x128xf32>
    %182 = vector.shape_cast %181 : vector<1x1x128xf32> to vector<1x128xf32>
    %183 = vector.broadcast %182 : vector<1x128xf32> to vector<17x128xf32>
    %184 = arith.addf %180, %183 : vector<17x128xf32>
    %185 = arith.mulf %184, %184 : vector<17x128xf32>
    %186 = arith.mulf %184, %185 : vector<17x128xf32>
    %cst_57 = arith.constant 4.471500e-02 : f32
    %187 = vector.broadcast %cst_57 : f32 to vector<17x128xf32>
    %188 = arith.mulf %187, %186 : vector<17x128xf32>
    %189 = arith.addf %184, %188 : vector<17x128xf32>
    %cst_58 = arith.constant 0.797884583 : f32
    %190 = vector.broadcast %cst_58 : f32 to vector<17x128xf32>
    %191 = arith.mulf %190, %189 : vector<17x128xf32>
    %192 = math.tanh %191 : vector<17x128xf32>
    %cst_59 = arith.constant 1.000000e+00 : f32
    %193 = vector.broadcast %cst_59 : f32 to vector<17x128xf32>
    %194 = arith.addf %193, %192 : vector<17x128xf32>
    %cst_60 = arith.constant 5.000000e-01 : f32
    %195 = vector.broadcast %cst_60 : f32 to vector<17x128xf32>
    %196 = arith.mulf %195, %194 : vector<17x128xf32>
    %197 = arith.mulf %184, %196 : vector<17x128xf32>
    %c0_61 = arith.constant 0 : index
    %c0_62 = arith.constant 0 : index
    %c0_63 = arith.constant 0 : index
    %198 = vector.load %arg8[%c0_61, %c0_62, %c0_63] : memref<2x128x32xf32, #tpu.memory_space<vmem>>, vector<1x128x32xf32>
    %199 = vector.shape_cast %198 : vector<1x128x32xf32> to vector<128x32xf32>
    %cst_64 = arith.constant dense<0.000000e+00> : vector<17x32xf32>
    %200 = tpu.matmul %197, %199, %cst_64 {dimension_numbers = #tpu.dot_dimension_numbers<[1], [0], [0], [1], [0, 0, 1, 1], [], []>} : vector<17x128xf32>, vector<128x32xf32>, vector<17x32xf32> -> vector<17x32xf32>
    %201 = vector.extract_strided_slice %24 {offsets = [17, 0], sizes = [1, 32], strides = [1, 1]} : vector<18x32xf32> to vector<1x32xf32>
    %202 = vector.broadcast %201 : vector<1x32xf32> to vector<17x32xf32>
    %203 = arith.addf %200, %202 : vector<17x32xf32>
    %204 = arith.addf %203, %153 : vector<17x32xf32>
    %c1_65 = arith.constant 1 : index
    %c0_66 = arith.constant 0 : index
    %c0_67 = arith.constant 0 : index
    %205 = vector.load %arg5[%c1_65, %c0_66, %c0_67] : memref<2x18x32xf32, #tpu.memory_space<vmem>>, vector<1x18x32xf32>
    %206 = vector.shape_cast %205 : vector<1x18x32xf32> to vector<18x32xf32>
    %207 = vector.extract_strided_slice %206 {offsets = [0, 0], sizes = [1, 32], strides = [1, 1]} : vector<18x32xf32> to vector<1x32xf32>
    %208 = vector.extract_strided_slice %206 {offsets = [1, 0], sizes = [1, 32], strides = [1, 1]} : vector<18x32xf32> to vector<1x32xf32>
    %cst_68 = arith.constant dense<0.000000e+00> : vector<17xf32>
    %209 = vector.multi_reduction <add>, %204, %cst_68 [1] : vector<17x32xf32> to vector<17xf32>
    %210 = vector.shape_cast %209 : vector<17xf32> to vector<17x1xf32>
    %cst_69 = arith.constant 3.200000e+01 : f32
    %211 = vector.broadcast %cst_69 : f32 to vector<17x1xf32>
    %212 = arith.divf %210, %211 : vector<17x1xf32>
    %213 = vector.broadcast %212 : vector<17x1xf32> to vector<17x32xf32>
    %214 = arith.subf %204, %213 : vector<17x32xf32>
    %215 = arith.mulf %214, %214 : vector<17x32xf32>
    %cst_70 = arith.constant dense<0.000000e+00> : vector<17xf32>
    %216 = vector.multi_reduction <add>, %215, %cst_70 [1] : vector<17x32xf32> to vector<17xf32>
    %217 = vector.shape_cast %216 : vector<17xf32> to vector<17x1xf32>
    %cst_71 = arith.constant 3.200000e+01 : f32
    %218 = vector.broadcast %cst_71 : f32 to vector<17x1xf32>
    %219 = arith.divf %217, %218 : vector<17x1xf32>
    %220 = vector.broadcast %212 : vector<17x1xf32> to vector<17x32xf32>
    %221 = arith.subf %204, %220 : vector<17x32xf32>
    %cst_72 = arith.constant 9.99999974E-6 : f32
    %222 = vector.broadcast %cst_72 : f32 to vector<17x1xf32>
    %223 = arith.addf %219, %222 : vector<17x1xf32>
    %224 = math.rsqrt %223 : vector<17x1xf32>
    %225 = vector.broadcast %224 : vector<17x1xf32> to vector<17x32xf32>
    %226 = arith.mulf %221, %225 : vector<17x32xf32>
    %227 = vector.broadcast %207 : vector<1x32xf32> to vector<17x32xf32>
    %228 = arith.mulf %226, %227 : vector<17x32xf32>
    %229 = vector.broadcast %208 : vector<1x32xf32> to vector<17x32xf32>
    %230 = arith.addf %228, %229 : vector<17x32xf32>
    %c4 = arith.constant 4 : index
    %c0_73 = arith.constant 0 : index
    %c0_74 = arith.constant 0 : index
    %231 = vector.load %arg4[%c4, %c0_73, %c0_74] : memref<8x32x32xf32, #tpu.memory_space<vmem>>, vector<1x32x32xf32>
    %232 = vector.shape_cast %231 : vector<1x32x32xf32> to vector<32x32xf32>
    %cst_75 = arith.constant dense<0.000000e+00> : vector<17x32xf32>
    %233 = tpu.matmul %230, %232, %cst_75 {dimension_numbers = #tpu.dot_dimension_numbers<[1], [0], [0], [1], [0, 0, 1, 1], [], []>} : vector<17x32xf32>, vector<32x32xf32>, vector<17x32xf32> -> vector<17x32xf32>
    %234 = vector.extract_strided_slice %206 {offsets = [2, 0], sizes = [1, 32], strides = [1, 1]} : vector<18x32xf32> to vector<1x32xf32>
    %235 = vector.broadcast %234 : vector<1x32xf32> to vector<17x32xf32>
    %236 = arith.addf %233, %235 : vector<17x32xf32>
    %c5 = arith.constant 5 : index
    %c0_76 = arith.constant 0 : index
    %c0_77 = arith.constant 0 : index
    %237 = vector.load %arg4[%c5, %c0_76, %c0_77] : memref<8x32x32xf32, #tpu.memory_space<vmem>>, vector<1x32x32xf32>
    %238 = vector.shape_cast %237 : vector<1x32x32xf32> to vector<32x32xf32>
    %cst_78 = arith.constant dense<0.000000e+00> : vector<17x32xf32>
    %239 = tpu.matmul %230, %238, %cst_78 {dimension_numbers = #tpu.dot_dimension_numbers<[1], [0], [0], [1], [0, 0, 1, 1], [], []>} : vector<17x32xf32>, vector<32x32xf32>, vector<17x32xf32> -> vector<17x32xf32>
    %240 = vector.extract_strided_slice %206 {offsets = [3, 0], sizes = [1, 32], strides = [1, 1]} : vector<18x32xf32> to vector<1x32xf32>
    %241 = vector.broadcast %240 : vector<1x32xf32> to vector<17x32xf32>
    %242 = arith.addf %239, %241 : vector<17x32xf32>
    %c6 = arith.constant 6 : index
    %c0_79 = arith.constant 0 : index
    %c0_80 = arith.constant 0 : index
    %243 = vector.load %arg4[%c6, %c0_79, %c0_80] : memref<8x32x32xf32, #tpu.memory_space<vmem>>, vector<1x32x32xf32>
    %244 = vector.shape_cast %243 : vector<1x32x32xf32> to vector<32x32xf32>
    %cst_81 = arith.constant dense<0.000000e+00> : vector<17x32xf32>
    %245 = tpu.matmul %230, %244, %cst_81 {dimension_numbers = #tpu.dot_dimension_numbers<[1], [0], [0], [1], [0, 0, 1, 1], [], []>} : vector<17x32xf32>, vector<32x32xf32>, vector<17x32xf32> -> vector<17x32xf32>
    %246 = vector.extract_strided_slice %206 {offsets = [4, 0], sizes = [1, 32], strides = [1, 1]} : vector<18x32xf32> to vector<1x32xf32>
    %247 = vector.broadcast %246 : vector<1x32xf32> to vector<17x32xf32>
    %248 = arith.addf %245, %247 : vector<17x32xf32>
    %249 = arith.mulf %236, %236 : vector<17x32xf32>
    %cst_82 = arith.constant dense<0.000000e+00> : vector<32xf32>
    %250 = vector.multi_reduction <add>, %249, %cst_82 [0] : vector<17x32xf32> to vector<32xf32>
    %251 = vector.shape_cast %250 : vector<32xf32> to vector<1x32xf32>
    %cst_83 = arith.constant 1.000000e-24 : f32
    %252 = vector.broadcast %cst_83 : f32 to vector<1x32xf32>
    %253 = arith.maximumf %251, %252 : vector<1x32xf32>
    %254 = math.rsqrt %253 : vector<1x32xf32>
    %255 = vector.broadcast %254 : vector<1x32xf32> to vector<17x32xf32>
    %256 = arith.mulf %236, %255 : vector<17x32xf32>
    %257 = arith.mulf %242, %242 : vector<17x32xf32>
    %cst_84 = arith.constant dense<0.000000e+00> : vector<32xf32>
    %258 = vector.multi_reduction <add>, %257, %cst_84 [0] : vector<17x32xf32> to vector<32xf32>
    %259 = vector.shape_cast %258 : vector<32xf32> to vector<1x32xf32>
    %cst_85 = arith.constant 1.000000e-24 : f32
    %260 = vector.broadcast %cst_85 : f32 to vector<1x32xf32>
    %261 = arith.maximumf %259, %260 : vector<1x32xf32>
    %262 = math.rsqrt %261 : vector<1x32xf32>
    %263 = vector.broadcast %262 : vector<1x32xf32> to vector<17x32xf32>
    %264 = arith.mulf %242, %263 : vector<17x32xf32>
    %cst_86 = arith.constant dense<0.000000e+00> : vector<32x32xf32>
    %265 = tpu.matmul %256, %264, %cst_86 {dimension_numbers = #tpu.dot_dimension_numbers<[0], [0], [1], [1], [0, 1, 1, 1], [], []>} : vector<17x32xf32>, vector<17x32xf32>, vector<32x32xf32> -> vector<32x32xf32>
    %266 = vector.extract_strided_slice %206 {offsets = [5, 0], sizes = [1, 32], strides = [1, 1]} : vector<18x32xf32> to vector<1x32xf32>
    %267 = vector.broadcast %266 : vector<1x32xf32> to vector<32x32xf32>
    %268 = arith.mulf %265, %267 : vector<32x32xf32>
    %cst_87 = arith.constant 0xFF800000 : f32
    %269 = vector.broadcast %cst_87 : f32 to vector<32x32xf32>
    %270 = arith.select %22, %268, %269 : vector<32x32xi1>, vector<32x32xf32>
    %cst_88 = arith.constant dense<0xFF800000> : vector<32xf32>
    %271 = vector.multi_reduction <maximumf>, %270, %cst_88 [1] : vector<32x32xf32> to vector<32xf32>
    %272 = vector.shape_cast %271 : vector<32xf32> to vector<32x1xf32>
    %273 = vector.broadcast %272 : vector<32x1xf32> to vector<32x32xf32>
    %274 = arith.subf %270, %273 : vector<32x32xf32>
    %275 = math.exp %274 : vector<32x32xf32>
    %cst_89 = arith.constant dense<0.000000e+00> : vector<32xf32>
    %276 = vector.multi_reduction <add>, %275, %cst_89 [1] : vector<32x32xf32> to vector<32xf32>
    %277 = vector.shape_cast %276 : vector<32xf32> to vector<32x1xf32>
    %278 = tpu.reciprocal %277 {approx = true} : vector<32x1xf32> -> vector<32x1xf32>
    %279 = vector.broadcast %278 : vector<32x1xf32> to vector<32x32xf32>
    %280 = arith.mulf %275, %279 : vector<32x32xf32>
    %cst_90 = arith.constant dense<0.000000e+00> : vector<17x32xf32>
    %281 = tpu.matmul %248, %280, %cst_90 {dimension_numbers = #tpu.dot_dimension_numbers<[1], [1], [0], [0], [0, 0, 1, 0], [], []>} : vector<17x32xf32>, vector<32x32xf32>, vector<17x32xf32> -> vector<17x32xf32>
    %c7 = arith.constant 7 : index
    %c0_91 = arith.constant 0 : index
    %c0_92 = arith.constant 0 : index
    %282 = vector.load %arg4[%c7, %c0_91, %c0_92] : memref<8x32x32xf32, #tpu.memory_space<vmem>>, vector<1x32x32xf32>
    %283 = vector.shape_cast %282 : vector<1x32x32xf32> to vector<32x32xf32>
    %cst_93 = arith.constant dense<0.000000e+00> : vector<17x32xf32>
    %284 = tpu.matmul %281, %283, %cst_93 {dimension_numbers = #tpu.dot_dimension_numbers<[1], [0], [0], [1], [0, 0, 1, 1], [], []>} : vector<17x32xf32>, vector<32x32xf32>, vector<17x32xf32> -> vector<17x32xf32>
    %285 = vector.extract_strided_slice %206 {offsets = [6, 0], sizes = [1, 32], strides = [1, 1]} : vector<18x32xf32> to vector<1x32xf32>
    %286 = vector.broadcast %285 : vector<1x32xf32> to vector<17x32xf32>
    %287 = arith.addf %284, %286 : vector<17x32xf32>
    %288 = vector.extract_strided_slice %206 {offsets = [7, 0], sizes = [3, 32], strides = [1, 1]} : vector<18x32xf32> to vector<3x32xf32>
    %289 = vector.extract_strided_slice %206 {offsets = [10, 0], sizes = [1, 32], strides = [1, 1]} : vector<18x32xf32> to vector<1x32xf32>
    %cst_94 = arith.constant dense<0.000000e+00> : vector<17x32xf32>
    %290 = tpu.matmul %12, %287, %cst_94 {dimension_numbers = #tpu.dot_dimension_numbers<[1], [0], [0], [1], [0, 0, 1, 1], [], []>} : vector<17x17xf32>, vector<17x32xf32>, vector<17x32xf32> -> vector<17x32xf32>
    %cst_95 = arith.constant dense<0.000000e+00> : vector<17x32xf32>
    %291 = tpu.matmul %17, %287, %cst_95 {dimension_numbers = #tpu.dot_dimension_numbers<[1], [0], [0], [1], [0, 0, 1, 1], [], []>} : vector<17x17xf32>, vector<17x32xf32>, vector<17x32xf32> -> vector<17x32xf32>
    %292 = vector.extract_strided_slice %288 {offsets = [0, 0], sizes = [1, 32], strides = [1, 1]} : vector<3x32xf32> to vector<1x32xf32>
    %293 = vector.broadcast %292 : vector<1x32xf32> to vector<17x32xf32>
    %294 = arith.mulf %293, %290 : vector<17x32xf32>
    %295 = vector.extract_strided_slice %288 {offsets = [1, 0], sizes = [1, 32], strides = [1, 1]} : vector<3x32xf32> to vector<1x32xf32>
    %296 = vector.broadcast %295 : vector<1x32xf32> to vector<17x32xf32>
    %297 = arith.mulf %296, %287 : vector<17x32xf32>
    %298 = arith.addf %294, %297 : vector<17x32xf32>
    %299 = vector.extract_strided_slice %288 {offsets = [2, 0], sizes = [1, 32], strides = [1, 1]} : vector<3x32xf32> to vector<1x32xf32>
    %300 = vector.broadcast %299 : vector<1x32xf32> to vector<17x32xf32>
    %301 = arith.mulf %300, %291 : vector<17x32xf32>
    %302 = arith.addf %298, %301 : vector<17x32xf32>
    %303 = vector.broadcast %289 : vector<1x32xf32> to vector<17x32xf32>
    %304 = arith.addf %302, %303 : vector<17x32xf32>
    %305 = arith.mulf %304, %304 : vector<17x32xf32>
    %306 = arith.mulf %304, %305 : vector<17x32xf32>
    %cst_96 = arith.constant 4.471500e-02 : f32
    %307 = vector.broadcast %cst_96 : f32 to vector<17x32xf32>
    %308 = arith.mulf %307, %306 : vector<17x32xf32>
    %309 = arith.addf %304, %308 : vector<17x32xf32>
    %cst_97 = arith.constant 0.797884583 : f32
    %310 = vector.broadcast %cst_97 : f32 to vector<17x32xf32>
    %311 = arith.mulf %310, %309 : vector<17x32xf32>
    %312 = math.tanh %311 : vector<17x32xf32>
    %cst_98 = arith.constant 1.000000e+00 : f32
    %313 = vector.broadcast %cst_98 : f32 to vector<17x32xf32>
    %314 = arith.addf %313, %312 : vector<17x32xf32>
    %cst_99 = arith.constant 5.000000e-01 : f32
    %315 = vector.broadcast %cst_99 : f32 to vector<17x32xf32>
    %316 = arith.mulf %315, %314 : vector<17x32xf32>
    %317 = arith.mulf %304, %316 : vector<17x32xf32>
    %318 = vector.extract_strided_slice %206 {offsets = [11, 0], sizes = [3, 32], strides = [1, 1]} : vector<18x32xf32> to vector<3x32xf32>
    %319 = vector.extract_strided_slice %206 {offsets = [14, 0], sizes = [1, 32], strides = [1, 1]} : vector<18x32xf32> to vector<1x32xf32>
    %cst_100 = arith.constant dense<0.000000e+00> : vector<17x32xf32>
    %320 = tpu.matmul %12, %317, %cst_100 {dimension_numbers = #tpu.dot_dimension_numbers<[1], [0], [0], [1], [0, 0, 1, 1], [], []>} : vector<17x17xf32>, vector<17x32xf32>, vector<17x32xf32> -> vector<17x32xf32>
    %cst_101 = arith.constant dense<0.000000e+00> : vector<17x32xf32>
    %321 = tpu.matmul %17, %317, %cst_101 {dimension_numbers = #tpu.dot_dimension_numbers<[1], [0], [0], [1], [0, 0, 1, 1], [], []>} : vector<17x17xf32>, vector<17x32xf32>, vector<17x32xf32> -> vector<17x32xf32>
    %322 = vector.extract_strided_slice %318 {offsets = [0, 0], sizes = [1, 32], strides = [1, 1]} : vector<3x32xf32> to vector<1x32xf32>
    %323 = vector.broadcast %322 : vector<1x32xf32> to vector<17x32xf32>
    %324 = arith.mulf %323, %320 : vector<17x32xf32>
    %325 = vector.extract_strided_slice %318 {offsets = [1, 0], sizes = [1, 32], strides = [1, 1]} : vector<3x32xf32> to vector<1x32xf32>
    %326 = vector.broadcast %325 : vector<1x32xf32> to vector<17x32xf32>
    %327 = arith.mulf %326, %317 : vector<17x32xf32>
    %328 = arith.addf %324, %327 : vector<17x32xf32>
    %329 = vector.extract_strided_slice %318 {offsets = [2, 0], sizes = [1, 32], strides = [1, 1]} : vector<3x32xf32> to vector<1x32xf32>
    %330 = vector.broadcast %329 : vector<1x32xf32> to vector<17x32xf32>
    %331 = arith.mulf %330, %321 : vector<17x32xf32>
    %332 = arith.addf %328, %331 : vector<17x32xf32>
    %333 = vector.broadcast %319 : vector<1x32xf32> to vector<17x32xf32>
    %334 = arith.addf %332, %333 : vector<17x32xf32>
    %335 = vector.extract_strided_slice %334 {offsets = [0, 0], sizes = [1, 32], strides = [1, 1]} : vector<17x32xf32> to vector<1x32xf32>
    %336 = vector.extract_strided_slice %204 {offsets = [0, 0], sizes = [1, 32], strides = [1, 1]} : vector<17x32xf32> to vector<1x32xf32>
    %337 = arith.addf %335, %336 : vector<1x32xf32>
    %338 = vector.extract_strided_slice %206 {offsets = [15, 0], sizes = [1, 32], strides = [1, 1]} : vector<18x32xf32> to vector<1x32xf32>
    %339 = vector.extract_strided_slice %206 {offsets = [16, 0], sizes = [1, 32], strides = [1, 1]} : vector<18x32xf32> to vector<1x32xf32>
    %cst_102 = arith.constant dense<0.000000e+00> : vector<1xf32>
    %340 = vector.multi_reduction <add>, %337, %cst_102 [1] : vector<1x32xf32> to vector<1xf32>
    %341 = vector.shape_cast %340 : vector<1xf32> to vector<1x1xf32>
    %cst_103 = arith.constant 3.200000e+01 : f32
    %342 = vector.broadcast %cst_103 : f32 to vector<1x1xf32>
    %343 = arith.divf %341, %342 : vector<1x1xf32>
    %344 = vector.broadcast %343 : vector<1x1xf32> to vector<1x32xf32>
    %345 = arith.subf %337, %344 : vector<1x32xf32>
    %346 = arith.mulf %345, %345 : vector<1x32xf32>
    %cst_104 = arith.constant dense<0.000000e+00> : vector<1xf32>
    %347 = vector.multi_reduction <add>, %346, %cst_104 [1] : vector<1x32xf32> to vector<1xf32>
    %348 = vector.shape_cast %347 : vector<1xf32> to vector<1x1xf32>
    %cst_105 = arith.constant 3.200000e+01 : f32
    %349 = vector.broadcast %cst_105 : f32 to vector<1x1xf32>
    %350 = arith.divf %348, %349 : vector<1x1xf32>
    %351 = vector.broadcast %343 : vector<1x1xf32> to vector<1x32xf32>
    %352 = arith.subf %337, %351 : vector<1x32xf32>
    %cst_106 = arith.constant 9.99999974E-6 : f32
    %353 = vector.broadcast %cst_106 : f32 to vector<1x1xf32>
    %354 = arith.addf %350, %353 : vector<1x1xf32>
    %355 = math.rsqrt %354 : vector<1x1xf32>
    %356 = vector.broadcast %355 : vector<1x1xf32> to vector<1x32xf32>
    %357 = arith.mulf %352, %356 : vector<1x32xf32>
    %358 = arith.mulf %357, %338 : vector<1x32xf32>
    %359 = arith.addf %358, %339 : vector<1x32xf32>
    %c1_107 = arith.constant 1 : index
    %c0_108 = arith.constant 0 : index
    %c0_109 = arith.constant 0 : index
    %360 = vector.load %arg6[%c1_107, %c0_108, %c0_109] : memref<2x32x128xf32, #tpu.memory_space<vmem>>, vector<1x32x128xf32>
    %361 = vector.shape_cast %360 : vector<1x32x128xf32> to vector<32x128xf32>
    %cst_110 = arith.constant dense<0.000000e+00> : vector<1x128xf32>
    %362 = tpu.matmul %359, %361, %cst_110 {dimension_numbers = #tpu.dot_dimension_numbers<[1], [0], [0], [1], [0, 0, 1, 1], [], []>} : vector<1x32xf32>, vector<32x128xf32>, vector<1x128xf32> -> vector<1x128xf32>
    %c1_111 = arith.constant 1 : index
    %c0_112 = arith.constant 0 : index
    %c0_113 = arith.constant 0 : index
    %363 = vector.load %arg7[%c1_111, %c0_112, %c0_113] : memref<2x1x128xf32, #tpu.memory_space<vmem>>, vector<1x1x128xf32>
    %364 = vector.shape_cast %363 : vector<1x1x128xf32> to vector<1x128xf32>
    %365 = arith.addf %362, %364 : vector<1x128xf32>
    %366 = arith.mulf %365, %365 : vector<1x128xf32>
    %367 = arith.mulf %365, %366 : vector<1x128xf32>
    %cst_114 = arith.constant 4.471500e-02 : f32
    %368 = vector.broadcast %cst_114 : f32 to vector<1x128xf32>
    %369 = arith.mulf %368, %367 : vector<1x128xf32>
    %370 = arith.addf %365, %369 : vector<1x128xf32>
    %cst_115 = arith.constant 0.797884583 : f32
    %371 = vector.broadcast %cst_115 : f32 to vector<1x128xf32>
    %372 = arith.mulf %371, %370 : vector<1x128xf32>
    %373 = math.tanh %372 : vector<1x128xf32>
    %cst_116 = arith.constant 1.000000e+00 : f32
    %374 = vector.broadcast %cst_116 : f32 to vector<1x128xf32>
    %375 = arith.addf %374, %373 : vector<1x128xf32>
    %cst_117 = arith.constant 5.000000e-01 : f32
    %376 = vector.broadcast %cst_117 : f32 to vector<1x128xf32>
    %377 = arith.mulf %376, %375 : vector<1x128xf32>
    %378 = arith.mulf %365, %377 : vector<1x128xf32>
    %c1_118 = arith.constant 1 : index
    %c0_119 = arith.constant 0 : index
    %c0_120 = arith.constant 0 : index
    %379 = vector.load %arg8[%c1_118, %c0_119, %c0_120] : memref<2x128x32xf32, #tpu.memory_space<vmem>>, vector<1x128x32xf32>
    %380 = vector.shape_cast %379 : vector<1x128x32xf32> to vector<128x32xf32>
    %cst_121 = arith.constant dense<0.000000e+00> : vector<1x32xf32>
    %381 = tpu.matmul %378, %380, %cst_121 {dimension_numbers = #tpu.dot_dimension_numbers<[1], [0], [0], [1], [0, 0, 1, 1], [], []>} : vector<1x128xf32>, vector<128x32xf32>, vector<1x32xf32> -> vector<1x32xf32>
    %382 = vector.extract_strided_slice %206 {offsets = [17, 0], sizes = [1, 32], strides = [1, 1]} : vector<18x32xf32> to vector<1x32xf32>
    %383 = arith.addf %381, %382 : vector<1x32xf32>
    %384 = arith.addf %383, %337 : vector<1x32xf32>
    %c0_122 = arith.constant 0 : index
    %c0_123 = arith.constant 0 : index
    %385 = vector.load %arg9[%c0_122, %c0_123] : memref<2x32xf32, #tpu.memory_space<vmem>>, vector<1x32xf32>
    %c1_124 = arith.constant 1 : index
    %c0_125 = arith.constant 0 : index
    %386 = vector.load %arg9[%c1_124, %c0_125] : memref<2x32xf32, #tpu.memory_space<vmem>>, vector<1x32xf32>
    %cst_126 = arith.constant dense<0.000000e+00> : vector<1xf32>
    %387 = vector.multi_reduction <add>, %384, %cst_126 [1] : vector<1x32xf32> to vector<1xf32>
    %388 = vector.shape_cast %387 : vector<1xf32> to vector<1x1xf32>
    %cst_127 = arith.constant 3.200000e+01 : f32
    %389 = vector.broadcast %cst_127 : f32 to vector<1x1xf32>
    %390 = arith.divf %388, %389 : vector<1x1xf32>
    %391 = vector.broadcast %390 : vector<1x1xf32> to vector<1x32xf32>
    %392 = arith.subf %384, %391 : vector<1x32xf32>
    %393 = arith.mulf %392, %392 : vector<1x32xf32>
    %cst_128 = arith.constant dense<0.000000e+00> : vector<1xf32>
    %394 = vector.multi_reduction <add>, %393, %cst_128 [1] : vector<1x32xf32> to vector<1xf32>
    %395 = vector.shape_cast %394 : vector<1xf32> to vector<1x1xf32>
    %cst_129 = arith.constant 3.200000e+01 : f32
    %396 = vector.broadcast %cst_129 : f32 to vector<1x1xf32>
    %397 = arith.divf %395, %396 : vector<1x1xf32>
    %398 = vector.broadcast %390 : vector<1x1xf32> to vector<1x32xf32>
    %399 = arith.subf %384, %398 : vector<1x32xf32>
    %cst_130 = arith.constant 9.99999974E-6 : f32
    %400 = vector.broadcast %cst_130 : f32 to vector<1x1xf32>
    %401 = arith.addf %397, %400 : vector<1x1xf32>
    %402 = math.rsqrt %401 : vector<1x1xf32>
    %403 = vector.broadcast %402 : vector<1x1xf32> to vector<1x32xf32>
    %404 = arith.mulf %399, %403 : vector<1x32xf32>
    %405 = arith.mulf %404, %385 : vector<1x32xf32>
    %406 = arith.addf %405, %386 : vector<1x32xf32>
    %c0_131 = arith.constant 0 : index
    %c0_132 = arith.constant 0 : index
    %407 = vector.load %arg10[%c0_131, %c0_132] : memref<32x128xf32, #tpu.memory_space<vmem>>, vector<32x128xf32>
    %cst_133 = arith.constant dense<0.000000e+00> : vector<1x128xf32>
    %408 = tpu.matmul %406, %407, %cst_133 {dimension_numbers = #tpu.dot_dimension_numbers<[1], [0], [0], [1], [0, 0, 1, 1], [], []>} : vector<1x32xf32>, vector<32x128xf32>, vector<1x128xf32> -> vector<1x128xf32>
    %c0_134 = arith.constant 0 : index
    %c0_135 = arith.constant 0 : index
    %409 = vector.load %arg11[%c0_134, %c0_135] : memref<1x128xf32, #tpu.memory_space<vmem>>, vector<1x128xf32>
    %410 = arith.addf %408, %409 : vector<1x128xf32>
    %c0_136 = arith.constant 0 : index
    %c0_137 = arith.constant 0 : index
    %c0_138 = arith.constant 0 : index
    %411 = vector.load %arg12[%c0_136, %c0_137, %c0_138] : memref<1x1x128xf32, #tpu.memory_space<vmem>>, vector<1x1x128xf32>
    %412 = vector.shape_cast %411 : vector<1x1x128xf32> to vector<1x128xf32>
    %413 = vector.shape_cast %410 : vector<1x128xf32> to vector<1x1x128xf32>
    tpu.vector_store %arg12[%c0_136, %c0_137, %c0_138], %413 {strides = array<i32>} : memref<1x1x128xf32, #tpu.memory_space<vmem>>, vector<1x1x128xf32>,
    return
  }
  func.func @transform_0(%arg0: i32) -> (i32, i32, i32) {
    %c0_i32 = arith.constant 0 : i32
    %c0_i32_0 = arith.constant 0 : i32
    %c0_i32_1 = arith.constant 0 : i32
    return %arg0, %c0_i32, %c0_i32_0 : i32, i32, i32
  }
  func.func @transform_1(%arg0: i32) -> (i32, i32) {
    %c0_i32 = arith.constant 0 : i32
    %c0_i32_0 = arith.constant 0 : i32
    %c0_i32_1 = arith.constant 0 : i32
    return %c0_i32, %c0_i32_0 : i32, i32
  }
  func.func @transform_2(%arg0: i32) -> (i32, i32) {
    %c0_i32 = arith.constant 0 : i32
    %c0_i32_0 = arith.constant 0 : i32
    %c0_i32_1 = arith.constant 0 : i32
    return %c0_i32, %c0_i32_0 : i32, i32
  }
  func.func @transform_3(%arg0: i32) -> (i32, i32, i32) {
    %c0_i32 = arith.constant 0 : i32
    %c0_i32_0 = arith.constant 0 : i32
    %c0_i32_1 = arith.constant 0 : i32
    %c0_i32_2 = arith.constant 0 : i32
    return %c0_i32, %c0_i32_0, %c0_i32_1 : i32, i32, i32
  }
  func.func @transform_4(%arg0: i32) -> (i32, i32, i32) {
    %c0_i32 = arith.constant 0 : i32
    %c0_i32_0 = arith.constant 0 : i32
    %c0_i32_1 = arith.constant 0 : i32
    %c0_i32_2 = arith.constant 0 : i32
    return %c0_i32, %c0_i32_0, %c0_i32_1 : i32, i32, i32
  }
  func.func @transform_5(%arg0: i32) -> (i32, i32, i32) {
    %c0_i32 = arith.constant 0 : i32
    %c0_i32_0 = arith.constant 0 : i32
    %c0_i32_1 = arith.constant 0 : i32
    %c0_i32_2 = arith.constant 0 : i32
    return %c0_i32, %c0_i32_0, %c0_i32_1 : i32, i32, i32
  }
  func.func @transform_6(%arg0: i32) -> (i32, i32, i32) {
    %c0_i32 = arith.constant 0 : i32
    %c0_i32_0 = arith.constant 0 : i32
    %c0_i32_1 = arith.constant 0 : i32
    %c0_i32_2 = arith.constant 0 : i32
    return %c0_i32, %c0_i32_0, %c0_i32_1 : i32, i32, i32
  }
  func.func @transform_7(%arg0: i32) -> (i32, i32, i32) {
    %c0_i32 = arith.constant 0 : i32
    %c0_i32_0 = arith.constant 0 : i32
    %c0_i32_1 = arith.constant 0 : i32
    %c0_i32_2 = arith.constant 0 : i32
    return %c0_i32, %c0_i32_0, %c0_i32_1 : i32, i32, i32
  }
  func.func @transform_8(%arg0: i32) -> (i32, i32) {
    %c0_i32 = arith.constant 0 : i32
    %c0_i32_0 = arith.constant 0 : i32
    %c0_i32_1 = arith.constant 0 : i32
    return %c0_i32, %c0_i32_0 : i32, i32
  }
  func.func @transform_9(%arg0: i32) -> (i32, i32) {
    %c0_i32 = arith.constant 0 : i32
    %c0_i32_0 = arith.constant 0 : i32
    %c0_i32_1 = arith.constant 0 : i32
    return %c0_i32, %c0_i32_0 : i32, i32
  }
  func.func @transform_10(%arg0: i32) -> (i32, i32) {
    %c0_i32 = arith.constant 0 : i32
    %c0_i32_0 = arith.constant 0 : i32
    %c0_i32_1 = arith.constant 0 : i32
    return %c0_i32, %c0_i32_0 : i32, i32
  }
  func.func @transform_11(%arg0: i32) -> (i32, i32, i32) {
    %c0_i32 = arith.constant 0 : i32
    %c0_i32_0 = arith.constant 0 : i32
    %c0_i32_1 = arith.constant 0 : i32
    return %arg0, %c0_i32, %c0_i32_0 : i32, i32, i32
  }
}

</mosaic_0001>

<llo_original>
// kernel: vit_forward.1
$region0: #{vit_forward.1}
  #allocation0 [shape = 'u32[]', space=smem, size = 0x4, offset = 0x4, fixed_abs, tag = 'smem constant byte address 0x4 - core index']
  #allocation1 [shape = 'u32[144,128]{1,0:T(1,128)}', space=vmem, size = 0x12000, scoped, tag = 'internal scratch']
  %s0 = inlined_call_operand.vmem [shape: f32[2,17,48], index: 0, kind: input, shape index: {}]
  %s1 = inlined_call_operand.vmem [shape: f32[48,32], index: 1, kind: input, shape index: {}]
  %s2 = inlined_call_operand.vmem [shape: f32[17,32], index: 2, kind: input, shape index: {}]
  %s3 = inlined_call_operand.vmem [shape: f32[8,32,32], index: 3, kind: input, shape index: {}]
  %s4 = inlined_call_operand.vmem [shape: f32[2,18,32], index: 4, kind: input, shape index: {}]
  %s5 = inlined_call_operand.vmem [shape: f32[2,32,128], index: 5, kind: input, shape index: {}]
  %s6 = inlined_call_operand.vmem [shape: f32[2,1,128], index: 6, kind: input, shape index: {}]
  %s7 = inlined_call_operand.vmem [shape: f32[2,128,32], index: 7, kind: input, shape index: {}]
  %s8 = inlined_call_operand.vmem [shape: f32[2,32], index: 8, kind: input, shape index: {}]
  %s9 = inlined_call_operand.vmem [shape: f32[32,128], index: 9, kind: input, shape index: {}]
  %s10 = inlined_call_operand.vmem [shape: f32[1,128], index: 10, kind: input, shape index: {}]
  %s11 = inlined_call_operand.hbm [shape: f32[2,1,128], index: 11, kind: output, shape index: {}]
  %s12 = sld [smem:[#allocation0]]
  $region77: #{vit_forward.1} parent=0
    _
  %s14 = ssub.s32 1, %s12
  %s15 = scalar_select 0, %s14, %s12
  $region1: #{vit_forward.1} parent=0
    #allocation2 [shape = 'u8[1024]{0}', space=vmem, size = 0x400, scoped, tag = 'output window, operand 0']
    #allocation3 [shape = 's32[2]{0}', space=sflag, size = 0x8, scoped, tag = 'scoped memory for vit_forward.1']
    %16 = vsyncpa [#allocation3], 0
    %s17 = scalar_lea.sflag [#allocation3], 1
    %18 = vsyncpa %s17, 0
    loop: start=0, step=1, limit=4
    $region2: #{vit_forward.1} parent=1 // loop_pre_header
      _
    $region3: #{vit_forward.1} parent=1 // loop_header
      %s20 = sphi 0, %s24
      %p21 = scmp.ge.s32.totalorder %s20, 4
      %s30 = sphi 0, %s32
      %s33 = sphi 0, %s30
      %s34 = sphi 0, %s33
      %s50 = sphi 0, %s34
      %s54 = sphi 0, %s54
      %s56 = sphi 0, %s54
      %s57 = sphi 0, %s56
      %s71 = sphi 0, %s57
      %s75 = sphi 0, %s75
      %s77 = sphi 0, %s75
      %s78 = sphi 0, %s77
      %s92 = sphi 0, %s78
      %s96 = sphi 0, %s96
      %s98 = sphi 0, %s96
      %s99 = sphi 0, %s98
      %s113 = sphi 0, %s99
      %s117 = sphi 0, %s117
      %s119 = sphi 0, %s117
      %s120 = sphi 0, %s119
      %s134 = sphi 0, %s120
      %s138 = sphi 0, %s138
      %s140 = sphi 0, %s138
      %s141 = sphi 0, %s140
      %s155 = sphi 0, %s141
      %s159 = sphi 0, %s159
      %s161 = sphi 0, %s159
      %s162 = sphi 0, %s161
      %s176 = sphi 0, %s162
      %s180 = sphi 0, %s180
      %s182 = sphi 0, %s180
      %s183 = sphi 0, %s182
      %s197 = sphi 0, %s183
      %s201 = sphi 0, %s201
      %s203 = sphi 0, %s201
      %s204 = sphi 0, %s203
      %s218 = sphi 0, %s204
      %s222 = sphi 0, %s222
      %s224 = sphi 0, %s222
      %s225 = sphi 0, %s224
      %s239 = sphi 0, %s225
      %s243 = sphi 0, %s243
      %s245 = sphi 0, %s243
      %s246 = sphi 0, %s245
      %s260 = sphi 0, %s246
      %s266 = sphi 0, %s268
      %s269 = sphi 0, %s266
      %s270 = sphi 0, %s269
      %s286 = sphi 0, %s270
    $region4: #{vit_forward.1} parent=1 // loop_header_branch
      %23 = sbr.rel (%p21) target = $region8
    $region5: #{vit_forward.1} parent=1 // loop_body
      %s25 = ssub.s32 %s20, 1
      %s26 = ssub.s32 %s20, 2
      %s27 = sadd.s32 %s20, 1
      %s28 = ssub.s32 %s20, %s27
      %p29 = scmp.eq.s32.totalorder %s28, 0
      %s31 = sadd.s32 %s30, 1
      %s32 = scalar_select %p29, %s30, %s31
      %p35 = pneg %p29
      %p36 = scmp.eq.s32.totalorder %s20, 1
      %p37 = por %p35, %p36
      %p38 = scmp.ne.s32.totalorder %s30, %s33
      %p39 = scmp.eq.s32.totalorder %s20, 0
      %p40 = por %p38, %p39
      %p41 = scmp.ne.s32.totalorder %s30, %s33
      %p42 = scmp.eq.s32.totalorder %s25, 1
      %p43 = por %p41, %p42
      %p44 = scmp.ne.s32.totalorder %s33, %s34
      %p45 = scmp.eq.s32.totalorder %s25, 0
      %p46 = por %p44, %p45
      %p47 = scmp.ne.s32.totalorder %s33, %s34
      %p48 = scmp.eq.s32.totalorder %s26, 1
      %p49 = por %p47, %p48
      %p51 = scmp.ne.s32.totalorder %s34, %s50
      %p52 = scmp.eq.s32.totalorder %s26, 0
      %p53 = por %p51, %p52
      %s55 = sadd.s32 %s54, 1
      %p58 = scmp.eq.s32.totalorder %s20, 1
      %p59 = scmp.ne.s32.totalorder %s54, %s56
      %p60 = scmp.eq.s32.totalorder %s20, 0
      %p61 = por %p59, %p60
      %p62 = scmp.ne.s32.totalorder %s54, %s56
      %p63 = scmp.eq.s32.totalorder %s25, 1
      %p64 = por %p62, %p63
      %p65 = scmp.ne.s32.totalorder %s56, %s57
      %p66 = scmp.eq.s32.totalorder %s25, 0
      %p67 = por %p65, %p66
      %p68 = scmp.ne.s32.totalorder %s56, %s57
      %p69 = scmp.eq.s32.totalorder %s26, 1
      %p70 = por %p68, %p69
      %p72 = scmp.ne.s32.totalorder %s57, %s71
      %p73 = scmp.eq.s32.totalorder %s26, 0
      %p74 = por %p72, %p73
      %s76 = sadd.s32 %s75, 1
      %p79 = scmp.eq.s32.totalorder %s20, 1
      %p80 = scmp.ne.s32.totalorder %s75, %s77
      %p81 = scmp.eq.s32.totalorder %s20, 0
      %p82 = por %p80, %p81
      %p83 = scmp.ne.s32.totalorder %s75, %s77
      %p84 = scmp.eq.s32.totalorder %s25, 1
      %p85 = por %p83, %p84
      %p86 = scmp.ne.s32.totalorder %s77, %s78
      %p87 = scmp.eq.s32.totalorder %s25, 0
      %p88 = por %p86, %p87
      %p89 = scmp.ne.s32.totalorder %s77, %s78
      %p90 = scmp.eq.s32.totalorder %s26, 1
      %p91 = por %p89, %p90
      %p93 = scmp.ne.s32.totalorder %s78, %s92
      %p94 = scmp.eq.s32.totalorder %s26, 0
      %p95 = por %p93, %p94
      %s97 = sadd.s32 %s96, 1
      %p100 = scmp.eq.s32.totalorder %s20, 1
      %p101 = scmp.ne.s32.totalorder %s96, %s98
      %p102 = scmp.eq.s32.totalorder %s20, 0
      %p103 = por %p101, %p102
      %p104 = scmp.ne.s32.totalorder %s96, %s98
      %p105 = scmp.eq.s32.totalorder %s25, 1
      %p106 = por %p104, %p105
      %p107 = scmp.ne.s32.totalorder %s98, %s99
      %p108 = scmp.eq.s32.totalorder %s25, 0
      %p109 = por %p107, %p108
      %p110 = scmp.ne.s32.totalorder %s98, %s99
      %p111 = scmp.eq.s32.totalorder %s26, 1
      %p112 = por %p110, %p111
      %p114 = scmp.ne.s32.totalorder %s99, %s113
      %p115 = scmp.eq.s32.totalorder %s26, 0
      %p116 = por %p114, %p115
      %s118 = sadd.s32 %s117, 1
      %p121 = scmp.eq.s32.totalorder %s20, 1
      %p122 = scmp.ne.s32.totalorder %s117, %s119
      %p123 = scmp.eq.s32.totalorder %s20, 0
      %p124 = por %p122, %p123
      %p125 = scmp.ne.s32.totalorder %s117, %s119
      %p126 = scmp.eq.s32.totalorder %s25, 1
      %p127 = por %p125, %p126
      %p128 = scmp.ne.s32.totalorder %s119, %s120
      %p129 = scmp.eq.s32.totalorder %s25, 0
      %p130 = por %p128, %p129
      %p131 = scmp.ne.s32.totalorder %s119, %s120
      %p132 = scmp.eq.s32.totalorder %s26, 1
      %p133 = por %p131, %p132
      %p135 = scmp.ne.s32.totalorder %s120, %s134
      %p136 = scmp.eq.s32.totalorder %s26, 0
      %p137 = por %p135, %p136
      %s139 = sadd.s32 %s138, 1
      %p142 = scmp.eq.s32.totalorder %s20, 1
      %p143 = scmp.ne.s32.totalorder %s138, %s140
      %p144 = scmp.eq.s32.totalorder %s20, 0
      %p145 = por %p143, %p144
      %p146 = scmp.ne.s32.totalorder %s138, %s140
      %p147 = scmp.eq.s32.totalorder %s25, 1
      %p148 = por %p146, %p147
      %p149 = scmp.ne.s32.totalorder %s140, %s141
      %p150 = scmp.eq.s32.totalorder %s25, 0
      %p151 = por %p149, %p150
      %p152 = scmp.ne.s32.totalorder %s140, %s141
      %p153 = scmp.eq.s32.totalorder %s26, 1
      %p154 = por %p152, %p153
      %p156 = scmp.ne.s32.totalorder %s141, %s155
      %p157 = scmp.eq.s32.totalorder %s26, 0
      %p158 = por %p156, %p157
      %s160 = sadd.s32 %s159, 1
      %p163 = scmp.eq.s32.totalorder %s20, 1
      %p164 = scmp.ne.s32.totalorder %s159, %s161
      %p165 = scmp.eq.s32.totalorder %s20, 0
      %p166 = por %p164, %p165
      %p167 = scmp.ne.s32.totalorder %s159, %s161
      %p168 = scmp.eq.s32.totalorder %s25, 1
      %p169 = por %p167, %p168
      %p170 = scmp.ne.s32.totalorder %s161, %s162
      %p171 = scmp.eq.s32.totalorder %s25, 0
      %p172 = por %p170, %p171
      %p173 = scmp.ne.s32.totalorder %s161, %s162
      %p174 = scmp.eq.s32.totalorder %s26, 1
      %p175 = por %p173, %p174
      %p177 = scmp.ne.s32.totalorder %s162, %s176
      %p178 = scmp.eq.s32.totalorder %s26, 0
      %p179 = por %p177, %p178
      %s181 = sadd.s32 %s180, 1
      %p184 = scmp.eq.s32.totalorder %s20, 1
      %p185 = scmp.ne.s32.totalorder %s180, %s182
      %p186 = scmp.eq.s32.totalorder %s20, 0
      %p187 = por %p185, %p186
      %p188 = scmp.ne.s32.totalorder %s180, %s182
      %p189 = scmp.eq.s32.totalorder %s25, 1
      %p190 = por %p188, %p189
      %p191 = scmp.ne.s32.totalorder %s182, %s183
      %p192 = scmp.eq.s32.totalorder %s25, 0
      %p193 = por %p191, %p192
      %p194 = scmp.ne.s32.totalorder %s182, %s183
      %p195 = scmp.eq.s32.totalorder %s26, 1
      %p196 = por %p194, %p195
      %p198 = scmp.ne.s32.totalorder %s183, %s197
      %p199 = scmp.eq.s32.totalorder %s26, 0
      %p200 = por %p198, %p199
      %s202 = sadd.s32 %s201, 1
      %p205 = scmp.eq.s32.totalorder %s20, 1
      %p206 = scmp.ne.s32.totalorder %s201, %s203
      %p207 = scmp.eq.s32.totalorder %s20, 0
      %p208 = por %p206, %p207
      %p209 = scmp.ne.s32.totalorder %s201, %s203
      %p210 = scmp.eq.s32.totalorder %s25, 1
      %p211 = por %p209, %p210
      %p212 = scmp.ne.s32.totalorder %s203, %s204
      %p213 = scmp.eq.s32.totalorder %s25, 0
      %p214 = por %p212, %p213
      %p215 = scmp.ne.s32.totalorder %s203, %s204
      %p216 = scmp.eq.s32.totalorder %s26, 1
      %p217 = por %p215, %p216
      %p219 = scmp.ne.s32.totalorder %s204, %s218
      %p220 = scmp.eq.s32.totalorder %s26, 0
      %p221 = por %p219, %p220
      %s223 = sadd.s32 %s222, 1
      %p226 = scmp.eq.s32.totalorder %s20, 1
      %p227 = scmp.ne.s32.totalorder %s222, %s224
      %p228 = scmp.eq.s32.totalorder %s20, 0
      %p229 = por %p227, %p228
      %p230 = scmp.ne.s32.totalorder %s222, %s224
      %p231 = scmp.eq.s32.totalorder %s25, 1
      %p232 = por %p230, %p231
      %p233 = scmp.ne.s32.totalorder %s224, %s225
      %p234 = scmp.eq.s32.totalorder %s25, 0
      %p235 = por %p233, %p234
      %p236 = scmp.ne.s32.totalorder %s224, %s225
      %p237 = scmp.eq.s32.totalorder %s26, 1
      %p238 = por %p236, %p237
      %p240 = scmp.ne.s32.totalorder %s225, %s239
      %p241 = scmp.eq.s32.totalorder %s26, 0
      %p242 = por %p240, %p241
      %s244 = sadd.s32 %s243, 1
      %p247 = scmp.eq.s32.totalorder %s20, 1
      %p248 = scmp.ne.s32.totalorder %s243, %s245
      %p249 = scmp.eq.s32.totalorder %s20, 0
      %p250 = por %p248, %p249
      %p251 = scmp.ne.s32.totalorder %s243, %s245
      %p252 = scmp.eq.s32.totalorder %s25, 1
      %p253 = por %p251, %p252
      %p254 = scmp.ne.s32.totalorder %s245, %s246
      %p255 = scmp.eq.s32.totalorder %s25, 0
      %p256 = por %p254, %p255
      %p257 = scmp.ne.s32.totalorder %s245, %s246
      %p258 = scmp.eq.s32.totalorder %s26, 1
      %p259 = por %p257, %p258
      %p261 = scmp.ne.s32.totalorder %s246, %s260
      %p262 = scmp.eq.s32.totalorder %s26, 0
      %p263 = por %p261, %p262
      %s264 = ssub.s32 %s20, %s27
      %p265 = scmp.eq.s32.totalorder %s264, 0
      %s267 = sadd.s32 %s266, 1
      %s268 = scalar_select %p265, %s266, %s267
      %p271 = pneg %p265
      %p272 = scmp.eq.s32.totalorder %s20, 1
      %p273 = por %p271, %p272
      %p274 = scmp.ne.s32.totalorder %s266, %s269
      %p275 = scmp.eq.s32.totalorder %s20, 0
      %p276 = por %p274, %p275
      %p277 = scmp.ne.s32.totalorder %s266, %s269
      %p278 = scmp.eq.s32.totalorder %s25, 1
      %p279 = por %p277, %p278
      %p280 = scmp.ne.s32.totalorder %s269, %s270
      %p281 = scmp.eq.s32.totalorder %s25, 0
      %p282 = por %p280, %p281
      %p283 = scmp.ne.s32.totalorder %s269, %s270
      %p284 = scmp.eq.s32.totalorder %s26, 1
      %p285 = por %p283, %p284
      %p287 = scmp.ne.s32.totalorder %s270, %s286
      %p288 = scmp.eq.s32.totalorder %s26, 0
      %p289 = por %p287, %p288
      %p290 = scmp.le.s32.totalorder 1, %s20
      %p291 = scmp.lt.s32.totalorder %s20, 3
      %p292 = pnand %p290, %p291
      %p293 = pneg %p292
      // Predicated region
      $region9: #{vit_forward.1} parent=5 // pred_check
        _
      $region10: #{vit_forward.1} parent=5 // pred_check_branch
        %295 = sbr.rel (%p292) target = $region12
      $region11: #{vit_forward.1} parent=5 // pred_region
        %s296 = ssub.s32 %s20, 1
        // Predicated region
        $region13: #{vit_forward.1} parent=11 // pred_check
          %p297 = pneg %p67
        $region14: #{vit_forward.1} parent=11 // pred_check_branch
          %299 = sbr.rel (%p297) target = $region16
        $region15: #{vit_forward.1} parent=11 // pred_region
          _
        $region16: #{vit_forward.1} parent=11 // pred_fallthru
          _
        // Predicated region
        $region17: #{vit_forward.1} parent=11 // pred_check
          %p300 = pneg %p88
        $region18: #{vit_forward.1} parent=11 // pred_check_branch
          %302 = sbr.rel (%p300) target = $region20
        $region19: #{vit_forward.1} parent=11 // pred_region
          _
        $region20: #{vit_forward.1} parent=11 // pred_fallthru
          _
        // Predicated region
        $region21: #{vit_forward.1} parent=11 // pred_check
          %p303 = pneg %p109
        $region22: #{vit_forward.1} parent=11 // pred_check_branch
          %305 = sbr.rel (%p303) target = $region24
        $region23: #{vit_forward.1} parent=11 // pred_region
          _
        $region24: #{vit_forward.1} parent=11 // pred_fallthru
          _
        // Predicated region
        $region25: #{vit_forward.1} parent=11 // pred_check
          %p306 = pneg %p130
        $region26: #{vit_forward.1} parent=11 // pred_check_branch
          %308 = sbr.rel (%p306) target = $region28
        $region27: #{vit_forward.1} parent=11 // pred_region
          _
        $region28: #{vit_forward.1} parent=11 // pred_fallthru
          _
        // Predicated region
        $region29: #{vit_forward.1} parent=11 // pred_check
          %p309 = pneg %p151
        $region30: #{vit_forward.1} parent=11 // pred_check_branch
          %311 = sbr.rel (%p309) target = $region32
        $region31: #{vit_forward.1} parent=11 // pred_region
          _
        $region32: #{vit_forward.1} parent=11 // pred_fallthru
          _
        // Predicated region
        $region33: #{vit_forward.1} parent=11 // pred_check
          %p312 = pneg %p172
        $region34: #{vit_forward.1} parent=11 // pred_check_branch
          %314 = sbr.rel (%p312) target = $region36
        $region35: #{vit_forward.1} parent=11 // pred_region
          _
        $region36: #{vit_forward.1} parent=11 // pred_fallthru
          _
        // Predicated region
        $region37: #{vit_forward.1} parent=11 // pred_check
          %p315 = pneg %p193
        $region38: #{vit_forward.1} parent=11 // pred_check_branch
          %317 = sbr.rel (%p315) target = $region40
        $region39: #{vit_forward.1} parent=11 // pred_region
          _
        $region40: #{vit_forward.1} parent=11 // pred_fallthru
          _
        // Predicated region
        $region41: #{vit_forward.1} parent=11 // pred_check
          %p318 = pneg %p214
        $region42: #{vit_forward.1} parent=11 // pred_check_branch
          %320 = sbr.rel (%p318) target = $region44
        $region43: #{vit_forward.1} parent=11 // pred_region
          _
        $region44: #{vit_forward.1} parent=11 // pred_fallthru
          _
        // Predicated region
        $region45: #{vit_forward.1} parent=11 // pred_check
          %p321 = pneg %p235
        $region46: #{vit_forward.1} parent=11 // pred_check_branch
          %323 = sbr.rel (%p321) target = $region48
        $region47: #{vit_forward.1} parent=11 // pred_region
          _
        $region48: #{vit_forward.1} parent=11 // pred_fallthru
          _
        // Predicated region
        $region49: #{vit_forward.1} parent=11 // pred_check
          %p324 = pneg %p256
        $region50: #{vit_forward.1} parent=11 // pred_check_branch
          %326 = sbr.rel (%p324) target = $region52
        $region51: #{vit_forward.1} parent=11 // pred_region
          _
        $region52: #{vit_forward.1} parent=11 // pred_fallthru
          _
      $region12: #{vit_forward.1} parent=5 // pred_fallthru
        _
      %p327 = scmp.lt.s32.totalorder %s20, 2
      // Predicated region
      $region53: #{vit_forward.1} parent=5 // pred_check
        %p328 = pneg %p327
      $region54: #{vit_forward.1} parent=5 // pred_check_branch
        %330 = sbr.rel (%p328) target = $region56
      $region55: #{vit_forward.1} parent=5 // pred_region
        // Predicated region
        $region57: #{vit_forward.1} parent=55 // pred_check
          %p331 = pneg %p40
        $region58: #{vit_forward.1} parent=55 // pred_check_branch
          %333 = sbr.rel (%p331) target = $region60
        $region59: #{vit_forward.1} parent=55 // pred_region
          %p334 = scmp.lt.s32.totalorder %s20, 1
          %s335 = scalar_select %p334, %s20, 1
          %s336 = smul.addr %s335, 3
          %s337 = smul.addr %s336, 8
          %s338 = scalar_lea.vmem %s0, %s337
        $region60: #{vit_forward.1} parent=55 // pred_fallthru
          _
      $region56: #{vit_forward.1} parent=5 // pred_fallthru
        _
      %p339 = scmp.le.s32.totalorder 1, %s20
      %p340 = scmp.lt.s32.totalorder %s20, 3
      %p341 = pnand %p339, %p340
      %p342 = pneg %p341
      // Predicated region
      $region61: #{vit_forward.1} parent=5 // pred_check
        _
      $region62: #{vit_forward.1} parent=5 // pred_check_branch
        %344 = sbr.rel (%p341) target = $region64
      $region63: #{vit_forward.1} parent=5 // pred_region
        %s345 = ssub.s32 %s20, 1
        %p346 = scmp.lt.s32.totalorder %s25, 1
        %s347 = scalar_select %p346, %s25, 1
        %s348 = smul.addr %s347, 3
        %s349 = smul.addr %s348, 8
        %s350 = scalar_lea.vmem %s0, %s349
        %p351 = pneg %p46
        %p352 = pneg %p43
        %p353 = pneg %p67
        %p354 = pneg %p64
        %p355 = pneg %p88
        %p356 = pneg %p85
        %p357 = pneg %p109
        %p358 = pneg %p106
        %p359 = pneg %p130
        %p360 = pneg %p127
        %p361 = pneg %p151
        %p362 = pneg %p148
        %p363 = pneg %p172
        %p364 = pneg %p169
        %p365 = pneg %p193
        %p366 = pneg %p190
        %p367 = pneg %p214
        %p368 = pneg %p211
        %p369 = pneg %p235
        %p370 = pneg %p232
        %p371 = pneg %p256
        %p372 = pneg %p253
        %p373 = pneg %p282
        %p374 = pneg %p279
        %s375 = sand.u32 %s269, 1
        %s376 = scalar_lea.sflag [#allocation3], %s375
        %s377 = sand.u32 %s269, 1
        %s378 = scalar_lea.vmem [#allocation2], %s377
        %p379 = scmp.lt.s32.totalorder %s25, 1
        %s380 = scalar_select %p379, %s25, 1
        %s381 = smul.addr %s380, 3
        %s382 = smul.addr %s381, 8
        %s383 = scalar_lea.vmem %s0, %s382
        %v384 = vld [vmem:[%s383] sm:$0xff]
        %v385 = vld [vmem:[%s383 + $0x8] sm:$0xff]
        %v386 = vld [vmem:[%s383 + $0x10] sm:$0x1]
        %v387 = vld [vmem:[%s1] sm:$0xff]
        %v388 = vld [vmem:[%s1 + $0x8] sm:$0xff]
        %v389 = vld [vmem:[%s1 + $0x10] sm:$0xff]
        %v390 = vld [vmem:[%s1 + $0x18] sm:$0xff]
        %v391 = vld [vmem:[%s1 + $0x20] sm:$0xff]
        %v392 = vld [vmem:[%s1 + $0x28] sm:$0xff]
        %v393 = vld [vmem:[%s2] sm:$0xff]
        %v394 = vld [vmem:[%s2 + $0x8] sm:$0xff]
        %v395 = vld [vmem:[%s2 + $0x10] sm:$0x1]
        %vm396 = vcmask 392192
        %v398 = vsel %vm396, %v384, 0
        %v401 = vsel %vm396, %v385, 0
        %v404 = vsel %vm396, %v386, 0
        %406 = vmatprep.subr.mxu0 0.0
        %407 = vmatpush1.msra.mxu0 %v387
        %408 = vmatprep.subr.mxu0 0.0
        %409 = vmatpush1.msra.mxu0 %v388
        %410 = vmatprep.subr.mxu0 0.0
        %411 = vmatpush1.msra.mxu0 %v389
        %412 = vmatprep.subr.mxu0 0.0
        %413 = vmatpush1.msra.mxu0 %v390
        %414 = vmatprep.subr.mxu0 0.0
        %415 = vmatpush1.msra.mxu0 %v391
        %416 = vmatprep.subr.mxu0 0.0
        %417 = vmatpush1.msra.mxu0 %v392
        %418 = vmatprep.subr.mxu0 0.0
        %419 = vmatpush1.msra.mxu0 0.0
        %420 = vmatprep.subr.mxu0 0.0
        %421 = vmatpush1.msra.mxu0 0.0
        %422 = vmatprep.subr.mxu0 0.0
        %423 = vmatpush1.msra.mxu0 0.0
        %424 = vmatprep.subr.mxu0 0.0
        %425 = vmatpush1.msra.mxu0 0.0
        %426 = vmatprep.subr.mxu0 0.0
        %427 = vmatpush1.msra.mxu0 0.0
        %428 = vmatprep.subr.mxu0 0.0
        %429 = vmatpush1.msra.mxu0 0.0
        %430 = vmatprep.subr.mxu0 0.0
        %431 = vmatpush1.msra.mxu0 0.0
        %432 = vmatprep.subr.mxu0 0.0
        %433 = vmatpush1.msra.mxu0 0.0
        %434 = vmatprep.subr.mxu0 0.0
        %435 = vmatpush1.msra.mxu0 0.0
        %436 = vmatprep.subr.mxu0 0.0
        %437 = vmatpush1.msra.mxu0 0.0
        %438 = vmatprep.subr.mxu0 0.0
        %439 = vmatpush1.msra.mxu0 0.0
        %440 = vmatprep.subr.mxu0 0.0
        %441 = vmatpush1.msra.mxu0 0.0
        %442 = vmatprep.subr.mxu0 0.0
        %443 = vmatpush1.msra.mxu0 0.0
        %444 = vmatprep.subr.mxu0 0.0
        %445 = vmatpush1.msra.mxu0 0.0
        %446 = vmatprep.subr.mxu0 0.0
        %447 = vmatpush1.msra.mxu0 0.0
        %448 = vmatprep.subr.mxu0 0.0
        %449 = vmatpush1.msra.mxu0 0.0
        %450 = vmatprep.subr.mxu0 0.0
        %451 = vmatpush1.msra.mxu0 0.0
        %452 = vmatprep.subr.mxu0 0.0
        %453 = vmatpush1.msra.mxu0 0.0
        %454 = vmatprep.subr.mxu0 0.0
        %455 = vmatpush1.msra.mxu0 0.0
        %456 = vmatprep.subr.mxu0 0.0
        %457 = vmatpush1.msra.mxu0 0.0
        %458 = vmatprep.subr.mxu0 0.0
        %459 = vmatpush1.msra.mxu0 0.0
        %460 = vmatprep.subr.mxu0 0.0
        %461 = vmatpush1.msra.mxu0 0.0
        %462 = vmatprep.subr.mxu0 0.0
        %463 = vmatpush1.msra.mxu0 0.0
        %464 = vmatprep.subr.mxu0 0.0
        %465 = vmatpush1.msra.mxu0 0.0
        %466 = vmatprep.subr.mxu0 0.0
        %467 = vmatpush1.msra.mxu0 0.0
        %468 = vmatprep.subr.mxu0 0.0
        %469 = vmatpush1.msra.mxu0 0.0
        %470 = vmatprep.mubr.f32.mxu0 0.0
        %471 = vmatmul.mubr.f32.gmra.mrb[0].mxu0 %v398
        %v472 = vpop.f32.mrb[0].mxu0
        %v473 = vadd.f32 %v393, %v472
        %v474 = vpop.f32.mrb[0].mxu0
        %475 = vmatprep.mubr.f32.mxu0 0.0
        %476 = vmatmul.mubr.f32.gmra.mrb[0].mxu0 %v401
        %v477 = vpop.f32.mrb[0].mxu0
        %v478 = vadd.f32 %v394, %v477
        %v479 = vpop.f32.mrb[0].mxu0
        %480 = vmatprep.mubr.f32.mxu0 0.0
        %481 = vmatmul.mubr.f32.gmra.mrb[0].mxu0 %v404
        %v482 = vpop.f32.mrb[0].mxu0
        %v483 = vadd.f32 %v395, %v482
        %v484 = vpop.f32.mrb[0].mxu0
        %485 = vdwg.mxu0
        %v486 = vlaneseq
        %v487 = vshrl.u32 %v486, 7
        %v488 = vadd.s32 %v487, 8
        %v489 = vadd.s32 %v487, 16
        %v490 = vlaneseq
        %v491 = vand.u32 %v490, 127
        %v492 = vadd.s32 %v491, 1
        %vm493 = vcmp.eq.s32.totalorder %v487, %v492
        %vm494 = vcmp.eq.s32.totalorder %v488, %v492
        %vm495 = vcmp.eq.s32.totalorder %v489, %v492
        %v496 = vsel %vm493, 1, 0
        %v497 = vsel %vm494, 1, 0
        %v498 = vsel %vm495, 1, 0
        %v499 = vcvt.s32.f32 %v496
        %v500 = vcvt.s32.f32 %v497
        %v501 = vcvt.s32.f32 %v498
        %v502 = vadd.s32 %v487, 1
        %v503 = vadd.s32 %v488, 1
        %v504 = vadd.s32 %v489, 1
        %vm505 = vcmp.eq.s32.totalorder %v491, %v502
        %vm506 = vcmp.eq.s32.totalorder %v491, %v503
        %vm507 = vcmp.eq.s32.totalorder %v491, %v504
        %v508 = vsel %vm505, 1, 0
        %v509 = vsel %vm506, 1, 0
        %v510 = vsel %vm507, 1, 0
        %v511 = vcvt.s32.f32 %v508
        %v512 = vcvt.s32.f32 %v509
        %v513 = vcvt.s32.f32 %v510
        %v514 = vadd.s32 %v487, 24
        %v515 = vxor.u32 %v487, %v491
        %v516 = vxor.u32 %v488, %v491
        %v517 = vxor.u32 %v489, %v491
        %v518 = vxor.u32 %v514, %v491
        %vm519 = vcmp.lt.s32.totalorder %v515, 8
        %vm520 = vcmp.lt.s32.totalorder %v516, 8
        %vm521 = vcmp.lt.s32.totalorder %v517, 8
        %vm522 = vcmp.lt.s32.totalorder %v518, 8
        %v523 = vld [vmem:[%s4] sm:$0xff]
        %v524 = vld [vmem:[%s4 + $0x8] sm:$0xff]
        %v525 = vld [vmem:[%s4 + $0x10] sm:$0x3]
        %vm526 = vcmask 261120
        %v527 = vsel %vm526, %v473, 0.0
        %528 = vadd.xlane.f32.xlu0 %v527
        %v529 = vpop.xlane.xlu0 %528
        %v530 = vsel %vm526, %v478, 0.0
        %531 = vadd.xlane.f32.xlu0 %v530
        %v532 = vpop.xlane.xlu0 %531
        %vm533 = vcmask 253952
        %v534 = vsel %vm533, %v483, 0.0
        %535 = vadd.xlane.f32.xlu0 %v534
        %v536 = vpop.xlane.xlu0 %535
        %v537 = vrcp.pop 32.0
        %v538 = vmul.f32 %v529, %v537
        %v539 = vmul.f32 %v532, %v537
        %v540 = vmul.f32 %v536, %v537
        %v541 = vsub.f32 %v473, %v538
        %v542 = vsub.f32 %v478, %v539
        %v543 = vsub.f32 %v483, %v540
        %v544 = vmul.f32 %v541, %v541
        %v545 = vmul.f32 %v542, %v542
        %v546 = vmul.f32 %v543, %v543
        %v547 = vsel %vm526, %v544, 0.0
        %548 = vadd.xlane.f32.xlu0 %v547
        %v549 = vpop.xlane.xlu0 %548
        %v550 = vsel %vm526, %v545, 0.0
        %551 = vadd.xlane.f32.xlu0 %v550
        %v552 = vpop.xlane.xlu0 %551
        %v553 = vsel %vm533, %v546, 0.0
        %554 = vadd.xlane.f32.xlu0 %v553
        %v555 = vpop.xlane.xlu0 %554
        %v556 = vmul.f32 %v549, %v537
        %v557 = vmul.f32 %v552, %v537
        %v558 = vmul.f32 %v555, %v537
        %v559 = vadd.f32 %v556, 1e-05
        %v560 = vadd.f32 %v557, 1e-05
        %v561 = vadd.f32 %v558, 1e-05
        %v562 = vrsqrt.pop %v559
        %v563 = vrsqrt.pop %v560
        %v564 = vrsqrt.pop %v561
        %v565 = vmul.f32 %v541, %v562
        %v566 = vmul.f32 %v542, %v563
        %v567 = vmul.f32 %v543, %v564
        %v568 = vlaneseq
        %v569 = vshrl.u32 %v568, 7
        %v570 = vsub.s32 0, %v569
        %v571 = vrot.slane %v523, %v570
        %v572 = vmul.f32 %v565, %v571
        %v573 = vmul.f32 %v566, %v571
        %v574 = vmul.f32 %v567, %v571
        %v575 = vlaneseq
        %v576 = vshrl.u32 %v575, 7
        %v577 = vsub.s32 1, %v576
        %v578 = vrot.slane %v523, %v577
        %v579 = vadd.f32 %v572, %v578
        %v580 = vadd.f32 %v573, %v578
        %v581 = vadd.f32 %v574, %v578
        %v582 = vld [vmem:[%s3] sm:$0xff]
        %v583 = vld [vmem:[%s3 + $0x8] sm:$0xff]
        %v584 = vld [vmem:[%s3 + $0x10] sm:$0xff]
        %v585 = vld [vmem:[%s3 + $0x18] sm:$0xff]
        %v586 = vlaneseq
        %v587 = vshrl.u32 %v586, 7
        %v588 = vsub.s32 2, %v587
        %v589 = vrot.slane %v523, %v588
        %v591 = vsel %vm526, %v579, 0
        %v594 = vsel %vm526, %v580, 0
        %v597 = vsel %vm526, %v581, 0
        %599 = vmatprep.subr.mxu0 0.0
        %600 = vmatpush1.msra.mxu0 %v582
        %601 = vmatprep.subr.mxu0 0.0
        %602 = vmatpush1.msra.mxu0 %v583
        %603 = vmatprep.subr.mxu0 0.0
        %604 = vmatpush1.msra.mxu0 %v584
        %605 = vmatprep.subr.mxu0 0.0
        %606 = vmatpush1.msra.mxu0 %v585
        %607 = vmatprep.subr.mxu0 0.0
        %608 = vmatpush1.msra.mxu0 0.0
        %609 = vmatprep.subr.mxu0 0.0
        %610 = vmatpush1.msra.mxu0 0.0
        %611 = vmatprep.subr.mxu0 0.0
        %612 = vmatpush1.msra.mxu0 0.0
        %613 = vmatprep.subr.mxu0 0.0
        %614 = vmatpush1.msra.mxu0 0.0
        %615 = vmatprep.subr.mxu0 0.0
        %616 = vmatpush1.msra.mxu0 0.0
        %617 = vmatprep.subr.mxu0 0.0
        %618 = vmatpush1.msra.mxu0 0.0
        %619 = vmatprep.subr.mxu0 0.0
        %620 = vmatpush1.msra.mxu0 0.0
        %621 = vmatprep.subr.mxu0 0.0
        %622 = vmatpush1.msra.mxu0 0.0
        %623 = vmatprep.subr.mxu0 0.0
        %624 = vmatpush1.msra.mxu0 0.0
        %625 = vmatprep.subr.mxu0 0.0
        %626 = vmatpush1.msra.mxu0 0.0
        %627 = vmatprep.subr.mxu0 0.0
        %628 = vmatpush1.msra.mxu0 0.0
        %629 = vmatprep.subr.mxu0 0.0
        %630 = vmatpush1.msra.mxu0 0.0
        %631 = vmatprep.subr.mxu0 0.0
        %632 = vmatpush1.msra.mxu0 0.0
        %633 = vmatprep.subr.mxu0 0.0
        %634 = vmatpush1.msra.mxu0 0.0
        %635 = vmatprep.subr.mxu0 0.0
        %636 = vmatpush1.msra.mxu0 0.0
        %637 = vmatprep.subr.mxu0 0.0
        %638 = vmatpush1.msra.mxu0 0.0
        %639 = vmatprep.subr.mxu0 0.0
        %640 = vmatpush1.msra.mxu0 0.0
        %641 = vmatprep.subr.mxu0 0.0
        %642 = vmatpush1.msra.mxu0 0.0
        %643 = vmatprep.subr.mxu0 0.0
        %644 = vmatpush1.msra.mxu0 0.0
        %645 = vmatprep.subr.mxu0 0.0
        %646 = vmatpush1.msra.mxu0 0.0
        %647 = vmatprep.subr.mxu0 0.0
        %648 = vmatpush1.msra.mxu0 0.0
        %649 = vmatprep.subr.mxu0 0.0
        %650 = vmatpush1.msra.mxu0 0.0
        %651 = vmatprep.subr.mxu0 0.0
        %652 = vmatpush1.msra.mxu0 0.0
        %653 = vmatprep.subr.mxu0 0.0
        %654 = vmatpush1.msra.mxu0 0.0
        %655 = vmatprep.subr.mxu0 0.0
        %656 = vmatpush1.msra.mxu0 0.0
        %657 = vmatprep.subr.mxu0 0.0
        %658 = vmatpush1.msra.mxu0 0.0
        %659 = vmatprep.subr.mxu0 0.0
        %660 = vmatpush1.msra.mxu0 0.0
        %661 = vmatprep.subr.mxu0 0.0
        %662 = vmatpush1.msra.mxu0 0.0
        %663 = vmatprep.mubr.f32.mxu0 0.0
        %664 = vmatmul.mubr.f32.gmra.mrb[0].mxu0 %v591
        %v665 = vpop.f32.mrb[0].mxu0
        %v666 = vadd.f32 %v589, %v665
        %v667 = vpop.f32.mrb[0].mxu0
        %668 = vmatprep.mubr.f32.mxu0 0.0
        %669 = vmatmul.mubr.f32.gmra.mrb[0].mxu0 %v594
        %v670 = vpop.f32.mrb[0].mxu0
        %v671 = vadd.f32 %v589, %v670
        %v672 = vpop.f32.mrb[0].mxu0
        %673 = vmatprep.mubr.f32.mxu0 0.0
        %674 = vmatmul.mubr.f32.gmra.mrb[0].mxu0 %v597
        %v675 = vpop.f32.mrb[0].mxu0
        %v676 = vadd.f32 %v589, %v675
        %v677 = vpop.f32.mrb[0].mxu0
        %678 = vdwg.mxu0
        %s679 = scalar_lea.vmem %s3, 32
        %v680 = vld [vmem:[%s679] sm:$0xff]
        %v681 = vld [vmem:[%s679 + $0x8] sm:$0xff]
        %v682 = vld [vmem:[%s679 + $0x10] sm:$0xff]
        %v683 = vld [vmem:[%s679 + $0x18] sm:$0xff]
        %v684 = vlaneseq
        %v685 = vshrl.u32 %v684, 7
        %v686 = vsub.s32 3, %v685
        %v687 = vrot.slane %v523, %v686
        %688 = vmatprep.subr.mxu0 0.0
        %689 = vmatpush1.msra.mxu0 %v680
        %690 = vmatprep.subr.mxu0 0.0
        %691 = vmatpush1.msra.mxu0 %v681
        %692 = vmatprep.subr.mxu0 0.0
        %693 = vmatpush1.msra.mxu0 %v682
        %694 = vmatprep.subr.mxu0 0.0
        %695 = vmatpush1.msra.mxu0 %v683
        %696 = vmatprep.subr.mxu0 0.0
        %697 = vmatpush1.msra.mxu0 0.0
        %698 = vmatprep.subr.mxu0 0.0
        %699 = vmatpush1.msra.mxu0 0.0
        %700 = vmatprep.subr.mxu0 0.0
        %701 = vmatpush1.msra.mxu0 0.0
        %702 = vmatprep.subr.mxu0 0.0
        %703 = vmatpush1.msra.mxu0 0.0
        %704 = vmatprep.subr.mxu0 0.0
        %705 = vmatpush1.msra.mxu0 0.0
        %706 = vmatprep.subr.mxu0 0.0
        %707 = vmatpush1.msra.mxu0 0.0
        %708 = vmatprep.subr.mxu0 0.0
        %709 = vmatpush1.msra.mxu0 0.0
        %710 = vmatprep.subr.mxu0 0.0
        %711 = vmatpush1.msra.mxu0 0.0
        %712 = vmatprep.subr.mxu0 0.0
        %713 = vmatpush1.msra.mxu0 0.0
        %714 = vmatprep.subr.mxu0 0.0
        %715 = vmatpush1.msra.mxu0 0.0
        %716 = vmatprep.subr.mxu0 0.0
        %717 = vmatpush1.msra.mxu0 0.0
        %718 = vmatprep.subr.mxu0 0.0
        %719 = vmatpush1.msra.mxu0 0.0
        %720 = vmatprep.subr.mxu0 0.0
        %721 = vmatpush1.msra.mxu0 0.0
        %722 = vmatprep.subr.mxu0 0.0
        %723 = vmatpush1.msra.mxu0 0.0
        %724 = vmatprep.subr.mxu0 0.0
        %725 = vmatpush1.msra.mxu0 0.0
        %726 = vmatprep.subr.mxu0 0.0
        %727 = vmatpush1.msra.mxu0 0.0
        %728 = vmatprep.subr.mxu0 0.0
        %729 = vmatpush1.msra.mxu0 0.0
        %730 = vmatprep.subr.mxu0 0.0
        %731 = vmatpush1.msra.mxu0 0.0
        %732 = vmatprep.subr.mxu0 0.0
        %733 = vmatpush1.msra.mxu0 0.0
        %734 = vmatprep.subr.mxu0 0.0
        %735 = vmatpush1.msra.mxu0 0.0
        %736 = vmatprep.subr.mxu0 0.0
        %737 = vmatpush1.msra.mxu0 0.0
        %738 = vmatprep.subr.mxu0 0.0
        %739 = vmatpush1.msra.mxu0 0.0
        %740 = vmatprep.subr.mxu0 0.0
        %741 = vmatpush1.msra.mxu0 0.0
        %742 = vmatprep.subr.mxu0 0.0
        %743 = vmatpush1.msra.mxu0 0.0
        %744 = vmatprep.subr.mxu0 0.0
        %745 = vmatpush1.msra.mxu0 0.0
        %746 = vmatprep.subr.mxu0 0.0
        %747 = vmatpush1.msra.mxu0 0.0
        %748 = vmatprep.subr.mxu0 0.0
        %749 = vmatpush1.msra.mxu0 0.0
        %750 = vmatprep.subr.mxu0 0.0
        %751 = vmatpush1.msra.mxu0 0.0
        %752 = vmatprep.mubr.f32.mxu0 0.0
        %753 = vmatmul.mubr.f32.gmra.mrb[0].mxu0 %v591
        %v754 = vpop.f32.mrb[0].mxu0
        %v755 = vadd.f32 %v687, %v754
        %v756 = vpop.f32.mrb[0].mxu0
        %757 = vmatprep.mubr.f32.mxu0 0.0
        %758 = vmatmul.mubr.f32.gmra.mrb[0].mxu0 %v594
        %v759 = vpop.f32.mrb[0].mxu0
        %v760 = vadd.f32 %v687, %v759
        %v761 = vpop.f32.mrb[0].mxu0
        %762 = vmatprep.mubr.f32.mxu0 0.0
        %763 = vmatmul.mubr.f32.gmra.mrb[0].mxu0 %v597
        %v764 = vpop.f32.mrb[0].mxu0
        %v765 = vadd.f32 %v687, %v764
        %v766 = vpop.f32.mrb[0].mxu0
        %767 = vdwg.mxu0
        %s768 = scalar_lea.vmem %s3, 64
        %v769 = vld [vmem:[%s768] sm:$0xff]
        %v770 = vld [vmem:[%s768 + $0x8] sm:$0xff]
        %v771 = vld [vmem:[%s768 + $0x10] sm:$0xff]
        %v772 = vld [vmem:[%s768 + $0x18] sm:$0xff]
        %v773 = vlaneseq
        %v774 = vshrl.u32 %v773, 7
        %v775 = vsub.s32 4, %v774
        %v776 = vrot.slane %v523, %v775
        %777 = vmatprep.subr.mxu0 0.0
        %778 = vmatpush1.msra.mxu0 %v769
        %779 = vmatprep.subr.mxu0 0.0
        %780 = vmatpush1.msra.mxu0 %v770
        %781 = vmatprep.subr.mxu0 0.0
        %782 = vmatpush1.msra.mxu0 %v771
        %783 = vmatprep.subr.mxu0 0.0
        %784 = vmatpush1.msra.mxu0 %v772
        %785 = vmatprep.subr.mxu0 0.0
        %786 = vmatpush1.msra.mxu0 0.0
        %787 = vmatprep.subr.mxu0 0.0
        %788 = vmatpush1.msra.mxu0 0.0
        %789 = vmatprep.subr.mxu0 0.0
        %790 = vmatpush1.msra.mxu0 0.0
        %791 = vmatprep.subr.mxu0 0.0
        %792 = vmatpush1.msra.mxu0 0.0
        %793 = vmatprep.subr.mxu0 0.0
        %794 = vmatpush1.msra.mxu0 0.0
        %795 = vmatprep.subr.mxu0 0.0
        %796 = vmatpush1.msra.mxu0 0.0
        %797 = vmatprep.subr.mxu0 0.0
        %798 = vmatpush1.msra.mxu0 0.0
        %799 = vmatprep.subr.mxu0 0.0
        %800 = vmatpush1.msra.mxu0 0.0
        %801 = vmatprep.subr.mxu0 0.0
        %802 = vmatpush1.msra.mxu0 0.0
        %803 = vmatprep.subr.mxu0 0.0
        %804 = vmatpush1.msra.mxu0 0.0
        %805 = vmatprep.subr.mxu0 0.0
        %806 = vmatpush1.msra.mxu0 0.0
        %807 = vmatprep.subr.mxu0 0.0
        %808 = vmatpush1.msra.mxu0 0.0
        %809 = vmatprep.subr.mxu0 0.0
        %810 = vmatpush1.msra.mxu0 0.0
        %811 = vmatprep.subr.mxu0 0.0
        %812 = vmatpush1.msra.mxu0 0.0
        %813 = vmatprep.subr.mxu0 0.0
        %814 = vmatpush1.msra.mxu0 0.0
        %815 = vmatprep.subr.mxu0 0.0
        %816 = vmatpush1.msra.mxu0 0.0
        %817 = vmatprep.subr.mxu0 0.0
        %818 = vmatpush1.msra.mxu0 0.0
        %819 = vmatprep.subr.mxu0 0.0
        %820 = vmatpush1.msra.mxu0 0.0
        %821 = vmatprep.subr.mxu0 0.0
        %822 = vmatpush1.msra.mxu0 0.0
        %823 = vmatprep.subr.mxu0 0.0
        %824 = vmatpush1.msra.mxu0 0.0
        %825 = vmatprep.subr.mxu0 0.0
        %826 = vmatpush1.msra.mxu0 0.0
        %827 = vmatprep.subr.mxu0 0.0
        %828 = vmatpush1.msra.mxu0 0.0
        %829 = vmatprep.subr.mxu0 0.0
        %830 = vmatpush1.msra.mxu0 0.0
        %831 = vmatprep.subr.mxu0 0.0
        %832 = vmatpush1.msra.mxu0 0.0
        %833 = vmatprep.subr.mxu0 0.0
        %834 = vmatpush1.msra.mxu0 0.0
        %835 = vmatprep.subr.mxu0 0.0
        %836 = vmatpush1.msra.mxu0 0.0
        %837 = vmatprep.subr.mxu0 0.0
        %838 = vmatpush1.msra.mxu0 0.0
        %839 = vmatprep.subr.mxu0 0.0
        %840 = vmatpush1.msra.mxu0 0.0
        %841 = vmatprep.mubr.f32.mxu0 0.0
        %842 = vmatmul.mubr.f32.gmra.mrb[0].mxu0 %v591
        %v843 = vpop.f32.mrb[0].mxu0
        %v844 = vadd.f32 %v776, %v843
        %v845 = vpop.f32.mrb[0].mxu0
        %846 = vmatprep.mubr.f32.mxu0 0.0
        %847 = vmatmul.mubr.f32.gmra.mrb[0].mxu0 %v594
        %v848 = vpop.f32.mrb[0].mxu0
        %v849 = vadd.f32 %v776, %v848
        %v850 = vpop.f32.mrb[0].mxu0
        %851 = vmatprep.mubr.f32.mxu0 0.0
        %852 = vmatmul.mubr.f32.gmra.mrb[0].mxu0 %v597
        %v853 = vpop.f32.mrb[0].mxu0
        %v854 = vadd.f32 %v776, %v853
        %v855 = vpop.f32.mrb[0].mxu0
        %856 = vdwg.mxu0
        %v857 = vmul.f32 %v666, %v666
        %v858 = vmul.f32 %v671, %v671
        %v859 = vmul.f32 %v676, %v676
        %v860 = vsel %vm526, %v857, 0.0
        %v861 = vsel %vm526, %v858, 0.0
        %v862 = vadd.f32 %v860, %v861
        %v863 = vsel %vm533, %v859, 0.0
        %v864 = vadd.f32 %v862, %v863
        %v865 = vrot.slane %v864, 4
        %v866 = vadd.f32 %v864, %v865
        %v867 = vrot.slane %v866, 2
        %v868 = vadd.f32 %v866, %v867
        %v869 = vrot.slane %v868, 1
        %v870 = vadd.f32 %v868, %v869
        %v871 = vmax.f32 %v870, 1e-24
        %v872 = vrsqrt.pop %v871
        %v873 = vmul.f32 %v666, %v872
        %v874 = vmul.f32 %v671, %v872
        %v875 = vmul.f32 %v676, %v872
        %v876 = vmul.f32 %v755, %v755
        %v877 = vmul.f32 %v760, %v760
        %v878 = vmul.f32 %v765, %v765
        %v879 = vsel %vm526, %v876, 0.0
        %v880 = vsel %vm526, %v877, 0.0
        %v881 = vadd.f32 %v879, %v880
        %v882 = vsel %vm533, %v878, 0.0
        %v883 = vadd.f32 %v881, %v882
        %v884 = vrot.slane %v883, 4
        %v885 = vadd.f32 %v883, %v884
        %v886 = vrot.slane %v885, 2
        %v887 = vadd.f32 %v885, %v886
        %v888 = vrot.slane %v887, 1
        %v889 = vadd.f32 %v887, %v888
        %v890 = vmax.f32 %v889, 1e-24
        %v891 = vrsqrt.pop %v890
        %v892 = vmul.f32 %v755, %v891
        %v893 = vmul.f32 %v760, %v891
        %v894 = vmul.f32 %v765, %v891
        %895 = vxpose.xlu0.b32.start [1/16] %v873, 128
        %896 = vxpose.xlu0.b32.cont [2/16] %v874, 128
        %897 = vxpose.xlu0.b32.cont [3/16] %v875, 128
        %898 = vxpose.xlu0.b32.cont [4/16] 0.0, 128
        %899 = vxpose.xlu0.b32.cont [5/16] 0.0, 128
        %900 = vxpose.xlu0.b32.cont [6/16] 0.0, 128
        %901 = vxpose.xlu0.b32.cont [7/16] 0.0, 128
        %902 = vxpose.xlu0.b32.cont [8/16] 0.0, 128
        %903 = vxpose.xlu0.b32.cont [9/16] 0.0, 128
        %904 = vxpose.xlu0.b32.cont [10/16] 0.0, 128
        %905 = vxpose.xlu0.b32.cont [11/16] 0.0, 128
        %906 = vxpose.xlu0.b32.cont [12/16] 0.0, 128
        %907 = vxpose.xlu0.b32.cont [13/16] 0.0, 128
        %908 = vxpose.xlu0.b32.cont [14/16] 0.0, 128
        %909 = vxpose.xlu0.b32.cont [15/16] 0.0, 128
        %910 = vxpose.xlu0.b32.end [16/16] 0.0, 128
        %v911 = vpop.trf.xlu0
        %v912 = vpop.trf.xlu0
        %v913 = vpop.trf.xlu0
        %v914 = vpop.trf.xlu0
        %v915 = vpop.trf.xlu0
        %v916 = vpop.trf.xlu0
        %v917 = vpop.trf.xlu0
        %v918 = vpop.trf.xlu0
        %v919 = vpop.trf.xlu0
        %v920 = vpop.trf.xlu0
        %v921 = vpop.trf.xlu0
        %v922 = vpop.trf.xlu0
        %v923 = vpop.trf.xlu0
        %v924 = vpop.trf.xlu0
        %v925 = vpop.trf.xlu0
        %v926 = vpop.trf.xlu0
        %vm927 = vcmask 138240
        %v929 = vsel %vm927, %v911, 0
        %v932 = vsel %vm927, %v912, 0
        %v935 = vsel %vm927, %v913, 0
        %v938 = vsel %vm927, %v914, 0
        %vm940 = vcmask 1040384
        %v942 = vsel %vm940, %v894, 0
        %944 = vmatprep.subr.mxu0 0.0
        %945 = vmatpush1.msra.mxu0 %v892
        %946 = vmatprep.subr.mxu0 0.0
        %947 = vmatpush1.msra.mxu0 %v893
        %948 = vmatprep.subr.mxu0 0.0
        %949 = vmatpush1.msra.mxu0 %v942
        %950 = vmatprep.subr.mxu0 0.0
        %951 = vmatpush1.msra.mxu0 0.0
        %952 = vmatprep.subr.mxu0 0.0
        %953 = vmatpush1.msra.mxu0 0.0
        %954 = vmatprep.subr.mxu0 0.0
        %955 = vmatpush1.msra.mxu0 0.0
        %956 = vmatprep.subr.mxu0 0.0
        %957 = vmatpush1.msra.mxu0 0.0
        %958 = vmatprep.subr.mxu0 0.0
        %959 = vmatpush1.msra.mxu0 0.0
        %960 = vmatprep.subr.mxu0 0.0
        %961 = vmatpush1.msra.mxu0 0.0
        %962 = vmatprep.subr.mxu0 0.0
        %963 = vmatpush1.msra.mxu0 0.0
        %964 = vmatprep.subr.mxu0 0.0
        %965 = vmatpush1.msra.mxu0 0.0
        %966 = vmatprep.subr.mxu0 0.0
        %967 = vmatpush1.msra.mxu0 0.0
        %968 = vmatprep.subr.mxu0 0.0
        %969 = vmatpush1.msra.mxu0 0.0
        %970 = vmatprep.subr.mxu0 0.0
        %971 = vmatpush1.msra.mxu0 0.0
        %972 = vmatprep.subr.mxu0 0.0
        %973 = vmatpush1.msra.mxu0 0.0
        %974 = vmatprep.subr.mxu0 0.0
        %975 = vmatpush1.msra.mxu0 0.0
        %976 = vmatprep.subr.mxu0 0.0
        %977 = vmatpush1.msra.mxu0 0.0
        %978 = vmatprep.subr.mxu0 0.0
        %979 = vmatpush1.msra.mxu0 0.0
        %980 = vmatprep.subr.mxu0 0.0
        %981 = vmatpush1.msra.mxu0 0.0
        %982 = vmatprep.subr.mxu0 0.0
        %983 = vmatpush1.msra.mxu0 0.0
        %984 = vmatprep.subr.mxu0 0.0
        %985 = vmatpush1.msra.mxu0 0.0
        %986 = vmatprep.subr.mxu0 0.0
        %987 = vmatpush1.msra.mxu0 0.0
        %988 = vmatprep.subr.mxu0 0.0
        %989 = vmatpush1.msra.mxu0 0.0
        %990 = vmatprep.subr.mxu0 0.0
        %991 = vmatpush1.msra.mxu0 0.0
        %992 = vmatprep.subr.mxu0 0.0
        %993 = vmatpush1.msra.mxu0 0.0
        %994 = vmatprep.subr.mxu0 0.0
        %995 = vmatpush1.msra.mxu0 0.0
        %996 = vmatprep.subr.mxu0 0.0
        %997 = vmatpush1.msra.mxu0 0.0
        %998 = vmatprep.subr.mxu0 0.0
        %999 = vmatpush1.msra.mxu0 0.0
        %1000 = vmatprep.subr.mxu0 0.0
        %1001 = vmatpush1.msra.mxu0 0.0
        %1002 = vmatprep.subr.mxu0 0.0
        %1003 = vmatpush1.msra.mxu0 0.0
        %1004 = vmatprep.subr.mxu0 0.0
        %1005 = vmatpush1.msra.mxu0 0.0
        %1006 = vmatprep.subr.mxu0 0.0
        %1007 = vmatpush1.msra.mxu0 0.0
        %1008 = vmatprep.mubr.f32.mxu0 0.0
        %1009 = vmatmul.mubr.f32.gmra.mrb[0].mxu0 %v929
        %v1010 = vpop.f32.mrb[0].mxu0
        %v1011 = vadd.f32 0.0, %v1010
        %v1012 = vpop.f32.mrb[0].mxu0
        %1013 = vmatprep.mubr.f32.mxu0 0.0
        %1014 = vmatmul.mubr.f32.gmra.mrb[0].mxu0 %v932
        %v1015 = vpop.f32.mrb[0].mxu0
        %v1016 = vadd.f32 0.0, %v1015
        %v1017 = vpop.f32.mrb[0].mxu0
        %1018 = vmatprep.mubr.f32.mxu0 0.0
        %1019 = vmatmul.mubr.f32.gmra.mrb[0].mxu0 %v935
        %v1020 = vpop.f32.mrb[0].mxu0
        %v1021 = vadd.f32 0.0, %v1020
        %v1022 = vpop.f32.mrb[0].mxu0
        %1023 = vmatprep.mubr.f32.mxu0 0.0
        %1024 = vmatmul.mubr.f32.gmra.mrb[0].mxu0 %v938
        %v1025 = vpop.f32.mrb[0].mxu0
        %v1026 = vadd.f32 0.0, %v1025
        %v1027 = vpop.f32.mrb[0].mxu0
        %1028 = vdwg.mxu0
        %v1029 = vlaneseq
        %v1030 = vshrl.u32 %v1029, 7
        %v1031 = vsub.s32 5, %v1030
        %v1032 = vrot.slane %v523, %v1031
        %v1033 = vmul.f32 %v1011, %v1032
        %v1034 = vmul.f32 %v1016, %v1032
        %v1035 = vmul.f32 %v1021, %v1032
        %v1036 = vmul.f32 %v1026, %v1032
        %v1037 = vsel %vm519, %v1033, -inf
        %v1038 = vsel %vm520, %v1034, -inf
        %v1039 = vsel %vm521, %v1035, -inf
        %v1040 = vsel %vm522, %v1036, -inf
        %v1041 = vsel %vm526, %v1037, -inf
        %1042 = vmax.xlane.f32.xlu0 %v1041
        %v1043 = vpop.xlane.xlu0 %1042
        %v1044 = vsel %vm526, %v1038, -inf
        %1045 = vmax.xlane.f32.xlu0 %v1044
        %v1046 = vpop.xlane.xlu0 %1045
        %v1047 = vsel %vm526, %v1039, -inf
        %1048 = vmax.xlane.f32.xlu0 %v1047
        %v1049 = vpop.xlane.xlu0 %1048
        %v1050 = vsel %vm526, %v1040, -inf
        %1051 = vmax.xlane.f32.xlu0 %v1050
        %v1052 = vpop.xlane.xlu0 %1051
        %v1053 = vsub.f32 %v1037, %v1043
        %v1054 = vsub.f32 %v1038, %v1046
        %v1055 = vsub.f32 %v1039, %v1049
        %v1056 = vsub.f32 %v1040, %v1052
        %v1057 = vmul.f32 %v1053, 1.442695
        %v1058 = vpow.pop %v1057
        %v1059 = vmul.f32 %v1054, 1.442695
        %v1060 = vpow.pop %v1059
        %v1061 = vmul.f32 %v1055, 1.442695
        %v1062 = vpow.pop %v1061
        %v1063 = vmul.f32 %v1056, 1.442695
        %v1064 = vpow.pop %v1063
        %v1065 = vsel %vm526, %v1058, 0.0
        %1066 = vadd.xlane.f32.xlu0 %v1065
        %v1067 = vpop.xlane.xlu0 %1066
        %v1068 = vsel %vm526, %v1060, 0.0
        %1069 = vadd.xlane.f32.xlu0 %v1068
        %v1070 = vpop.xlane.xlu0 %1069
        %v1071 = vsel %vm526, %v1062, 0.0
        %1072 = vadd.xlane.f32.xlu0 %v1071
        %v1073 = vpop.xlane.xlu0 %1072
        %v1074 = vsel %vm526, %v1064, 0.0
        %1075 = vadd.xlane.f32.xlu0 %v1074
        %v1076 = vpop.xlane.xlu0 %1075
        %v1077 = vrcp.pop %v1067
        %v1078 = vrcp.pop %v1070
        %v1079 = vrcp.pop %v1073
        %v1080 = vrcp.pop %v1076
        %v1081 = vmul.f32 %v1058, %v1077
        %v1082 = vmul.f32 %v1060, %v1078
        %v1083 = vmul.f32 %v1062, %v1079
        %v1084 = vmul.f32 %v1064, %v1080
        %v1086 = vsel %vm526, %v844, 0
        %v1089 = vsel %vm526, %v849, 0
        %v1092 = vsel %vm526, %v854, 0
        %v1095 = vsel %vm526, %v1081, 0
        %v1098 = vsel %vm526, %v1082, 0
        %v1101 = vsel %vm526, %v1083, 0
        %v1104 = vsel %vm526, %v1084, 0
        %1106 = vmatprep.subr.mxu0 0.0
        %1107 = vmatpush1.xpose.msra.mxu0 %v1095
        %1108 = vmatprep.subr.mxu0 0.0
        %1109 = vmatpush1.xpose.msra.mxu0 %v1098
        %1110 = vmatprep.subr.mxu0 0.0
        %1111 = vmatpush1.xpose.msra.mxu0 %v1101
        %1112 = vmatprep.subr.mxu0 0.0
        %1113 = vmatpush1.xpose.msra.mxu0 %v1104
        %1114 = vmatprep.subr.mxu0 0.0
        %1115 = vmatpush1.xpose.msra.mxu0 0.0
        %1116 = vmatprep.subr.mxu0 0.0
        %1117 = vmatpush1.xpose.msra.mxu0 0.0
        %1118 = vmatprep.subr.mxu0 0.0
        %1119 = vmatpush1.xpose.msra.mxu0 0.0
        %1120 = vmatprep.subr.mxu0 0.0
        %1121 = vmatpush1.xpose.msra.mxu0 0.0
        %1122 = vmatprep.subr.mxu0 0.0
        %1123 = vmatpush1.xpose.msra.mxu0 0.0
        %1124 = vmatprep.subr.mxu0 0.0
        %1125 = vmatpush1.xpose.msra.mxu0 0.0
        %1126 = vmatprep.subr.mxu0 0.0
        %1127 = vmatpush1.xpose.msra.mxu0 0.0
        %1128 = vmatprep.subr.mxu0 0.0
        %1129 = vmatpush1.xpose.msra.mxu0 0.0
        %1130 = vmatprep.subr.mxu0 0.0
        %1131 = vmatpush1.xpose.msra.mxu0 0.0
        %1132 = vmatprep.subr.mxu0 0.0
        %1133 = vmatpush1.xpose.msra.mxu0 0.0
        %1134 = vmatprep.subr.mxu0 0.0
        %1135 = vmatpush1.xpose.msra.mxu0 0.0
        %1136 = vmatprep.subr.mxu0 0.0
        %1137 = vmatpush1.xpose.msra.mxu0 0.0
        %1138 = vmatprep.subr.mxu0 0.0
        %1139 = vmatpush1.xpose.msra.mxu0 0.0
        %1140 = vmatprep.subr.mxu0 0.0
        %1141 = vmatpush1.xpose.msra.mxu0 0.0
        %1142 = vmatprep.subr.mxu0 0.0
        %1143 = vmatpush1.xpose.msra.mxu0 0.0
        %1144 = vmatprep.subr.mxu0 0.0
        %1145 = vmatpush1.xpose.msra.mxu0 0.0
        %1146 = vmatprep.subr.mxu0 0.0
        %1147 = vmatpush1.xpose.msra.mxu0 0.0
        %1148 = vmatprep.subr.mxu0 0.0
        %1149 = vmatpush1.xpose.msra.mxu0 0.0
        %1150 = vmatprep.subr.mxu0 0.0
        %1151 = vmatpush1.xpose.msra.mxu0 0.0
        %1152 = vmatprep.subr.mxu0 0.0
        %1153 = vmatpush1.xpose.msra.mxu0 0.0
        %1154 = vmatprep.subr.mxu0 0.0
        %1155 = vmatpush1.xpose.msra.mxu0 0.0
        %1156 = vmatprep.subr.mxu0 0.0
        %1157 = vmatpush1.xpose.msra.mxu0 0.0
        %1158 = vmatprep.subr.mxu0 0.0
        %1159 = vmatpush1.xpose.msra.mxu0 0.0
        %1160 = vmatprep.subr.mxu0 0.0
        %1161 = vmatpush1.xpose.msra.mxu0 0.0
        %1162 = vmatprep.subr.mxu0 0.0
        %1163 = vmatpush1.xpose.msra.mxu0 0.0
        %1164 = vmatprep.subr.mxu0 0.0
        %1165 = vmatpush1.xpose.msra.mxu0 0.0
        %1166 = vmatprep.subr.mxu0 0.0
        %1167 = vmatpush1.xpose.msra.mxu0 0.0
        %1168 = vmatprep.subr.mxu0 0.0
        %1169 = vmatpush1.xpose.msra.mxu0 0.0
        %1170 = vmatprep.mubr.f32.mxu0 0.0
        %1171 = vmatmul.mubr.f32.gmra.mrb[0].mxu0 %v1086
        %v1172 = vpop.f32.mrb[0].mxu0
        %v1173 = vadd.f32 0.0, %v1172
        %v1174 = vpop.f32.mrb[0].mxu0
        %1175 = vmatprep.mubr.f32.mxu0 0.0
        %1176 = vmatmul.mubr.f32.gmra.mrb[0].mxu0 %v1089
        %v1177 = vpop.f32.mrb[0].mxu0
        %v1178 = vadd.f32 0.0, %v1177
        %v1179 = vpop.f32.mrb[0].mxu0
        %1180 = vmatprep.mubr.f32.mxu0 0.0
        %1181 = vmatmul.mubr.f32.gmra.mrb[0].mxu0 %v1092
        %v1182 = vpop.f32.mrb[0].mxu0
        %v1183 = vadd.f32 0.0, %v1182
        %v1184 = vpop.f32.mrb[0].mxu0
        %1185 = vdwg.mxu0
        %s1186 = scalar_lea.vmem %s3, 96
        %v1187 = vld [vmem:[%s1186] sm:$0xff]
        %v1188 = vld [vmem:[%s1186 + $0x8] sm:$0xff]
        %v1189 = vld [vmem:[%s1186 + $0x10] sm:$0xff]
        %v1190 = vld [vmem:[%s1186 + $0x18] sm:$0xff]
        %v1191 = vlaneseq
        %v1192 = vshrl.u32 %v1191, 7
        %v1193 = vsub.s32 6, %v1192
        %v1194 = vrot.slane %v523, %v1193
        %v1196 = vsel %vm526, %v1173, 0
        %v1199 = vsel %vm526, %v1178, 0
        %v1202 = vsel %vm526, %v1183, 0
        %1204 = vmatprep.subr.mxu0 0.0
        %1205 = vmatpush1.msra.mxu0 %v1187
        %1206 = vmatprep.subr.mxu0 0.0
        %1207 = vmatpush1.msra.mxu0 %v1188
        %1208 = vmatprep.subr.mxu0 0.0
        %1209 = vmatpush1.msra.mxu0 %v1189
        %1210 = vmatprep.subr.mxu0 0.0
        %1211 = vmatpush1.msra.mxu0 %v1190
        %1212 = vmatprep.subr.mxu0 0.0
        %1213 = vmatpush1.msra.mxu0 0.0
        %1214 = vmatprep.subr.mxu0 0.0
        %1215 = vmatpush1.msra.mxu0 0.0
        %1216 = vmatprep.subr.mxu0 0.0
        %1217 = vmatpush1.msra.mxu0 0.0
        %1218 = vmatprep.subr.mxu0 0.0
        %1219 = vmatpush1.msra.mxu0 0.0
        %1220 = vmatprep.subr.mxu0 0.0
        %1221 = vmatpush1.msra.mxu0 0.0
        %1222 = vmatprep.subr.mxu0 0.0
        %1223 = vmatpush1.msra.mxu0 0.0
        %1224 = vmatprep.subr.mxu0 0.0
        %1225 = vmatpush1.msra.mxu0 0.0
        %1226 = vmatprep.subr.mxu0 0.0
        %1227 = vmatpush1.msra.mxu0 0.0
        %1228 = vmatprep.subr.mxu0 0.0
        %1229 = vmatpush1.msra.mxu0 0.0
        %1230 = vmatprep.subr.mxu0 0.0
        %1231 = vmatpush1.msra.mxu0 0.0
        %1232 = vmatprep.subr.mxu0 0.0
        %1233 = vmatpush1.msra.mxu0 0.0
        %1234 = vmatprep.subr.mxu0 0.0
        %1235 = vmatpush1.msra.mxu0 0.0
        %1236 = vmatprep.subr.mxu0 0.0
        %1237 = vmatpush1.msra.mxu0 0.0
        %1238 = vmatprep.subr.mxu0 0.0
        %1239 = vmatpush1.msra.mxu0 0.0
        %1240 = vmatprep.subr.mxu0 0.0
        %1241 = vmatpush1.msra.mxu0 0.0
        %1242 = vmatprep.subr.mxu0 0.0
        %1243 = vmatpush1.msra.mxu0 0.0
        %1244 = vmatprep.subr.mxu0 0.0
        %1245 = vmatpush1.msra.mxu0 0.0
        %1246 = vmatprep.subr.mxu0 0.0
        %1247 = vmatpush1.msra.mxu0 0.0
        %1248 = vmatprep.subr.mxu0 0.0
        %1249 = vmatpush1.msra.mxu0 0.0
        %1250 = vmatprep.subr.mxu0 0.0
        %1251 = vmatpush1.msra.mxu0 0.0
        %1252 = vmatprep.subr.mxu0 0.0
        %1253 = vmatpush1.msra.mxu0 0.0
        %1254 = vmatprep.subr.mxu0 0.0
        %1255 = vmatpush1.msra.mxu0 0.0
        %1256 = vmatprep.subr.mxu0 0.0
        %1257 = vmatpush1.msra.mxu0 0.0
        %1258 = vmatprep.subr.mxu0 0.0
        %1259 = vmatpush1.msra.mxu0 0.0
        %1260 = vmatprep.subr.mxu0 0.0
        %1261 = vmatpush1.msra.mxu0 0.0
        %1262 = vmatprep.subr.mxu0 0.0
        %1263 = vmatpush1.msra.mxu0 0.0
        %1264 = vmatprep.subr.mxu0 0.0
        %1265 = vmatpush1.msra.mxu0 0.0
        %1266 = vmatprep.subr.mxu0 0.0
        %1267 = vmatpush1.msra.mxu0 0.0
        %1268 = vmatprep.mubr.f32.mxu0 0.0
        %1269 = vmatmul.mubr.f32.gmra.mrb[0].mxu0 %v1196
        %v1270 = vpop.f32.mrb[0].mxu0
        %v1271 = vadd.f32 %v1194, %v1270
        %v1272 = vpop.f32.mrb[0].mxu0
        %1273 = vmatprep.mubr.f32.mxu0 0.0
        %1274 = vmatmul.mubr.f32.gmra.mrb[0].mxu0 %v1199
        %v1275 = vpop.f32.mrb[0].mxu0
        %v1276 = vadd.f32 %v1194, %v1275
        %v1277 = vpop.f32.mrb[0].mxu0
        %1278 = vmatprep.mubr.f32.mxu0 0.0
        %1279 = vmatmul.mubr.f32.gmra.mrb[0].mxu0 %v1202
        %v1280 = vpop.f32.mrb[0].mxu0
        %v1281 = vadd.f32 %v1194, %v1280
        %v1282 = vpop.f32.mrb[0].mxu0
        %1283 = vdwg.mxu0
        %v1285 = vsel %vm927, %v499, 0
        %v1288 = vsel %vm927, %v500, 0
        %v1291 = vsel %vm927, %v501, 0
        %v1294 = vsel %vm940, %v1281, 0
        %1296 = vmatprep.subr.mxu0 0.0
        %1297 = vmatpush1.msra.mxu0 %v1271
        %1298 = vmatprep.subr.mxu0 0.0
        %1299 = vmatpush1.msra.mxu0 %v1276
        %1300 = vmatprep.subr.mxu0 0.0
        %1301 = vmatpush1.msra.mxu0 %v1294
        %1302 = vmatprep.subr.mxu0 0.0
        %1303 = vmatpush1.msra.mxu0 0.0
        %1304 = vmatprep.subr.mxu0 0.0
        %1305 = vmatpush1.msra.mxu0 0.0
        %1306 = vmatprep.subr.mxu0 0.0
        %1307 = vmatpush1.msra.mxu0 0.0
        %1308 = vmatprep.subr.mxu0 0.0
        %1309 = vmatpush1.msra.mxu0 0.0
        %1310 = vmatprep.subr.mxu0 0.0
        %1311 = vmatpush1.msra.mxu0 0.0
        %1312 = vmatprep.subr.mxu0 0.0
        %1313 = vmatpush1.msra.mxu0 0.0
        %1314 = vmatprep.subr.mxu0 0.0
        %1315 = vmatpush1.msra.mxu0 0.0
        %1316 = vmatprep.subr.mxu0 0.0
        %1317 = vmatpush1.msra.mxu0 0.0
        %1318 = vmatprep.subr.mxu0 0.0
        %1319 = vmatpush1.msra.mxu0 0.0
        %1320 = vmatprep.subr.mxu0 0.0
        %1321 = vmatpush1.msra.mxu0 0.0
        %1322 = vmatprep.subr.mxu0 0.0
        %1323 = vmatpush1.msra.mxu0 0.0
        %1324 = vmatprep.subr.mxu0 0.0
        %1325 = vmatpush1.msra.mxu0 0.0
        %1326 = vmatprep.subr.mxu0 0.0
        %1327 = vmatpush1.msra.mxu0 0.0
        %1328 = vmatprep.subr.mxu0 0.0
        %1329 = vmatpush1.msra.mxu0 0.0
        %1330 = vmatprep.subr.mxu0 0.0
        %1331 = vmatpush1.msra.mxu0 0.0
        %1332 = vmatprep.subr.mxu0 0.0
        %1333 = vmatpush1.msra.mxu0 0.0
        %1334 = vmatprep.subr.mxu0 0.0
        %1335 = vmatpush1.msra.mxu0 0.0
        %1336 = vmatprep.subr.mxu0 0.0
        %1337 = vmatpush1.msra.mxu0 0.0
        %1338 = vmatprep.subr.mxu0 0.0
        %1339 = vmatpush1.msra.mxu0 0.0
        %1340 = vmatprep.subr.mxu0 0.0
        %1341 = vmatpush1.msra.mxu0 0.0
        %1342 = vmatprep.subr.mxu0 0.0
        %1343 = vmatpush1.msra.mxu0 0.0
        %1344 = vmatprep.subr.mxu0 0.0
        %1345 = vmatpush1.msra.mxu0 0.0
        %1346 = vmatprep.subr.mxu0 0.0
        %1347 = vmatpush1.msra.mxu0 0.0
        %1348 = vmatprep.subr.mxu0 0.0
        %1349 = vmatpush1.msra.mxu0 0.0
        %1350 = vmatprep.subr.mxu0 0.0
        %1351 = vmatpush1.msra.mxu0 0.0
        %1352 = vmatprep.subr.mxu0 0.0
        %1353 = vmatpush1.msra.mxu0 0.0
        %1354 = vmatprep.subr.mxu0 0.0
        %1355 = vmatpush1.msra.mxu0 0.0
        %1356 = vmatprep.subr.mxu0 0.0
        %1357 = vmatpush1.msra.mxu0 0.0
        %1358 = vmatprep.subr.mxu0 0.0
        %1359 = vmatpush1.msra.mxu0 0.0
        %1360 = vmatprep.mubr.f32.mxu0 0.0
        %1361 = vmatmul.mubr.f32.gmra.mrb[0].mxu0 %v1285
        %v1362 = vpop.f32.mrb[0].mxu0
        %v1363 = vadd.f32 0.0, %v1362
        %v1364 = vpop.f32.mrb[0].mxu0
        %1365 = vmatprep.mubr.f32.mxu0 0.0
        %1366 = vmatmul.mubr.f32.gmra.mrb[0].mxu0 %v1288
        %v1367 = vpop.f32.mrb[0].mxu0
        %v1368 = vadd.f32 0.0, %v1367
        %v1369 = vpop.f32.mrb[0].mxu0
        %1370 = vmatprep.mubr.f32.mxu0 0.0
        %1371 = vmatmul.mubr.f32.gmra.mrb[0].mxu0 %v1291
        %v1372 = vpop.f32.mrb[0].mxu0
        %v1373 = vadd.f32 0.0, %v1372
        %v1374 = vpop.f32.mrb[0].mxu0
        %1375 = vdwg.mxu0
        %v1377 = vsel %vm927, %v511, 0
        %v1380 = vsel %vm927, %v512, 0
        %v1383 = vsel %vm927, %v513, 0
        %1385 = vmatprep.subr.mxu0 0.0
        %1386 = vmatpush1.msra.mxu0 %v1271
        %1387 = vmatprep.subr.mxu0 0.0
        %1388 = vmatpush1.msra.mxu0 %v1276
        %1389 = vmatprep.subr.mxu0 0.0
        %1390 = vmatpush1.msra.mxu0 %v1294
        %1391 = vmatprep.subr.mxu0 0.0
        %1392 = vmatpush1.msra.mxu0 0.0
        %1393 = vmatprep.subr.mxu0 0.0
        %1394 = vmatpush1.msra.mxu0 0.0
        %1395 = vmatprep.subr.mxu0 0.0
        %1396 = vmatpush1.msra.mxu0 0.0
        %1397 = vmatprep.subr.mxu0 0.0
        %1398 = vmatpush1.msra.mxu0 0.0
        %1399 = vmatprep.subr.mxu0 0.0
        %1400 = vmatpush1.msra.mxu0 0.0
        %1401 = vmatprep.subr.mxu0 0.0
        %1402 = vmatpush1.msra.mxu0 0.0
        %1403 = vmatprep.subr.mxu0 0.0
        %1404 = vmatpush1.msra.mxu0 0.0
        %1405 = vmatprep.subr.mxu0 0.0
        %1406 = vmatpush1.msra.mxu0 0.0
        %1407 = vmatprep.subr.mxu0 0.0
        %1408 = vmatpush1.msra.mxu0 0.0
        %1409 = vmatprep.subr.mxu0 0.0
        %1410 = vmatpush1.msra.mxu0 0.0
        %1411 = vmatprep.subr.mxu0 0.0
        %1412 = vmatpush1.msra.mxu0 0.0
        %1413 = vmatprep.subr.mxu0 0.0
        %1414 = vmatpush1.msra.mxu0 0.0
        %1415 = vmatprep.subr.mxu0 0.0
        %1416 = vmatpush1.msra.mxu0 0.0
        %1417 = vmatprep.subr.mxu0 0.0
        %1418 = vmatpush1.msra.mxu0 0.0
        %1419 = vmatprep.subr.mxu0 0.0
        %1420 = vmatpush1.msra.mxu0 0.0
        %1421 = vmatprep.subr.mxu0 0.0
        %1422 = vmatpush1.msra.mxu0 0.0
        %1423 = vmatprep.subr.mxu0 0.0
        %1424 = vmatpush1.msra.mxu0 0.0
        %1425 = vmatprep.subr.mxu0 0.0
        %1426 = vmatpush1.msra.mxu0 0.0
        %1427 = vmatprep.subr.mxu0 0.0
        %1428 = vmatpush1.msra.mxu0 0.0
        %1429 = vmatprep.subr.mxu0 0.0
        %1430 = vmatpush1.msra.mxu0 0.0
        %1431 = vmatprep.subr.mxu0 0.0
        %1432 = vmatpush1.msra.mxu0 0.0
        %1433 = vmatprep.subr.mxu0 0.0
        %1434 = vmatpush1.msra.mxu0 0.0
        %1435 = vmatprep.subr.mxu0 0.0
        %1436 = vmatpush1.msra.mxu0 0.0
        %1437 = vmatprep.subr.mxu0 0.0
        %1438 = vmatpush1.msra.mxu0 0.0
        %1439 = vmatprep.subr.mxu0 0.0
        %1440 = vmatpush1.msra.mxu0 0.0
        %1441 = vmatprep.subr.mxu0 0.0
        %1442 = vmatpush1.msra.mxu0 0.0
        %1443 = vmatprep.subr.mxu0 0.0
        %1444 = vmatpush1.msra.mxu0 0.0
        %1445 = vmatprep.subr.mxu0 0.0
        %1446 = vmatpush1.msra.mxu0 0.0
        %1447 = vmatprep.subr.mxu0 0.0
        %1448 = vmatpush1.msra.mxu0 0.0
        %1449 = vmatprep.mubr.f32.mxu0 0.0
        %1450 = vmatmul.mubr.f32.gmra.mrb[0].mxu0 %v1377
        %v1451 = vpop.f32.mrb[0].mxu0
        %v1452 = vadd.f32 0.0, %v1451
        %v1453 = vpop.f32.mrb[0].mxu0
        %1454 = vmatprep.mubr.f32.mxu0 0.0
        %1455 = vmatmul.mubr.f32.gmra.mrb[0].mxu0 %v1380
        %v1456 = vpop.f32.mrb[0].mxu0
        %v1457 = vadd.f32 0.0, %v1456
        %v1458 = vpop.f32.mrb[0].mxu0
        %1459 = vmatprep.mubr.f32.mxu0 0.0
        %1460 = vmatmul.mubr.f32.gmra.mrb[0].mxu0 %v1383
        %v1461 = vpop.f32.mrb[0].mxu0
        %v1462 = vadd.f32 0.0, %v1461
        %v1463 = vpop.f32.mrb[0].mxu0
        %1464 = vdwg.mxu0
        %v1465 = vlaneseq
        %v1466 = vshrl.u32 %v1465, 7
        %v1467 = vsub.s32 7, %v1466
        %v1468 = vrot.slane %v523, %v1467
        %v1469 = vmul.f32 %v1468, %v1363
        %v1470 = vmul.f32 %v1468, %v1368
        %v1471 = vmul.f32 %v1468, %v1373
        %v1472 = vlaneseq
        %v1473 = vshrl.u32 %v1472, 7
        %v1474 = vsub.s32 0, %v1473
        %v1475 = vrot.slane %v524, %v1474
        %v1476 = vmul.f32 %v1475, %v1271
        %v1477 = vmul.f32 %v1475, %v1276
        %v1478 = vmul.f32 %v1475, %v1281
        %v1479 = vadd.f32 %v1469, %v1476
        %v1480 = vadd.f32 %v1470, %v1477
        %v1481 = vadd.f32 %v1471, %v1478
        %v1482 = vlaneseq
        %v1483 = vshrl.u32 %v1482, 7
        %v1484 = vsub.s32 1, %v1483
        %v1485 = vrot.slane %v524, %v1484
        %v1486 = vmul.f32 %v1485, %v1452
        %v1487 = vmul.f32 %v1485, %v1457
        %v1488 = vmul.f32 %v1485, %v1462
        %v1489 = vadd.f32 %v1479, %v1486
        %v1490 = vadd.f32 %v1480, %v1487
        %v1491 = vadd.f32 %v1481, %v1488
        %v1492 = vlaneseq
        %v1493 = vshrl.u32 %v1492, 7
        %v1494 = vsub.s32 2, %v1493
        %v1495 = vrot.slane %v524, %v1494
        %v1496 = vadd.f32 %v1489, %v1495
        %v1497 = vadd.f32 %v1490, %v1495
        %v1498 = vadd.f32 %v1491, %v1495
        %v1499 = vmul.f32 %v1496, %v1496
        %v1500 = vmul.f32 %v1497, %v1497
        %v1501 = vmul.f32 %v1498, %v1498
        %v1502 = vmul.f32 %v1496, %v1499
        %v1503 = vmul.f32 %v1497, %v1500
        %v1504 = vmul.f32 %v1498, %v1501
        %v1505 = vmul.f32 %v1502, 0.044715
        %v1506 = vmul.f32 %v1503, 0.044715
        %v1507 = vmul.f32 %v1504, 0.044715
        %v1508 = vadd.f32 %v1496, %v1505
        %v1509 = vadd.f32 %v1497, %v1506
        %v1510 = vadd.f32 %v1498, %v1507
        %v1511 = vmul.f32 %v1508, 0.7978846
        %v1512 = vmul.f32 %v1509, 0.7978846
        %v1513 = vmul.f32 %v1510, 0.7978846
        %v1514 = vtanh.pop %v1511
        %v1515 = vtanh.pop %v1512
        %v1516 = vtanh.pop %v1513
        %v1517 = vadd.f32 %v1514, 1.0
        %v1518 = vadd.f32 %v1515, 1.0
        %v1519 = vadd.f32 %v1516, 1.0
        %v1520 = vmul.f32 %v1517, 0.5
        %v1521 = vmul.f32 %v1518, 0.5
        %v1522 = vmul.f32 %v1519, 0.5
        %v1523 = vmul.f32 %v1496, %v1520
        %v1524 = vmul.f32 %v1497, %v1521
        %v1525 = vmul.f32 %v1498, %v1522
        %v1527 = vsel %vm940, %v1525, 0
        %1529 = vmatprep.subr.mxu0 0.0
        %1530 = vmatpush1.msra.mxu0 %v1523
        %1531 = vmatprep.subr.mxu0 0.0
        %1532 = vmatpush1.msra.mxu0 %v1524
        %1533 = vmatprep.subr.mxu0 0.0
        %1534 = vmatpush1.msra.mxu0 %v1527
        %1535 = vmatprep.subr.mxu0 0.0
        %1536 = vmatpush1.msra.mxu0 0.0
        %1537 = vmatprep.subr.mxu0 0.0
        %1538 = vmatpush1.msra.mxu0 0.0
        %1539 = vmatprep.subr.mxu0 0.0
        %1540 = vmatpush1.msra.mxu0 0.0
        %1541 = vmatprep.subr.mxu0 0.0
        %1542 = vmatpush1.msra.mxu0 0.0
        %1543 = vmatprep.subr.mxu0 0.0
        %1544 = vmatpush1.msra.mxu0 0.0
        %1545 = vmatprep.subr.mxu0 0.0
        %1546 = vmatpush1.msra.mxu0 0.0
        %1547 = vmatprep.subr.mxu0 0.0
        %1548 = vmatpush1.msra.mxu0 0.0
        %1549 = vmatprep.subr.mxu0 0.0
        %1550 = vmatpush1.msra.mxu0 0.0
        %1551 = vmatprep.subr.mxu0 0.0
        %1552 = vmatpush1.msra.mxu0 0.0
        %1553 = vmatprep.subr.mxu0 0.0
        %1554 = vmatpush1.msra.mxu0 0.0
        %1555 = vmatprep.subr.mxu0 0.0
        %1556 = vmatpush1.msra.mxu0 0.0
        %1557 = vmatprep.subr.mxu0 0.0
        %1558 = vmatpush1.msra.mxu0 0.0
        %1559 = vmatprep.subr.mxu0 0.0
        %1560 = vmatpush1.msra.mxu0 0.0
        %1561 = vmatprep.subr.mxu0 0.0
        %1562 = vmatpush1.msra.mxu0 0.0
        %1563 = vmatprep.subr.mxu0 0.0
        %1564 = vmatpush1.msra.mxu0 0.0
        %1565 = vmatprep.subr.mxu0 0.0
        %1566 = vmatpush1.msra.mxu0 0.0
        %1567 = vmatprep.subr.mxu0 0.0
        %1568 = vmatpush1.msra.mxu0 0.0
        %1569 = vmatprep.subr.mxu0 0.0
        %1570 = vmatpush1.msra.mxu0 0.0
        %1571 = vmatprep.subr.mxu0 0.0
        %1572 = vmatpush1.msra.mxu0 0.0
        %1573 = vmatprep.subr.mxu0 0.0
        %1574 = vmatpush1.msra.mxu0 0.0
        %1575 = vmatprep.subr.mxu0 0.0
        %1576 = vmatpush1.msra.mxu0 0.0
        %1577 = vmatprep.subr.mxu0 0.0
        %1578 = vmatpush1.msra.mxu0 0.0
        %1579 = vmatprep.subr.mxu0 0.0
        %1580 = vmatpush1.msra.mxu0 0.0
        %1581 = vmatprep.subr.mxu0 0.0
        %1582 = vmatpush1.msra.mxu0 0.0
        %1583 = vmatprep.subr.mxu0 0.0
        %1584 = vmatpush1.msra.mxu0 0.0
        %1585 = vmatprep.subr.mxu0 0.0
        %1586 = vmatpush1.msra.mxu0 0.0
        %1587 = vmatprep.subr.mxu0 0.0
        %1588 = vmatpush1.msra.mxu0 0.0
        %1589 = vmatprep.subr.mxu0 0.0
        %1590 = vmatpush1.msra.mxu0 0.0
        %1591 = vmatprep.subr.mxu0 0.0
        %1592 = vmatpush1.msra.mxu0 0.0
        %1593 = vmatprep.mubr.f32.mxu0 0.0
        %1594 = vmatmul.mubr.f32.gmra.mrb[0].mxu0 %v1285
        %v1595 = vpop.f32.mrb[0].mxu0
        %v1596 = vadd.f32 0.0, %v1595
        %v1597 = vpop.f32.mrb[0].mxu0
        %1598 = vmatprep.mubr.f32.mxu0 0.0
        %1599 = vmatmul.mubr.f32.gmra.mrb[0].mxu0 %v1288
        %v1600 = vpop.f32.mrb[0].mxu0
        %v1601 = vadd.f32 0.0, %v1600
        %v1602 = vpop.f32.mrb[0].mxu0
        %1603 = vmatprep.mubr.f32.mxu0 0.0
        %1604 = vmatmul.mubr.f32.gmra.mrb[0].mxu0 %v1291
        %v1605 = vpop.f32.mrb[0].mxu0
        %v1606 = vadd.f32 0.0, %v1605
        %v1607 = vpop.f32.mrb[0].mxu0
        %1608 = vdwg.mxu0
        %1609 = vmatprep.subr.mxu0 0.0
        %1610 = vmatpush1.msra.mxu0 %v1523
        %1611 = vmatprep.subr.mxu0 0.0
        %1612 = vmatpush1.msra.mxu0 %v1524
        %1613 = vmatprep.subr.mxu0 0.0
        %1614 = vmatpush1.msra.mxu0 %v1527
        %1615 = vmatprep.subr.mxu0 0.0
        %1616 = vmatpush1.msra.mxu0 0.0
        %1617 = vmatprep.subr.mxu0 0.0
        %1618 = vmatpush1.msra.mxu0 0.0
        %1619 = vmatprep.subr.mxu0 0.0
        %1620 = vmatpush1.msra.mxu0 0.0
        %1621 = vmatprep.subr.mxu0 0.0
        %1622 = vmatpush1.msra.mxu0 0.0
        %1623 = vmatprep.subr.mxu0 0.0
        %1624 = vmatpush1.msra.mxu0 0.0
        %1625 = vmatprep.subr.mxu0 0.0
        %1626 = vmatpush1.msra.mxu0 0.0
        %1627 = vmatprep.subr.mxu0 0.0
        %1628 = vmatpush1.msra.mxu0 0.0
        %1629 = vmatprep.subr.mxu0 0.0
        %1630 = vmatpush1.msra.mxu0 0.0
        %1631 = vmatprep.subr.mxu0 0.0
        %1632 = vmatpush1.msra.mxu0 0.0
        %1633 = vmatprep.subr.mxu0 0.0
        %1634 = vmatpush1.msra.mxu0 0.0
        %1635 = vmatprep.subr.mxu0 0.0
        %1636 = vmatpush1.msra.mxu0 0.0
        %1637 = vmatprep.subr.mxu0 0.0
        %1638 = vmatpush1.msra.mxu0 0.0
        %1639 = vmatprep.subr.mxu0 0.0
        %1640 = vmatpush1.msra.mxu0 0.0
        %1641 = vmatprep.subr.mxu0 0.0
        %1642 = vmatpush1.msra.mxu0 0.0
        %1643 = vmatprep.subr.mxu0 0.0
        %1644 = vmatpush1.msra.mxu0 0.0
        %1645 = vmatprep.subr.mxu0 0.0
        %1646 = vmatpush1.msra.mxu0 0.0
        %1647 = vmatprep.subr.mxu0 0.0
        %1648 = vmatpush1.msra.mxu0 0.0
        %1649 = vmatprep.subr.mxu0 0.0
        %1650 = vmatpush1.msra.mxu0 0.0
        %1651 = vmatprep.subr.mxu0 0.0
        %1652 = vmatpush1.msra.mxu0 0.0
        %1653 = vmatprep.subr.mxu0 0.0
        %1654 = vmatpush1.msra.mxu0 0.0
        %1655 = vmatprep.subr.mxu0 0.0
        %1656 = vmatpush1.msra.mxu0 0.0
        %1657 = vmatprep.subr.mxu0 0.0
        %1658 = vmatpush1.msra.mxu0 0.0
        %1659 = vmatprep.subr.mxu0 0.0
        %1660 = vmatpush1.msra.mxu0 0.0
        %1661 = vmatprep.subr.mxu0 0.0
        %1662 = vmatpush1.msra.mxu0 0.0
        %1663 = vmatprep.subr.mxu0 0.0
        %1664 = vmatpush1.msra.mxu0 0.0
        %1665 = vmatprep.subr.mxu0 0.0
        %1666 = vmatpush1.msra.mxu0 0.0
        %1667 = vmatprep.subr.mxu0 0.0
        %1668 = vmatpush1.msra.mxu0 0.0
        %1669 = vmatprep.subr.mxu0 0.0
        %1670 = vmatpush1.msra.mxu0 0.0
        %1671 = vmatprep.subr.mxu0 0.0
        %1672 = vmatpush1.msra.mxu0 0.0
        %1673 = vmatprep.mubr.f32.mxu0 0.0
        %1674 = vmatmul.mubr.f32.gmra.mrb[0].mxu0 %v1377
        %v1675 = vpop.f32.mrb[0].mxu0
        %v1676 = vadd.f32 0.0, %v1675
        %v1677 = vpop.f32.mrb[0].mxu0
        %1678 = vmatprep.mubr.f32.mxu0 0.0
        %1679 = vmatmul.mubr.f32.gmra.mrb[0].mxu0 %v1380
        %v1680 = vpop.f32.mrb[0].mxu0
        %v1681 = vadd.f32 0.0, %v1680
        %v1682 = vpop.f32.mrb[0].mxu0
        %1683 = vmatprep.mubr.f32.mxu0 0.0
        %1684 = vmatmul.mubr.f32.gmra.mrb[0].mxu0 %v1383
        %v1685 = vpop.f32.mrb[0].mxu0
        %v1686 = vadd.f32 0.0, %v1685
        %v1687 = vpop.f32.mrb[0].mxu0
        %1688 = vdwg.mxu0
        %v1689 = vlaneseq
        %v1690 = vshrl.u32 %v1689, 7
        %v1691 = vsub.s32 3, %v1690
        %v1692 = vrot.slane %v524, %v1691
        %v1693 = vmul.f32 %v1692, %v1596
        %v1694 = vmul.f32 %v1692, %v1601
        %v1695 = vmul.f32 %v1692, %v1606
        %v1696 = vlaneseq
        %v1697 = vshrl.u32 %v1696, 7
        %v1698 = vsub.s32 4, %v1697
        %v1699 = vrot.slane %v524, %v1698
        %v1700 = vmul.f32 %v1699, %v1523
        %v1701 = vmul.f32 %v1699, %v1524
        %v1702 = vmul.f32 %v1699, %v1525
        %v1703 = vadd.f32 %v1693, %v1700
        %v1704 = vadd.f32 %v1694, %v1701
        %v1705 = vadd.f32 %v1695, %v1702
        %v1706 = vlaneseq
        %v1707 = vshrl.u32 %v1706, 7
        %v1708 = vsub.s32 5, %v1707
        %v1709 = vrot.slane %v524, %v1708
        %v1710 = vmul.f32 %v1709, %v1676
        %v1711 = vmul.f32 %v1709, %v1681
        %v1712 = vmul.f32 %v1709, %v1686
        %v1713 = vadd.f32 %v1703, %v1710
        %v1714 = vadd.f32 %v1704, %v1711
        %v1715 = vadd.f32 %v1705, %v1712
        %v1716 = vlaneseq
        %v1717 = vshrl.u32 %v1716, 7
        %v1718 = vsub.s32 6, %v1717
        %v1719 = vrot.slane %v524, %v1718
        %v1720 = vadd.f32 %v1713, %v1719
        %v1721 = vadd.f32 %v1714, %v1719
        %v1722 = vadd.f32 %v1715, %v1719
        %v1723 = vadd.f32 %v1720, %v473
        %v1724 = vadd.f32 %v1721, %v478
        %v1725 = vadd.f32 %v1722, %v483
        %v1726 = vsel %vm526, %v1723, 0.0
        %1727 = vadd.xlane.f32.xlu0 %v1726
        %v1728 = vpop.xlane.xlu0 %1727
        %v1729 = vsel %vm526, %v1724, 0.0
        %1730 = vadd.xlane.f32.xlu0 %v1729
        %v1731 = vpop.xlane.xlu0 %1730
        %v1732 = vsel %vm533, %v1725, 0.0
        %1733 = vadd.xlane.f32.xlu0 %v1732
        %v1734 = vpop.xlane.xlu0 %1733
        %v1735 = vmul.f32 %v1728, %v537
        %v1736 = vmul.f32 %v1731, %v537
        %v1737 = vmul.f32 %v1734, %v537
        %v1738 = vsub.f32 %v1723, %v1735
        %v1739 = vsub.f32 %v1724, %v1736
        %v1740 = vsub.f32 %v1725, %v1737
        %v1741 = vmul.f32 %v1738, %v1738
        %v1742 = vmul.f32 %v1739, %v1739
        %v1743 = vmul.f32 %v1740, %v1740
        %v1744 = vsel %vm526, %v1741, 0.0
        %1745 = vadd.xlane.f32.xlu0 %v1744
        %v1746 = vpop.xlane.xlu0 %1745
        %v1747 = vsel %vm526, %v1742, 0.0
        %1748 = vadd.xlane.f32.xlu0 %v1747
        %v1749 = vpop.xlane.xlu0 %1748
        %v1750 = vsel %vm533, %v1743, 0.0
        %1751 = vadd.xlane.f32.xlu0 %v1750
        %v1752 = vpop.xlane.xlu0 %1751
        %v1753 = vmul.f32 %v1746, %v537
        %v1754 = vmul.f32 %v1749, %v537
        %v1755 = vmul.f32 %v1752, %v537
        %v1756 = vadd.f32 %v1753, 1e-05
        %v1757 = vadd.f32 %v1754, 1e-05
        %v1758 = vadd.f32 %v1755, 1e-05
        %v1759 = vrsqrt.pop %v1756
        %v1760 = vrsqrt.pop %v1757
        %v1761 = vrsqrt.pop %v1758
        %v1762 = vmul.f32 %v1738, %v1759
        %v1763 = vmul.f32 %v1739, %v1760
        %v1764 = vmul.f32 %v1740, %v1761
        %v1765 = vlaneseq
        %v1766 = vshrl.u32 %v1765, 7
        %v1767 = vsub.s32 7, %v1766
        %v1768 = vrot.slane %v524, %v1767
        %v1769 = vmul.f32 %v1762, %v1768
        %v1770 = vmul.f32 %v1763, %v1768
        %v1771 = vmul.f32 %v1764, %v1768
        %v1772 = vlaneseq
        %v1773 = vshrl.u32 %v1772, 7
        %v1774 = vsub.s32 0, %v1773
        %v1775 = vrot.slane %v525, %v1774
        %v1776 = vadd.f32 %v1769, %v1775
        %v1777 = vadd.f32 %v1770, %v1775
        %v1778 = vadd.f32 %v1771, %v1775
        %v1779 = vld [vmem:[%s5] sm:$0xff]
        %v1780 = vld [vmem:[%s5 + $0x8] sm:$0xff]
        %v1781 = vld [vmem:[%s5 + $0x10] sm:$0xff]
        %v1782 = vld [vmem:[%s5 + $0x18] sm:$0xff]
        %v1783 = vld [vmem:[%s6] sm:$0x1]
        %v1785 = vlaneseq
        %v1786 = vshrl.u32 %v1785, 7
        %v1787 = vsub.s32 0, %v1786
        %v1788 = vrot.slane %v1783, %v1787
        %v1791 = vsel %vm526, %v1776, 0
        %v1794 = vsel %vm526, %v1777, 0
        %v1797 = vsel %vm526, %v1778, 0
        %1799 = vmatprep.subr.mxu0 0.0
        %1800 = vmatpush1.msra.mxu0 %v1779
        %1801 = vmatprep.subr.mxu0 0.0
        %1802 = vmatpush1.msra.mxu0 %v1780
        %1803 = vmatprep.subr.mxu0 0.0
        %1804 = vmatpush1.msra.mxu0 %v1781
        %1805 = vmatprep.subr.mxu0 0.0
        %1806 = vmatpush1.msra.mxu0 %v1782
        %1807 = vmatprep.subr.mxu0 0.0
        %1808 = vmatpush1.msra.mxu0 0.0
        %1809 = vmatprep.subr.mxu0 0.0
        %1810 = vmatpush1.msra.mxu0 0.0
        %1811 = vmatprep.subr.mxu0 0.0
        %1812 = vmatpush1.msra.mxu0 0.0
        %1813 = vmatprep.subr.mxu0 0.0
        %1814 = vmatpush1.msra.mxu0 0.0
        %1815 = vmatprep.subr.mxu0 0.0
        %1816 = vmatpush1.msra.mxu0 0.0
        %1817 = vmatprep.subr.mxu0 0.0
        %1818 = vmatpush1.msra.mxu0 0.0
        %1819 = vmatprep.subr.mxu0 0.0
        %1820 = vmatpush1.msra.mxu0 0.0
        %1821 = vmatprep.subr.mxu0 0.0
        %1822 = vmatpush1.msra.mxu0 0.0
        %1823 = vmatprep.subr.mxu0 0.0
        %1824 = vmatpush1.msra.mxu0 0.0
        %1825 = vmatprep.subr.mxu0 0.0
        %1826 = vmatpush1.msra.mxu0 0.0
        %1827 = vmatprep.subr.mxu0 0.0
        %1828 = vmatpush1.msra.mxu0 0.0
        %1829 = vmatprep.subr.mxu0 0.0
        %1830 = vmatpush1.msra.mxu0 0.0
        %1831 = vmatprep.subr.mxu0 0.0
        %1832 = vmatpush1.msra.mxu0 0.0
        %1833 = vmatprep.subr.mxu0 0.0
        %1834 = vmatpush1.msra.mxu0 0.0
        %1835 = vmatprep.subr.mxu0 0.0
        %1836 = vmatpush1.msra.mxu0 0.0
        %1837 = vmatprep.subr.mxu0 0.0
        %1838 = vmatpush1.msra.mxu0 0.0
        %1839 = vmatprep.subr.mxu0 0.0
        %1840 = vmatpush1.msra.mxu0 0.0
        %1841 = vmatprep.subr.mxu0 0.0
        %1842 = vmatpush1.msra.mxu0 0.0
        %1843 = vmatprep.subr.mxu0 0.0
        %1844 = vmatpush1.msra.mxu0 0.0
        %1845 = vmatprep.subr.mxu0 0.0
        %1846 = vmatpush1.msra.mxu0 0.0
        %1847 = vmatprep.subr.mxu0 0.0
        %1848 = vmatpush1.msra.mxu0 0.0
        %1849 = vmatprep.subr.mxu0 0.0
        %1850 = vmatpush1.msra.mxu0 0.0
        %1851 = vmatprep.subr.mxu0 0.0
        %1852 = vmatpush1.msra.mxu0 0.0
        %1853 = vmatprep.subr.mxu0 0.0
        %1854 = vmatpush1.msra.mxu0 0.0
        %1855 = vmatprep.subr.mxu0 0.0
        %1856 = vmatpush1.msra.mxu0 0.0
        %1857 = vmatprep.subr.mxu0 0.0
        %1858 = vmatpush1.msra.mxu0 0.0
        %1859 = vmatprep.subr.mxu0 0.0
        %1860 = vmatpush1.msra.mxu0 0.0
        %1861 = vmatprep.subr.mxu0 0.0
        %1862 = vmatpush1.msra.mxu0 0.0
        %1863 = vmatprep.mubr.f32.mxu0 0.0
        %1864 = vmatmul.mubr.f32.gmra.mrb[0].mxu0 %v1791
        %v1865 = vpop.f32.mrb[0].mxu0
        %v1866 = vadd.f32 %v1788, %v1865
        %v1867 = vpop.f32.mrb[0].mxu0
        %1868 = vmatprep.mubr.f32.mxu0 0.0
        %1869 = vmatmul.mubr.f32.gmra.mrb[0].mxu0 %v1794
        %v1870 = vpop.f32.mrb[0].mxu0
        %v1871 = vadd.f32 %v1788, %v1870
        %v1872 = vpop.f32.mrb[0].mxu0
        %1873 = vmatprep.mubr.f32.mxu0 0.0
        %1874 = vmatmul.mubr.f32.gmra.mrb[0].mxu0 %v1797
        %v1875 = vpop.f32.mrb[0].mxu0
        %v1876 = vadd.f32 %v1788, %v1875
        %v1877 = vpop.f32.mrb[0].mxu0
        %1878 = vdwg.mxu0
        %v1879 = vmul.f32 %v1866, %v1866
        %v1880 = vmul.f32 %v1871, %v1871
        %v1881 = vmul.f32 %v1876, %v1876
        %v1882 = vmul.f32 %v1866, %v1879
        %v1883 = vmul.f32 %v1871, %v1880
        %v1884 = vmul.f32 %v1876, %v1881
        %v1885 = vmul.f32 %v1882, 0.044715
        %v1886 = vmul.f32 %v1883, 0.044715
        %v1887 = vmul.f32 %v1884, 0.044715
        %v1888 = vadd.f32 %v1866, %v1885
        %v1889 = vadd.f32 %v1871, %v1886
        %v1890 = vadd.f32 %v1876, %v1887
        %v1891 = vmul.f32 %v1888, 0.7978846
        %v1892 = vmul.f32 %v1889, 0.7978846
        %v1893 = vmul.f32 %v1890, 0.7978846
        %v1894 = vtanh.pop %v1891
        %v1895 = vtanh.pop %v1892
        %v1896 = vtanh.pop %v1893
        %v1897 = vadd.f32 %v1894, 1.0
        %v1898 = vadd.f32 %v1895, 1.0
        %v1899 = vadd.f32 %v1896, 1.0
        %v1900 = vmul.f32 %v1897, 0.5
        %v1901 = vmul.f32 %v1898, 0.5
        %v1902 = vmul.f32 %v1899, 0.5
        %v1903 = vmul.f32 %v1866, %v1900
        %v1904 = vmul.f32 %v1871, %v1901
        %v1905 = vmul.f32 %v1876, %v1902
        %v1906 = vld [vmem:[%s7] sm:$0xff]
        %v1907 = vld [vmem:[%s7 + $0x8] sm:$0xff]
        %v1908 = vld [vmem:[%s7 + $0x10] sm:$0xff]
        %v1909 = vld [vmem:[%s7 + $0x18] sm:$0xff]
        %v1910 = vld [vmem:[%s7 + $0x20] sm:$0xff]
        %v1911 = vld [vmem:[%s7 + $0x28] sm:$0xff]
        %v1912 = vld [vmem:[%s7 + $0x30] sm:$0xff]
        %v1913 = vld [vmem:[%s7 + $0x38] sm:$0xff]
        %v1914 = vld [vmem:[%s7 + $0x40] sm:$0xff]
        %v1915 = vld [vmem:[%s7 + $0x48] sm:$0xff]
        %v1916 = vld [vmem:[%s7 + $0x50] sm:$0xff]
        %v1917 = vld [vmem:[%s7 + $0x58] sm:$0xff]
        %v1918 = vld [vmem:[%s7 + $0x60] sm:$0xff]
        %v1919 = vld [vmem:[%s7 + $0x68] sm:$0xff]
        %v1920 = vld [vmem:[%s7 + $0x70] sm:$0xff]
        %v1921 = vld [vmem:[%s7 + $0x78] sm:$0xff]
        %v1922 = vlaneseq
        %v1923 = vshrl.u32 %v1922, 7
        %v1924 = vsub.s32 1, %v1923
        %v1925 = vrot.slane %v525, %v1924
        %1926 = vmatprep.subr.mxu0 0.0
        %1927 = vmatpush1.msra.mxu0 %v1906
        %1928 = vmatprep.subr.mxu0 0.0
        %1929 = vmatpush1.msra.mxu0 %v1907
        %1930 = vmatprep.subr.mxu0 0.0
        %1931 = vmatpush1.msra.mxu0 %v1908
        %1932 = vmatprep.subr.mxu0 0.0
        %1933 = vmatpush1.msra.mxu0 %v1909
        %1934 = vmatprep.subr.mxu0 0.0
        %1935 = vmatpush1.msra.mxu0 %v1910
        %1936 = vmatprep.subr.mxu0 0.0
        %1937 = vmatpush1.msra.mxu0 %v1911
        %1938 = vmatprep.subr.mxu0 0.0
        %1939 = vmatpush1.msra.mxu0 %v1912
        %1940 = vmatprep.subr.mxu0 0.0
        %1941 = vmatpush1.msra.mxu0 %v1913
        %1942 = vmatprep.subr.mxu0 0.0
        %1943 = vmatpush1.msra.mxu0 %v1914
        %1944 = vmatprep.subr.mxu0 0.0
        %1945 = vmatpush1.msra.mxu0 %v1915
        %1946 = vmatprep.subr.mxu0 0.0
        %1947 = vmatpush1.msra.mxu0 %v1916
        %1948 = vmatprep.subr.mxu0 0.0
        %1949 = vmatpush1.msra.mxu0 %v1917
        %1950 = vmatprep.subr.mxu0 0.0
        %1951 = vmatpush1.msra.mxu0 %v1918
        %1952 = vmatprep.subr.mxu0 0.0
        %1953 = vmatpush1.msra.mxu0 %v1919
        %1954 = vmatprep.subr.mxu0 0.0
        %1955 = vmatpush1.msra.mxu0 %v1920
        %1956 = vmatprep.subr.mxu0 0.0
        %1957 = vmatpush1.msra.mxu0 %v1921
        %1958 = vmatprep.subr.mxu0 0.0
        %1959 = vmatpush1.msra.mxu0 0.0
        %1960 = vmatprep.subr.mxu0 0.0
        %1961 = vmatpush1.msra.mxu0 0.0
        %1962 = vmatprep.subr.mxu0 0.0
        %1963 = vmatpush1.msra.mxu0 0.0
        %1964 = vmatprep.subr.mxu0 0.0
        %1965 = vmatpush1.msra.mxu0 0.0
        %1966 = vmatprep.subr.mxu0 0.0
        %1967 = vmatpush1.msra.mxu0 0.0
        %1968 = vmatprep.subr.mxu0 0.0
        %1969 = vmatpush1.msra.mxu0 0.0
        %1970 = vmatprep.subr.mxu0 0.0
        %1971 = vmatpush1.msra.mxu0 0.0
        %1972 = vmatprep.subr.mxu0 0.0
        %1973 = vmatpush1.msra.mxu0 0.0
        %1974 = vmatprep.subr.mxu0 0.0
        %1975 = vmatpush1.msra.mxu0 0.0
        %1976 = vmatprep.subr.mxu0 0.0
        %1977 = vmatpush1.msra.mxu0 0.0
        %1978 = vmatprep.subr.mxu0 0.0
        %1979 = vmatpush1.msra.mxu0 0.0
        %1980 = vmatprep.subr.mxu0 0.0
        %1981 = vmatpush1.msra.mxu0 0.0
        %1982 = vmatprep.subr.mxu0 0.0
        %1983 = vmatpush1.msra.mxu0 0.0
        %1984 = vmatprep.subr.mxu0 0.0
        %1985 = vmatpush1.msra.mxu0 0.0
        %1986 = vmatprep.subr.mxu0 0.0
        %1987 = vmatpush1.msra.mxu0 0.0
        %1988 = vmatprep.subr.mxu0 0.0
        %1989 = vmatpush1.msra.mxu0 0.0
        %1990 = vmatprep.mubr.f32.mxu0 0.0
        %1991 = vmatmul.mubr.f32.gmra.mrb[0].mxu0 %v1903
        %v1992 = vpop.f32.mrb[0].mxu0
        %v1993 = vadd.f32 %v1925, %v1992
        %v1994 = vpop.f32.mrb[0].mxu0
        %1995 = vmatprep.mubr.f32.mxu0 0.0
        %1996 = vmatmul.mubr.f32.gmra.mrb[0].mxu0 %v1904
        %v1997 = vpop.f32.mrb[0].mxu0
        %v1998 = vadd.f32 %v1925, %v1997
        %v1999 = vpop.f32.mrb[0].mxu0
        %2000 = vmatprep.mubr.f32.mxu0 0.0
        %2001 = vmatmul.mubr.f32.gmra.mrb[0].mxu0 %v1905
        %v2002 = vpop.f32.mrb[0].mxu0
        %v2003 = vadd.f32 %v1925, %v2002
        %v2004 = vpop.f32.mrb[0].mxu0
        %2005 = vdwg.mxu0
        %v2006 = vadd.f32 %v1993, %v1723
        %v2007 = vadd.f32 %v1998, %v1724
        %v2008 = vadd.f32 %v2003, %v1725
        %s2009 = scalar_lea.vmem %s4, 24
        %v2010 = vld [vmem:[%s2009] sm:$0xff]
        %v2011 = vld [vmem:[%s2009 + $0x8] sm:$0xff]
        %v2012 = vld [vmem:[%s2009 + $0x10] sm:$0x3]
        %v2013 = vsel %vm526, %v2006, 0.0
        %2014 = vadd.xlane.f32.xlu0 %v2013
        %v2015 = vpop.xlane.xlu0 %2014
        %v2016 = vsel %vm526, %v2007, 0.0
        %2017 = vadd.xlane.f32.xlu0 %v2016
        %v2018 = vpop.xlane.xlu0 %2017
        %v2019 = vsel %vm533, %v2008, 0.0
        %2020 = vadd.xlane.f32.xlu0 %v2019
        %v2021 = vpop.xlane.xlu0 %2020
        %v2022 = vmul.f32 %v2015, %v537
        %v2023 = vmul.f32 %v2018, %v537
        %v2024 = vmul.f32 %v2021, %v537
        %v2025 = vsub.f32 %v2006, %v2022
        %v2026 = vsub.f32 %v2007, %v2023
        %v2027 = vsub.f32 %v2008, %v2024
        %v2028 = vmul.f32 %v2025, %v2025
        %v2029 = vmul.f32 %v2026, %v2026
        %v2030 = vmul.f32 %v2027, %v2027
        %v2031 = vsel %vm526, %v2028, 0.0
        %2032 = vadd.xlane.f32.xlu0 %v2031
        %v2033 = vpop.xlane.xlu0 %2032
        %v2034 = vsel %vm526, %v2029, 0.0
        %2035 = vadd.xlane.f32.xlu0 %v2034
        %v2036 = vpop.xlane.xlu0 %2035
        %v2037 = vsel %vm533, %v2030, 0.0
        %2038 = vadd.xlane.f32.xlu0 %v2037
        %v2039 = vpop.xlane.xlu0 %2038
        %v2040 = vmul.f32 %v2033, %v537
        %v2041 = vmul.f32 %v2036, %v537
        %v2042 = vmul.f32 %v2039, %v537
        %v2043 = vadd.f32 %v2040, 1e-05
        %v2044 = vadd.f32 %v2041, 1e-05
        %v2045 = vadd.f32 %v2042, 1e-05
        %v2046 = vrsqrt.pop %v2043
        %v2047 = vrsqrt.pop %v2044
        %v2048 = vrsqrt.pop %v2045
        %v2049 = vmul.f32 %v2025, %v2046
        %v2050 = vmul.f32 %v2026, %v2047
        %v2051 = vmul.f32 %v2027, %v2048
        %v2052 = vlaneseq
        %v2053 = vshrl.u32 %v2052, 7
        %v2054 = vsub.s32 0, %v2053
        %v2055 = vrot.slane %v2010, %v2054
        %v2056 = vmul.f32 %v2049, %v2055
        %v2057 = vmul.f32 %v2050, %v2055
        %v2058 = vmul.f32 %v2051, %v2055
        %v2059 = vlaneseq
        %v2060 = vshrl.u32 %v2059, 7
        %v2061 = vsub.s32 1, %v2060
        %v2062 = vrot.slane %v2010, %v2061
        %v2063 = vadd.f32 %v2056, %v2062
        %v2064 = vadd.f32 %v2057, %v2062
        %v2065 = vadd.f32 %v2058, %v2062
        %s2066 = scalar_lea.vmem %s3, 128
        %v2067 = vld [vmem:[%s2066] sm:$0xff]
        %v2068 = vld [vmem:[%s2066 + $0x8] sm:$0xff]
        %v2069 = vld [vmem:[%s2066 + $0x10] sm:$0xff]
        %v2070 = vld [vmem:[%s2066 + $0x18] sm:$0xff]
        %v2071 = vlaneseq
        %v2072 = vshrl.u32 %v2071, 7
        %v2073 = vsub.s32 2, %v2072
        %v2074 = vrot.slane %v2010, %v2073
        %v2076 = vsel %vm526, %v2063, 0
        %v2079 = vsel %vm526, %v2064, 0
        %v2082 = vsel %vm526, %v2065, 0
        %2084 = vmatprep.subr.mxu0 0.0
        %2085 = vmatpush1.msra.mxu0 %v2067
        %2086 = vmatprep.subr.mxu0 0.0
        %2087 = vmatpush1.msra.mxu0 %v2068
        %2088 = vmatprep.subr.mxu0 0.0
        %2089 = vmatpush1.msra.mxu0 %v2069
        %2090 = vmatprep.subr.mxu0 0.0
        %2091 = vmatpush1.msra.mxu0 %v2070
        %2092 = vmatprep.subr.mxu0 0.0
        %2093 = vmatpush1.msra.mxu0 0.0
        %2094 = vmatprep.subr.mxu0 0.0
        %2095 = vmatpush1.msra.mxu0 0.0
        %2096 = vmatprep.subr.mxu0 0.0
        %2097 = vmatpush1.msra.mxu0 0.0
        %2098 = vmatprep.subr.mxu0 0.0
        %2099 = vmatpush1.msra.mxu0 0.0
        %2100 = vmatprep.subr.mxu0 0.0
        %2101 = vmatpush1.msra.mxu0 0.0
        %2102 = vmatprep.subr.mxu0 0.0
        %2103 = vmatpush1.msra.mxu0 0.0
        %2104 = vmatprep.subr.mxu0 0.0
        %2105 = vmatpush1.msra.mxu0 0.0
        %2106 = vmatprep.subr.mxu0 0.0
        %2107 = vmatpush1.msra.mxu0 0.0
        %2108 = vmatprep.subr.mxu0 0.0
        %2109 = vmatpush1.msra.mxu0 0.0
        %2110 = vmatprep.subr.mxu0 0.0
        %2111 = vmatpush1.msra.mxu0 0.0
        %2112 = vmatprep.subr.mxu0 0.0
        %2113 = vmatpush1.msra.mxu0 0.0
        %2114 = vmatprep.subr.mxu0 0.0
        %2115 = vmatpush1.msra.mxu0 0.0
        %2116 = vmatprep.subr.mxu0 0.0
        %2117 = vmatpush1.msra.mxu0 0.0
        %2118 = vmatprep.subr.mxu0 0.0
        %2119 = vmatpush1.msra.mxu0 0.0
        %2120 = vmatprep.subr.mxu0 0.0
        %2121 = vmatpush1.msra.mxu0 0.0
        %2122 = vmatprep.subr.mxu0 0.0
        %2123 = vmatpush1.msra.mxu0 0.0
        %2124 = vmatprep.subr.mxu0 0.0
        %2125 = vmatpush1.msra.mxu0 0.0
        %2126 = vmatprep.subr.mxu0 0.0
        %2127 = vmatpush1.msra.mxu0 0.0
        %2128 = vmatprep.subr.mxu0 0.0
        %2129 = vmatpush1.msra.mxu0 0.0
        %2130 = vmatprep.subr.mxu0 0.0
        %2131 = vmatpush1.msra.mxu0 0.0
        %2132 = vmatprep.subr.mxu0 0.0
        %2133 = vmatpush1.msra.mxu0 0.0
        %2134 = vmatprep.subr.mxu0 0.0
        %2135 = vmatpush1.msra.mxu0 0.0
        %2136 = vmatprep.subr.mxu0 0.0
        %2137 = vmatpush1.msra.mxu0 0.0
        %2138 = vmatprep.subr.mxu0 0.0
        %2139 = vmatpush1.msra.mxu0 0.0
        %2140 = vmatprep.subr.mxu0 0.0
        %2141 = vmatpush1.msra.mxu0 0.0
        %2142 = vmatprep.subr.mxu0 0.0
        %2143 = vmatpush1.msra.mxu0 0.0
        %2144 = vmatprep.subr.mxu0 0.0
        %2145 = vmatpush1.msra.mxu0 0.0
        %2146 = vmatprep.subr.mxu0 0.0
        %2147 = vmatpush1.msra.mxu0 0.0
        %2148 = vmatprep.mubr.f32.mxu0 0.0
        %2149 = vmatmul.mubr.f32.gmra.mrb[0].mxu0 %v2076
        %v2150 = vpop.f32.mrb[0].mxu0
        %v2151 = vadd.f32 %v2074, %v2150
        %v2152 = vpop.f32.mrb[0].mxu0
        %2153 = vmatprep.mubr.f32.mxu0 0.0
        %2154 = vmatmul.mubr.f32.gmra.mrb[0].mxu0 %v2079
        %v2155 = vpop.f32.mrb[0].mxu0
        %v2156 = vadd.f32 %v2074, %v2155
        %v2157 = vpop.f32.mrb[0].mxu0
        %2158 = vmatprep.mubr.f32.mxu0 0.0
        %2159 = vmatmul.mubr.f32.gmra.mrb[0].mxu0 %v2082
        %v2160 = vpop.f32.mrb[0].mxu0
        %v2161 = vadd.f32 %v2074, %v2160
        %v2162 = vpop.f32.mrb[0].mxu0
        %2163 = vdwg.mxu0
        %s2164 = scalar_lea.vmem %s3, 160
        %v2165 = vld [vmem:[%s2164] sm:$0xff]
        %v2166 = vld [vmem:[%s2164 + $0x8] sm:$0xff]
        %v2167 = vld [vmem:[%s2164 + $0x10] sm:$0xff]
        %v2168 = vld [vmem:[%s2164 + $0x18] sm:$0xff]
        %v2169 = vlaneseq
        %v2170 = vshrl.u32 %v2169, 7
        %v2171 = vsub.s32 3, %v2170
        %v2172 = vrot.slane %v2010, %v2171
        %2173 = vmatprep.subr.mxu0 0.0
        %2174 = vmatpush1.msra.mxu0 %v2165
        %2175 = vmatprep.subr.mxu0 0.0
        %2176 = vmatpush1.msra.mxu0 %v2166
        %2177 = vmatprep.subr.mxu0 0.0
        %2178 = vmatpush1.msra.mxu0 %v2167
        %2179 = vmatprep.subr.mxu0 0.0
        %2180 = vmatpush1.msra.mxu0 %v2168
        %2181 = vmatprep.subr.mxu0 0.0
        %2182 = vmatpush1.msra.mxu0 0.0
        %2183 = vmatprep.subr.mxu0 0.0
        %2184 = vmatpush1.msra.mxu0 0.0
        %2185 = vmatprep.subr.mxu0 0.0
        %2186 = vmatpush1.msra.mxu0 0.0
        %2187 = vmatprep.subr.mxu0 0.0
        %2188 = vmatpush1.msra.mxu0 0.0
        %2189 = vmatprep.subr.mxu0 0.0
        %2190 = vmatpush1.msra.mxu0 0.0
        %2191 = vmatprep.subr.mxu0 0.0
        %2192 = vmatpush1.msra.mxu0 0.0
        %2193 = vmatprep.subr.mxu0 0.0
        %2194 = vmatpush1.msra.mxu0 0.0
        %2195 = vmatprep.subr.mxu0 0.0
        %2196 = vmatpush1.msra.mxu0 0.0
        %2197 = vmatprep.subr.mxu0 0.0
        %2198 = vmatpush1.msra.mxu0 0.0
        %2199 = vmatprep.subr.mxu0 0.0
        %2200 = vmatpush1.msra.mxu0 0.0
        %2201 = vmatprep.subr.mxu0 0.0
        %2202 = vmatpush1.msra.mxu0 0.0
        %2203 = vmatprep.subr.mxu0 0.0
        %2204 = vmatpush1.msra.mxu0 0.0
        %2205 = vmatprep.subr.mxu0 0.0
        %2206 = vmatpush1.msra.mxu0 0.0
        %2207 = vmatprep.subr.mxu0 0.0
        %2208 = vmatpush1.msra.mxu0 0.0
        %2209 = vmatprep.subr.mxu0 0.0
        %2210 = vmatpush1.msra.mxu0 0.0
        %2211 = vmatprep.subr.mxu0 0.0
        %2212 = vmatpush1.msra.mxu0 0.0
        %2213 = vmatprep.subr.mxu0 0.0
        %2214 = vmatpush1.msra.mxu0 0.0
        %2215 = vmatprep.subr.mxu0 0.0
        %2216 = vmatpush1.msra.mxu0 0.0
        %2217 = vmatprep.subr.mxu0 0.0
        %2218 = vmatpush1.msra.mxu0 0.0
        %2219 = vmatprep.subr.mxu0 0.0
        %2220 = vmatpush1.msra.mxu0 0.0
        %2221 = vmatprep.subr.mxu0 0.0
        %2222 = vmatpush1.msra.mxu0 0.0
        %2223 = vmatprep.subr.mxu0 0.0
        %2224 = vmatpush1.msra.mxu0 0.0
        %2225 = vmatprep.subr.mxu0 0.0
        %2226 = vmatpush1.msra.mxu0 0.0
        %2227 = vmatprep.subr.mxu0 0.0
        %2228 = vmatpush1.msra.mxu0 0.0
        %2229 = vmatprep.subr.mxu0 0.0
        %2230 = vmatpush1.msra.mxu0 0.0
        %2231 = vmatprep.subr.mxu0 0.0
        %2232 = vmatpush1.msra.mxu0 0.0
        %2233 = vmatprep.subr.mxu0 0.0
        %2234 = vmatpush1.msra.mxu0 0.0
        %2235 = vmatprep.subr.mxu0 0.0
        %2236 = vmatpush1.msra.mxu0 0.0
        %2237 = vmatprep.mubr.f32.mxu0 0.0
        %2238 = vmatmul.mubr.f32.gmra.mrb[0].mxu0 %v2076
        %v2239 = vpop.f32.mrb[0].mxu0
        %v2240 = vadd.f32 %v2172, %v2239
        %v2241 = vpop.f32.mrb[0].mxu0
        %2242 = vmatprep.mubr.f32.mxu0 0.0
        %2243 = vmatmul.mubr.f32.gmra.mrb[0].mxu0 %v2079
        %v2244 = vpop.f32.mrb[0].mxu0
        %v2245 = vadd.f32 %v2172, %v2244
        %v2246 = vpop.f32.mrb[0].mxu0
        %2247 = vmatprep.mubr.f32.mxu0 0.0
        %2248 = vmatmul.mubr.f32.gmra.mrb[0].mxu0 %v2082
        %v2249 = vpop.f32.mrb[0].mxu0
        %v2250 = vadd.f32 %v2172, %v2249
        %v2251 = vpop.f32.mrb[0].mxu0
        %2252 = vdwg.mxu0
        %s2253 = scalar_lea.vmem %s3, 192
        %v2254 = vld [vmem:[%s2253] sm:$0xff]
        %v2255 = vld [vmem:[%s2253 + $0x8] sm:$0xff]
        %v2256 = vld [vmem:[%s2253 + $0x10] sm:$0xff]
        %v2257 = vld [vmem:[%s2253 + $0x18] sm:$0xff]
        %v2258 = vlaneseq
        %v2259 = vshrl.u32 %v2258, 7
        %v2260 = vsub.s32 4, %v2259
        %v2261 = vrot.slane %v2010, %v2260
        %2262 = vmatprep.subr.mxu0 0.0
        %2263 = vmatpush1.msra.mxu0 %v2254
        %2264 = vmatprep.subr.mxu0 0.0
        %2265 = vmatpush1.msra.mxu0 %v2255
        %2266 = vmatprep.subr.mxu0 0.0
        %2267 = vmatpush1.msra.mxu0 %v2256
        %2268 = vmatprep.subr.mxu0 0.0
        %2269 = vmatpush1.msra.mxu0 %v2257
        %2270 = vmatprep.subr.mxu0 0.0
        %2271 = vmatpush1.msra.mxu0 0.0
        %2272 = vmatprep.subr.mxu0 0.0
        %2273 = vmatpush1.msra.mxu0 0.0
        %2274 = vmatprep.subr.mxu0 0.0
        %2275 = vmatpush1.msra.mxu0 0.0
        %2276 = vmatprep.subr.mxu0 0.0
        %2277 = vmatpush1.msra.mxu0 0.0
        %2278 = vmatprep.subr.mxu0 0.0
        %2279 = vmatpush1.msra.mxu0 0.0
        %2280 = vmatprep.subr.mxu0 0.0
        %2281 = vmatpush1.msra.mxu0 0.0
        %2282 = vmatprep.subr.mxu0 0.0
        %2283 = vmatpush1.msra.mxu0 0.0
        %2284 = vmatprep.subr.mxu0 0.0
        %2285 = vmatpush1.msra.mxu0 0.0
        %2286 = vmatprep.subr.mxu0 0.0
        %2287 = vmatpush1.msra.mxu0 0.0
        %2288 = vmatprep.subr.mxu0 0.0
        %2289 = vmatpush1.msra.mxu0 0.0
        %2290 = vmatprep.subr.mxu0 0.0
        %2291 = vmatpush1.msra.mxu0 0.0
        %2292 = vmatprep.subr.mxu0 0.0
        %2293 = vmatpush1.msra.mxu0 0.0
        %2294 = vmatprep.subr.mxu0 0.0
        %2295 = vmatpush1.msra.mxu0 0.0
        %2296 = vmatprep.subr.mxu0 0.0
        %2297 = vmatpush1.msra.mxu0 0.0
        %2298 = vmatprep.subr.mxu0 0.0
        %2299 = vmatpush1.msra.mxu0 0.0
        %2300 = vmatprep.subr.mxu0 0.0
        %2301 = vmatpush1.msra.mxu0 0.0
        %2302 = vmatprep.subr.mxu0 0.0
        %2303 = vmatpush1.msra.mxu0 0.0
        %2304 = vmatprep.subr.mxu0 0.0
        %2305 = vmatpush1.msra.mxu0 0.0
        %2306 = vmatprep.subr.mxu0 0.0
        %2307 = vmatpush1.msra.mxu0 0.0
        %2308 = vmatprep.subr.mxu0 0.0
        %2309 = vmatpush1.msra.mxu0 0.0
        %2310 = vmatprep.subr.mxu0 0.0
        %2311 = vmatpush1.msra.mxu0 0.0
        %2312 = vmatprep.subr.mxu0 0.0
        %2313 = vmatpush1.msra.mxu0 0.0
        %2314 = vmatprep.subr.mxu0 0.0
        %2315 = vmatpush1.msra.mxu0 0.0
        %2316 = vmatprep.subr.mxu0 0.0
        %2317 = vmatpush1.msra.mxu0 0.0
        %2318 = vmatprep.subr.mxu0 0.0
        %2319 = vmatpush1.msra.mxu0 0.0
        %2320 = vmatprep.subr.mxu0 0.0
        %2321 = vmatpush1.msra.mxu0 0.0
        %2322 = vmatprep.subr.mxu0 0.0
        %2323 = vmatpush1.msra.mxu0 0.0
        %2324 = vmatprep.subr.mxu0 0.0
        %2325 = vmatpush1.msra.mxu0 0.0
        %2326 = vmatprep.mubr.f32.mxu0 0.0
        %2327 = vmatmul.mubr.f32.gmra.mrb[0].mxu0 %v2076
        %v2328 = vpop.f32.mrb[0].mxu0
        %v2329 = vadd.f32 %v2261, %v2328
        %v2330 = vpop.f32.mrb[0].mxu0
        %2331 = vmatprep.mubr.f32.mxu0 0.0
        %2332 = vmatmul.mubr.f32.gmra.mrb[0].mxu0 %v2079
        %v2333 = vpop.f32.mrb[0].mxu0
        %v2334 = vadd.f32 %v2261, %v2333
        %v2335 = vpop.f32.mrb[0].mxu0
        %2336 = vmatprep.mubr.f32.mxu0 0.0
        %2337 = vmatmul.mubr.f32.gmra.mrb[0].mxu0 %v2082
        %v2338 = vpop.f32.mrb[0].mxu0
        %v2339 = vadd.f32 %v2261, %v2338
        %v2340 = vpop.f32.mrb[0].mxu0
        %2341 = vdwg.mxu0
        %v2342 = vmul.f32 %v2151, %v2151
        %v2343 = vmul.f32 %v2156, %v2156
        %v2344 = vmul.f32 %v2161, %v2161
        %v2345 = vsel %vm526, %v2342, 0.0
        %v2346 = vsel %vm526, %v2343, 0.0
        %v2347 = vadd.f32 %v2345, %v2346
        %v2348 = vsel %vm533, %v2344, 0.0
        %v2349 = vadd.f32 %v2347, %v2348
        %v2350 = vrot.slane %v2349, 4
        %v2351 = vadd.f32 %v2349, %v2350
        %v2352 = vrot.slane %v2351, 2
        %v2353 = vadd.f32 %v2351, %v2352
        %v2354 = vrot.slane %v2353, 1
        %v2355 = vadd.f32 %v2353, %v2354
        %v2356 = vmax.f32 %v2355, 1e-24
        %v2357 = vrsqrt.pop %v2356
        %v2358 = vmul.f32 %v2151, %v2357
        %v2359 = vmul.f32 %v2156, %v2357
        %v2360 = vmul.f32 %v2161, %v2357
        %v2361 = vmul.f32 %v2240, %v2240
        %v2362 = vmul.f32 %v2245, %v2245
        %v2363 = vmul.f32 %v2250, %v2250
        %v2364 = vsel %vm526, %v2361, 0.0
        %v2365 = vsel %vm526, %v2362, 0.0
        %v2366 = vadd.f32 %v2364, %v2365
        %v2367 = vsel %vm533, %v2363, 0.0
        %v2368 = vadd.f32 %v2366, %v2367
        %v2369 = vrot.slane %v2368, 4
        %v2370 = vadd.f32 %v2368, %v2369
        %v2371 = vrot.slane %v2370, 2
        %v2372 = vadd.f32 %v2370, %v2371
        %v2373 = vrot.slane %v2372, 1
        %v2374 = vadd.f32 %v2372, %v2373
        %v2375 = vmax.f32 %v2374, 1e-24
        %v2376 = vrsqrt.pop %v2375
        %v2377 = vmul.f32 %v2240, %v2376
        %v2378 = vmul.f32 %v2245, %v2376
        %v2379 = vmul.f32 %v2250, %v2376
        %2380 = vxpose.xlu0.b32.start [1/16] %v2358, 128
        %2381 = vxpose.xlu0.b32.cont [2/16] %v2359, 128
        %2382 = vxpose.xlu0.b32.cont [3/16] %v2360, 128
        %2383 = vxpose.xlu0.b32.cont [4/16] 0.0, 128
        %2384 = vxpose.xlu0.b32.cont [5/16] 0.0, 128
        %2385 = vxpose.xlu0.b32.cont [6/16] 0.0, 128
        %2386 = vxpose.xlu0.b32.cont [7/16] 0.0, 128
        %2387 = vxpose.xlu0.b32.cont [8/16] 0.0, 128
        %2388 = vxpose.xlu0.b32.cont [9/16] 0.0, 128
        %2389 = vxpose.xlu0.b32.cont [10/16] 0.0, 128
        %2390 = vxpose.xlu0.b32.cont [11/16] 0.0, 128
        %2391 = vxpose.xlu0.b32.cont [12/16] 0.0, 128
        %2392 = vxpose.xlu0.b32.cont [13/16] 0.0, 128
        %2393 = vxpose.xlu0.b32.cont [14/16] 0.0, 128
        %2394 = vxpose.xlu0.b32.cont [15/16] 0.0, 128
        %2395 = vxpose.xlu0.b32.end [16/16] 0.0, 128
        %v2396 = vpop.trf.xlu0
        %v2397 = vpop.trf.xlu0
        %v2398 = vpop.trf.xlu0
        %v2399 = vpop.trf.xlu0
        %v2400 = vpop.trf.xlu0
        %v2401 = vpop.trf.xlu0
        %v2402 = vpop.trf.xlu0
        %v2403 = vpop.trf.xlu0
        %v2404 = vpop.trf.xlu0
        %v2405 = vpop.trf.xlu0
        %v2406 = vpop.trf.xlu0
        %v2407 = vpop.trf.xlu0
        %v2408 = vpop.trf.xlu0
        %v2409 = vpop.trf.xlu0
        %v2410 = vpop.trf.xlu0
        %v2411 = vpop.trf.xlu0
        %v2413 = vsel %vm927, %v2396, 0
        %v2416 = vsel %vm927, %v2397, 0
        %v2419 = vsel %vm927, %v2398, 0
        %v2422 = vsel %vm927, %v2399, 0
        %v2425 = vsel %vm940, %v2379, 0
        %2427 = vmatprep.subr.mxu0 0.0
        %2428 = vmatpush1.msra.mxu0 %v2377
        %2429 = vmatprep.subr.mxu0 0.0
        %2430 = vmatpush1.msra.mxu0 %v2378
        %2431 = vmatprep.subr.mxu0 0.0
        %2432 = vmatpush1.msra.mxu0 %v2425
        %2433 = vmatprep.subr.mxu0 0.0
        %2434 = vmatpush1.msra.mxu0 0.0
        %2435 = vmatprep.subr.mxu0 0.0
        %2436 = vmatpush1.msra.mxu0 0.0
        %2437 = vmatprep.subr.mxu0 0.0
        %2438 = vmatpush1.msra.mxu0 0.0
        %2439 = vmatprep.subr.mxu0 0.0
        %2440 = vmatpush1.msra.mxu0 0.0
        %2441 = vmatprep.subr.mxu0 0.0
        %2442 = vmatpush1.msra.mxu0 0.0
        %2443 = vmatprep.subr.mxu0 0.0
        %2444 = vmatpush1.msra.mxu0 0.0
        %2445 = vmatprep.subr.mxu0 0.0
        %2446 = vmatpush1.msra.mxu0 0.0
        %2447 = vmatprep.subr.mxu0 0.0
        %2448 = vmatpush1.msra.mxu0 0.0
        %2449 = vmatprep.subr.mxu0 0.0
        %2450 = vmatpush1.msra.mxu0 0.0
        %2451 = vmatprep.subr.mxu0 0.0
        %2452 = vmatpush1.msra.mxu0 0.0
        %2453 = vmatprep.subr.mxu0 0.0
        %2454 = vmatpush1.msra.mxu0 0.0
        %2455 = vmatprep.subr.mxu0 0.0
        %2456 = vmatpush1.msra.mxu0 0.0
        %2457 = vmatprep.subr.mxu0 0.0
        %2458 = vmatpush1.msra.mxu0 0.0
        %2459 = vmatprep.subr.mxu0 0.0
        %2460 = vmatpush1.msra.mxu0 0.0
        %2461 = vmatprep.subr.mxu0 0.0
        %2462 = vmatpush1.msra.mxu0 0.0
        %2463 = vmatprep.subr.mxu0 0.0
        %2464 = vmatpush1.msra.mxu0 0.0
        %2465 = vmatprep.subr.mxu0 0.0
        %2466 = vmatpush1.msra.mxu0 0.0
        %2467 = vmatprep.subr.mxu0 0.0
        %2468 = vmatpush1.msra.mxu0 0.0
        %2469 = vmatprep.subr.mxu0 0.0
        %2470 = vmatpush1.msra.mxu0 0.0
        %2471 = vmatprep.subr.mxu0 0.0
        %2472 = vmatpush1.msra.mxu0 0.0
        %2473 = vmatprep.subr.mxu0 0.0
        %2474 = vmatpush1.msra.mxu0 0.0
        %2475 = vmatprep.subr.mxu0 0.0
        %2476 = vmatpush1.msra.mxu0 0.0
        %2477 = vmatprep.subr.mxu0 0.0
        %2478 = vmatpush1.msra.mxu0 0.0
        %2479 = vmatprep.subr.mxu0 0.0
        %2480 = vmatpush1.msra.mxu0 0.0
        %2481 = vmatprep.subr.mxu0 0.0
        %2482 = vmatpush1.msra.mxu0 0.0
        %2483 = vmatprep.subr.mxu0 0.0
        %2484 = vmatpush1.msra.mxu0 0.0
        %2485 = vmatprep.subr.mxu0 0.0
        %2486 = vmatpush1.msra.mxu0 0.0
        %2487 = vmatprep.subr.mxu0 0.0
        %2488 = vmatpush1.msra.mxu0 0.0
        %2489 = vmatprep.subr.mxu0 0.0
        %2490 = vmatpush1.msra.mxu0 0.0
        %2491 = vmatprep.mubr.f32.mxu0 0.0
        %2492 = vmatmul.mubr.f32.gmra.mrb[0].mxu0 %v2413
        %v2493 = vpop.f32.mrb[0].mxu0
        %v2494 = vadd.f32 0.0, %v2493
        %v2495 = vpop.f32.mrb[0].mxu0
        %2496 = vmatprep.mubr.f32.mxu0 0.0
        %2497 = vmatmul.mubr.f32.gmra.mrb[0].mxu0 %v2416
        %v2498 = vpop.f32.mrb[0].mxu0
        %v2499 = vadd.f32 0.0, %v2498
        %v2500 = vpop.f32.mrb[0].mxu0
        %2501 = vmatprep.mubr.f32.mxu0 0.0
        %2502 = vmatmul.mubr.f32.gmra.mrb[0].mxu0 %v2419
        %v2503 = vpop.f32.mrb[0].mxu0
        %v2504 = vadd.f32 0.0, %v2503
        %v2505 = vpop.f32.mrb[0].mxu0
        %2506 = vmatprep.mubr.f32.mxu0 0.0
        %2507 = vmatmul.mubr.f32.gmra.mrb[0].mxu0 %v2422
        %v2508 = vpop.f32.mrb[0].mxu0
        %v2509 = vadd.f32 0.0, %v2508
        %v2510 = vpop.f32.mrb[0].mxu0
        %2511 = vdwg.mxu0
        %v2512 = vlaneseq
        %v2513 = vshrl.u32 %v2512, 7
        %v2514 = vsub.s32 5, %v2513
        %v2515 = vrot.slane %v2010, %v2514
        %v2516 = vmul.f32 %v2494, %v2515
        %v2517 = vmul.f32 %v2499, %v2515
        %v2518 = vmul.f32 %v2504, %v2515
        %v2519 = vmul.f32 %v2509, %v2515
        %v2520 = vsel %vm519, %v2516, -inf
        %v2521 = vsel %vm520, %v2517, -inf
        %v2522 = vsel %vm521, %v2518, -inf
        %v2523 = vsel %vm522, %v2519, -inf
        %v2524 = vsel %vm526, %v2520, -inf
        %2525 = vmax.xlane.f32.xlu0 %v2524
        %v2526 = vpop.xlane.xlu0 %2525
        %v2527 = vsel %vm526, %v2521, -inf
        %2528 = vmax.xlane.f32.xlu0 %v2527
        %v2529 = vpop.xlane.xlu0 %2528
        %v2530 = vsel %vm526, %v2522, -inf
        %2531 = vmax.xlane.f32.xlu0 %v2530
        %v2532 = vpop.xlane.xlu0 %2531
        %v2533 = vsel %vm526, %v2523, -inf
        %2534 = vmax.xlane.f32.xlu0 %v2533
        %v2535 = vpop.xlane.xlu0 %2534
        %v2536 = vsub.f32 %v2520, %v2526
        %v2537 = vsub.f32 %v2521, %v2529
        %v2538 = vsub.f32 %v2522, %v2532
        %v2539 = vsub.f32 %v2523, %v2535
        %v2540 = vmul.f32 %v2536, 1.442695
        %v2541 = vpow.pop %v2540
        %v2542 = vmul.f32 %v2537, 1.442695
        %v2543 = vpow.pop %v2542
        %v2544 = vmul.f32 %v2538, 1.442695
        %v2545 = vpow.pop %v2544
        %v2546 = vmul.f32 %v2539, 1.442695
        %v2547 = vpow.pop %v2546
        %v2548 = vsel %vm526, %v2541, 0.0
        %2549 = vadd.xlane.f32.xlu0 %v2548
        %v2550 = vpop.xlane.xlu0 %2549
        %v2551 = vsel %vm526, %v2543, 0.0
        %2552 = vadd.xlane.f32.xlu0 %v2551
        %v2553 = vpop.xlane.xlu0 %2552
        %v2554 = vsel %vm526, %v2545, 0.0
        %2555 = vadd.xlane.f32.xlu0 %v2554
        %v2556 = vpop.xlane.xlu0 %2555
        %v2557 = vsel %vm526, %v2547, 0.0
        %2558 = vadd.xlane.f32.xlu0 %v2557
        %v2559 = vpop.xlane.xlu0 %2558
        %v2560 = vrcp.pop %v2550
        %v2561 = vrcp.pop %v2553
        %v2562 = vrcp.pop %v2556
        %v2563 = vrcp.pop %v2559
        %v2564 = vmul.f32 %v2541, %v2560
        %v2565 = vmul.f32 %v2543, %v2561
        %v2566 = vmul.f32 %v2545, %v2562
        %v2567 = vmul.f32 %v2547, %v2563
        %v2569 = vsel %vm526, %v2329, 0
        %v2572 = vsel %vm526, %v2334, 0
        %v2575 = vsel %vm526, %v2339, 0
        %v2578 = vsel %vm526, %v2564, 0
        %v2581 = vsel %vm526, %v2565, 0
        %v2584 = vsel %vm526, %v2566, 0
        %v2587 = vsel %vm526, %v2567, 0
        %2589 = vmatprep.subr.mxu0 0.0
        %2590 = vmatpush1.xpose.msra.mxu0 %v2578
        %2591 = vmatprep.subr.mxu0 0.0
        %2592 = vmatpush1.xpose.msra.mxu0 %v2581
        %2593 = vmatprep.subr.mxu0 0.0
        %2594 = vmatpush1.xpose.msra.mxu0 %v2584
        %2595 = vmatprep.subr.mxu0 0.0
        %2596 = vmatpush1.xpose.msra.mxu0 %v2587
        %2597 = vmatprep.subr.mxu0 0.0
        %2598 = vmatpush1.xpose.msra.mxu0 0.0
        %2599 = vmatprep.subr.mxu0 0.0
        %2600 = vmatpush1.xpose.msra.mxu0 0.0
        %2601 = vmatprep.subr.mxu0 0.0
        %2602 = vmatpush1.xpose.msra.mxu0 0.0
        %2603 = vmatprep.subr.mxu0 0.0
        %2604 = vmatpush1.xpose.msra.mxu0 0.0
        %2605 = vmatprep.subr.mxu0 0.0
        %2606 = vmatpush1.xpose.msra.mxu0 0.0
        %2607 = vmatprep.subr.mxu0 0.0
        %2608 = vmatpush1.xpose.msra.mxu0 0.0
        %2609 = vmatprep.subr.mxu0 0.0
        %2610 = vmatpush1.xpose.msra.mxu0 0.0
        %2611 = vmatprep.subr.mxu0 0.0
        %2612 = vmatpush1.xpose.msra.mxu0 0.0
        %2613 = vmatprep.subr.mxu0 0.0
        %2614 = vmatpush1.xpose.msra.mxu0 0.0
        %2615 = vmatprep.subr.mxu0 0.0
        %2616 = vmatpush1.xpose.msra.mxu0 0.0
        %2617 = vmatprep.subr.mxu0 0.0
        %2618 = vmatpush1.xpose.msra.mxu0 0.0
        %2619 = vmatprep.subr.mxu0 0.0
        %2620 = vmatpush1.xpose.msra.mxu0 0.0
        %2621 = vmatprep.subr.mxu0 0.0
        %2622 = vmatpush1.xpose.msra.mxu0 0.0
        %2623 = vmatprep.subr.mxu0 0.0
        %2624 = vmatpush1.xpose.msra.mxu0 0.0
        %2625 = vmatprep.subr.mxu0 0.0
        %2626 = vmatpush1.xpose.msra.mxu0 0.0
        %2627 = vmatprep.subr.mxu0 0.0
        %2628 = vmatpush1.xpose.msra.mxu0 0.0
        %2629 = vmatprep.subr.mxu0 0.0
        %2630 = vmatpush1.xpose.msra.mxu0 0.0
        %2631 = vmatprep.subr.mxu0 0.0
        %2632 = vmatpush1.xpose.msra.mxu0 0.0
        %2633 = vmatprep.subr.mxu0 0.0
        %2634 = vmatpush1.xpose.msra.mxu0 0.0
        %2635 = vmatprep.subr.mxu0 0.0
        %2636 = vmatpush1.xpose.msra.mxu0 0.0
        %2637 = vmatprep.subr.mxu0 0.0
        %2638 = vmatpush1.xpose.msra.mxu0 0.0
        %2639 = vmatprep.subr.mxu0 0.0
        %2640 = vmatpush1.xpose.msra.mxu0 0.0
        %2641 = vmatprep.subr.mxu0 0.0
        %2642 = vmatpush1.xpose.msra.mxu0 0.0
        %2643 = vmatprep.subr.mxu0 0.0
        %2644 = vmatpush1.xpose.msra.mxu0 0.0
        %2645 = vmatprep.subr.mxu0 0.0
        %2646 = vmatpush1.xpose.msra.mxu0 0.0
        %2647 = vmatprep.subr.mxu0 0.0
        %2648 = vmatpush1.xpose.msra.mxu0 0.0
        %2649 = vmatprep.subr.mxu0 0.0
        %2650 = vmatpush1.xpose.msra.mxu0 0.0
        %2651 = vmatprep.subr.mxu0 0.0
        %2652 = vmatpush1.xpose.msra.mxu0 0.0
        %2653 = vmatprep.mubr.f32.mxu0 0.0
        %2654 = vmatmul.mubr.f32.gmra.mrb[0].mxu0 %v2569
        %v2655 = vpop.f32.mrb[0].mxu0
        %v2656 = vadd.f32 0.0, %v2655
        %v2657 = vpop.f32.mrb[0].mxu0
        %2658 = vmatprep.mubr.f32.mxu0 0.0
        %2659 = vmatmul.mubr.f32.gmra.mrb[0].mxu0 %v2572
        %v2660 = vpop.f32.mrb[0].mxu0
        %v2661 = vadd.f32 0.0, %v2660
        %v2662 = vpop.f32.mrb[0].mxu0
        %2663 = vmatprep.mubr.f32.mxu0 0.0
        %2664 = vmatmul.mubr.f32.gmra.mrb[0].mxu0 %v2575
        %v2665 = vpop.f32.mrb[0].mxu0
        %v2666 = vadd.f32 0.0, %v2665
        %v2667 = vpop.f32.mrb[0].mxu0
        %2668 = vdwg.mxu0
        %s2669 = scalar_lea.vmem %s3, 224
        %v2670 = vld [vmem:[%s2669] sm:$0xff]
        %v2671 = vld [vmem:[%s2669 + $0x8] sm:$0xff]
        %v2672 = vld [vmem:[%s2669 + $0x10] sm:$0xff]
        %v2673 = vld [vmem:[%s2669 + $0x18] sm:$0xff]
        %v2674 = vlaneseq
        %v2675 = vshrl.u32 %v2674, 7
        %v2676 = vsub.s32 6, %v2675
        %v2677 = vrot.slane %v2010, %v2676
        %v2679 = vsel %vm526, %v2656, 0
        %v2682 = vsel %vm526, %v2661, 0
        %v2685 = vsel %vm526, %v2666, 0
        %2687 = vmatprep.subr.mxu0 0.0
        %2688 = vmatpush1.msra.mxu0 %v2670
        %2689 = vmatprep.subr.mxu0 0.0
        %2690 = vmatpush1.msra.mxu0 %v2671
        %2691 = vmatprep.subr.mxu0 0.0
        %2692 = vmatpush1.msra.mxu0 %v2672
        %2693 = vmatprep.subr.mxu0 0.0
        %2694 = vmatpush1.msra.mxu0 %v2673
        %2695 = vmatprep.subr.mxu0 0.0
        %2696 = vmatpush1.msra.mxu0 0.0
        %2697 = vmatprep.subr.mxu0 0.0
        %2698 = vmatpush1.msra.mxu0 0.0
        %2699 = vmatprep.subr.mxu0 0.0
        %2700 = vmatpush1.msra.mxu0 0.0
        %2701 = vmatprep.subr.mxu0 0.0
        %2702 = vmatpush1.msra.mxu0 0.0
        %2703 = vmatprep.subr.mxu0 0.0
        %2704 = vmatpush1.msra.mxu0 0.0
        %2705 = vmatprep.subr.mxu0 0.0
        %2706 = vmatpush1.msra.mxu0 0.0
        %2707 = vmatprep.subr.mxu0 0.0
        %2708 = vmatpush1.msra.mxu0 0.0
        %2709 = vmatprep.subr.mxu0 0.0
        %2710 = vmatpush1.msra.mxu0 0.0
        %2711 = vmatprep.subr.mxu0 0.0
        %2712 = vmatpush1.msra.mxu0 0.0
        %2713 = vmatprep.subr.mxu0 0.0
        %2714 = vmatpush1.msra.mxu0 0.0
        %2715 = vmatprep.subr.mxu0 0.0
        %2716 = vmatpush1.msra.mxu0 0.0
        %2717 = vmatprep.subr.mxu0 0.0
        %2718 = vmatpush1.msra.mxu0 0.0
        %2719 = vmatprep.subr.mxu0 0.0
        %2720 = vmatpush1.msra.mxu0 0.0
        %2721 = vmatprep.subr.mxu0 0.0
        %2722 = vmatpush1.msra.mxu0 0.0
        %2723 = vmatprep.subr.mxu0 0.0
        %2724 = vmatpush1.msra.mxu0 0.0
        %2725 = vmatprep.subr.mxu0 0.0
        %2726 = vmatpush1.msra.mxu0 0.0
        %2727 = vmatprep.subr.mxu0 0.0
        %2728 = vmatpush1.msra.mxu0 0.0
        %2729 = vmatprep.subr.mxu0 0.0
        %2730 = vmatpush1.msra.mxu0 0.0
        %2731 = vmatprep.subr.mxu0 0.0
        %2732 = vmatpush1.msra.mxu0 0.0
        %2733 = vmatprep.subr.mxu0 0.0
        %2734 = vmatpush1.msra.mxu0 0.0
        %2735 = vmatprep.subr.mxu0 0.0
        %2736 = vmatpush1.msra.mxu0 0.0
        %2737 = vmatprep.subr.mxu0 0.0
        %2738 = vmatpush1.msra.mxu0 0.0
        %2739 = vmatprep.subr.mxu0 0.0
        %2740 = vmatpush1.msra.mxu0 0.0
        %2741 = vmatprep.subr.mxu0 0.0
        %2742 = vmatpush1.msra.mxu0 0.0
        %2743 = vmatprep.subr.mxu0 0.0
        %2744 = vmatpush1.msra.mxu0 0.0
        %2745 = vmatprep.subr.mxu0 0.0
        %2746 = vmatpush1.msra.mxu0 0.0
        %2747 = vmatprep.subr.mxu0 0.0
        %2748 = vmatpush1.msra.mxu0 0.0
        %2749 = vmatprep.subr.mxu0 0.0
        %2750 = vmatpush1.msra.mxu0 0.0
        %2751 = vmatprep.mubr.f32.mxu0 0.0
        %2752 = vmatmul.mubr.f32.gmra.mrb[0].mxu0 %v2679
        %v2753 = vpop.f32.mrb[0].mxu0
        %v2754 = vadd.f32 %v2677, %v2753
        %v2755 = vpop.f32.mrb[0].mxu0
        %2756 = vmatprep.mubr.f32.mxu0 0.0
        %2757 = vmatmul.mubr.f32.gmra.mrb[0].mxu0 %v2682
        %v2758 = vpop.f32.mrb[0].mxu0
        %v2759 = vadd.f32 %v2677, %v2758
        %v2760 = vpop.f32.mrb[0].mxu0
        %2761 = vmatprep.mubr.f32.mxu0 0.0
        %2762 = vmatmul.mubr.f32.gmra.mrb[0].mxu0 %v2685
        %v2763 = vpop.f32.mrb[0].mxu0
        %v2764 = vadd.f32 %v2677, %v2763
        %v2765 = vpop.f32.mrb[0].mxu0
        %2766 = vdwg.mxu0
        %v2768 = vsel %vm940, %v2764, 0
        %2770 = vmatprep.subr.mxu0 0.0
        %2771 = vmatpush1.msra.mxu0 %v2754
        %2772 = vmatprep.subr.mxu0 0.0
        %2773 = vmatpush1.msra.mxu0 %v2759
        %2774 = vmatprep.subr.mxu0 0.0
        %2775 = vmatpush1.msra.mxu0 %v2768
        %2776 = vmatprep.subr.mxu0 0.0
        %2777 = vmatpush1.msra.mxu0 0.0
        %2778 = vmatprep.subr.mxu0 0.0
        %2779 = vmatpush1.msra.mxu0 0.0
        %2780 = vmatprep.subr.mxu0 0.0
        %2781 = vmatpush1.msra.mxu0 0.0
        %2782 = vmatprep.subr.mxu0 0.0
        %2783 = vmatpush1.msra.mxu0 0.0
        %2784 = vmatprep.subr.mxu0 0.0
        %2785 = vmatpush1.msra.mxu0 0.0
        %2786 = vmatprep.subr.mxu0 0.0
        %2787 = vmatpush1.msra.mxu0 0.0
        %2788 = vmatprep.subr.mxu0 0.0
        %2789 = vmatpush1.msra.mxu0 0.0
        %2790 = vmatprep.subr.mxu0 0.0
        %2791 = vmatpush1.msra.mxu0 0.0
        %2792 = vmatprep.subr.mxu0 0.0
        %2793 = vmatpush1.msra.mxu0 0.0
        %2794 = vmatprep.subr.mxu0 0.0
        %2795 = vmatpush1.msra.mxu0 0.0
        %2796 = vmatprep.subr.mxu0 0.0
        %2797 = vmatpush1.msra.mxu0 0.0
        %2798 = vmatprep.subr.mxu0 0.0
        %2799 = vmatpush1.msra.mxu0 0.0
        %2800 = vmatprep.subr.mxu0 0.0
        %2801 = vmatpush1.msra.mxu0 0.0
        %2802 = vmatprep.subr.mxu0 0.0
        %2803 = vmatpush1.msra.mxu0 0.0
        %2804 = vmatprep.subr.mxu0 0.0
        %2805 = vmatpush1.msra.mxu0 0.0
        %2806 = vmatprep.subr.mxu0 0.0
        %2807 = vmatpush1.msra.mxu0 0.0
        %2808 = vmatprep.subr.mxu0 0.0
        %2809 = vmatpush1.msra.mxu0 0.0
        %2810 = vmatprep.subr.mxu0 0.0
        %2811 = vmatpush1.msra.mxu0 0.0
        %2812 = vmatprep.subr.mxu0 0.0
        %2813 = vmatpush1.msra.mxu0 0.0
        %2814 = vmatprep.subr.mxu0 0.0
        %2815 = vmatpush1.msra.mxu0 0.0
        %2816 = vmatprep.subr.mxu0 0.0
        %2817 = vmatpush1.msra.mxu0 0.0
        %2818 = vmatprep.subr.mxu0 0.0
        %2819 = vmatpush1.msra.mxu0 0.0
        %2820 = vmatprep.subr.mxu0 0.0
        %2821 = vmatpush1.msra.mxu0 0.0
        %2822 = vmatprep.subr.mxu0 0.0
        %2823 = vmatpush1.msra.mxu0 0.0
        %2824 = vmatprep.subr.mxu0 0.0
        %2825 = vmatpush1.msra.mxu0 0.0
        %2826 = vmatprep.subr.mxu0 0.0
        %2827 = vmatpush1.msra.mxu0 0.0
        %2828 = vmatprep.subr.mxu0 0.0
        %2829 = vmatpush1.msra.mxu0 0.0
        %2830 = vmatprep.subr.mxu0 0.0
        %2831 = vmatpush1.msra.mxu0 0.0
        %2832 = vmatprep.subr.mxu0 0.0
        %2833 = vmatpush1.msra.mxu0 0.0
        %2834 = vmatprep.mubr.f32.mxu0 0.0
        %2835 = vmatmul.mubr.f32.gmra.mrb[0].mxu0 %v1285
        %v2836 = vpop.f32.mrb[0].mxu0
        %v2837 = vadd.f32 0.0, %v2836
        %v2838 = vpop.f32.mrb[0].mxu0
        %2839 = vmatprep.mubr.f32.mxu0 0.0
        %2840 = vmatmul.mubr.f32.gmra.mrb[0].mxu0 %v1288
        %v2841 = vpop.f32.mrb[0].mxu0
        %v2842 = vadd.f32 0.0, %v2841
        %v2843 = vpop.f32.mrb[0].mxu0
        %2844 = vmatprep.mubr.f32.mxu0 0.0
        %2845 = vmatmul.mubr.f32.gmra.mrb[0].mxu0 %v1291
        %v2846 = vpop.f32.mrb[0].mxu0
        %v2847 = vadd.f32 0.0, %v2846
        %v2848 = vpop.f32.mrb[0].mxu0
        %2849 = vdwg.mxu0
        %2850 = vmatprep.subr.mxu0 0.0
        %2851 = vmatpush1.msra.mxu0 %v2754
        %2852 = vmatprep.subr.mxu0 0.0
        %2853 = vmatpush1.msra.mxu0 %v2759
        %2854 = vmatprep.subr.mxu0 0.0
        %2855 = vmatpush1.msra.mxu0 %v2768
        %2856 = vmatprep.subr.mxu0 0.0
        %2857 = vmatpush1.msra.mxu0 0.0
        %2858 = vmatprep.subr.mxu0 0.0
        %2859 = vmatpush1.msra.mxu0 0.0
        %2860 = vmatprep.subr.mxu0 0.0
        %2861 = vmatpush1.msra.mxu0 0.0
        %2862 = vmatprep.subr.mxu0 0.0
        %2863 = vmatpush1.msra.mxu0 0.0
        %2864 = vmatprep.subr.mxu0 0.0
        %2865 = vmatpush1.msra.mxu0 0.0
        %2866 = vmatprep.subr.mxu0 0.0
        %2867 = vmatpush1.msra.mxu0 0.0
        %2868 = vmatprep.subr.mxu0 0.0
        %2869 = vmatpush1.msra.mxu0 0.0
        %2870 = vmatprep.subr.mxu0 0.0
        %2871 = vmatpush1.msra.mxu0 0.0
        %2872 = vmatprep.subr.mxu0 0.0
        %2873 = vmatpush1.msra.mxu0 0.0
        %2874 = vmatprep.subr.mxu0 0.0
        %2875 = vmatpush1.msra.mxu0 0.0
        %2876 = vmatprep.subr.mxu0 0.0
        %2877 = vmatpush1.msra.mxu0 0.0
        %2878 = vmatprep.subr.mxu0 0.0
        %2879 = vmatpush1.msra.mxu0 0.0
        %2880 = vmatprep.subr.mxu0 0.0
        %2881 = vmatpush1.msra.mxu0 0.0
        %2882 = vmatprep.subr.mxu0 0.0
        %2883 = vmatpush1.msra.mxu0 0.0
        %2884 = vmatprep.subr.mxu0 0.0
        %2885 = vmatpush1.msra.mxu0 0.0
        %2886 = vmatprep.subr.mxu0 0.0
        %2887 = vmatpush1.msra.mxu0 0.0
        %2888 = vmatprep.subr.mxu0 0.0
        %2889 = vmatpush1.msra.mxu0 0.0
        %2890 = vmatprep.subr.mxu0 0.0
        %2891 = vmatpush1.msra.mxu0 0.0
        %2892 = vmatprep.subr.mxu0 0.0
        %2893 = vmatpush1.msra.mxu0 0.0
        %2894 = vmatprep.subr.mxu0 0.0
        %2895 = vmatpush1.msra.mxu0 0.0
        %2896 = vmatprep.subr.mxu0 0.0
        %2897 = vmatpush1.msra.mxu0 0.0
        %2898 = vmatprep.subr.mxu0 0.0
        %2899 = vmatpush1.msra.mxu0 0.0
        %2900 = vmatprep.subr.mxu0 0.0
        %2901 = vmatpush1.msra.mxu0 0.0
        %2902 = vmatprep.subr.mxu0 0.0
        %2903 = vmatpush1.msra.mxu0 0.0
        %2904 = vmatprep.subr.mxu0 0.0
        %2905 = vmatpush1.msra.mxu0 0.0
        %2906 = vmatprep.subr.mxu0 0.0
        %2907 = vmatpush1.msra.mxu0 0.0
        %2908 = vmatprep.subr.mxu0 0.0
        %2909 = vmatpush1.msra.mxu0 0.0
        %2910 = vmatprep.subr.mxu0 0.0
        %2911 = vmatpush1.msra.mxu0 0.0
        %2912 = vmatprep.subr.mxu0 0.0
        %2913 = vmatpush1.msra.mxu0 0.0
        %2914 = vmatprep.mubr.f32.mxu0 0.0
        %2915 = vmatmul.mubr.f32.gmra.mrb[0].mxu0 %v1377
        %v2916 = vpop.f32.mrb[0].mxu0
        %v2917 = vadd.f32 0.0, %v2916
        %v2918 = vpop.f32.mrb[0].mxu0
        %2919 = vmatprep.mubr.f32.mxu0 0.0
        %2920 = vmatmul.mubr.f32.gmra.mrb[0].mxu0 %v1380
        %v2921 = vpop.f32.mrb[0].mxu0
        %v2922 = vadd.f32 0.0, %v2921
        %v2923 = vpop.f32.mrb[0].mxu0
        %2924 = vmatprep.mubr.f32.mxu0 0.0
        %2925 = vmatmul.mubr.f32.gmra.mrb[0].mxu0 %v1383
        %v2926 = vpop.f32.mrb[0].mxu0
        %v2927 = vadd.f32 0.0, %v2926
        %v2928 = vpop.f32.mrb[0].mxu0
        %2929 = vdwg.mxu0
        %v2930 = vlaneseq
        %v2931 = vshrl.u32 %v2930, 7
        %v2932 = vsub.s32 7, %v2931
        %v2933 = vrot.slane %v2010, %v2932
        %v2934 = vmul.f32 %v2933, %v2837
        %v2935 = vmul.f32 %v2933, %v2842
        %v2936 = vmul.f32 %v2933, %v2847
        %v2937 = vlaneseq
        %v2938 = vshrl.u32 %v2937, 7
        %v2939 = vsub.s32 0, %v2938
        %v2940 = vrot.slane %v2011, %v2939
        %v2941 = vmul.f32 %v2940, %v2754
        %v2942 = vmul.f32 %v2940, %v2759
        %v2943 = vmul.f32 %v2940, %v2764
        %v2944 = vadd.f32 %v2934, %v2941
        %v2945 = vadd.f32 %v2935, %v2942
        %v2946 = vadd.f32 %v2936, %v2943
        %v2947 = vlaneseq
        %v2948 = vshrl.u32 %v2947, 7
        %v2949 = vsub.s32 1, %v2948
        %v2950 = vrot.slane %v2011, %v2949
        %v2951 = vmul.f32 %v2950, %v2917
        %v2952 = vmul.f32 %v2950, %v2922
        %v2953 = vmul.f32 %v2950, %v2927
        %v2954 = vadd.f32 %v2944, %v2951
        %v2955 = vadd.f32 %v2945, %v2952
        %v2956 = vadd.f32 %v2946, %v2953
        %v2957 = vlaneseq
        %v2958 = vshrl.u32 %v2957, 7
        %v2959 = vsub.s32 2, %v2958
        %v2960 = vrot.slane %v2011, %v2959
        %v2961 = vadd.f32 %v2954, %v2960
        %v2962 = vadd.f32 %v2955, %v2960
        %v2963 = vadd.f32 %v2956, %v2960
        %v2964 = vmul.f32 %v2961, %v2961
        %v2965 = vmul.f32 %v2962, %v2962
        %v2966 = vmul.f32 %v2963, %v2963
        %v2967 = vmul.f32 %v2961, %v2964
        %v2968 = vmul.f32 %v2962, %v2965
        %v2969 = vmul.f32 %v2963, %v2966
        %v2970 = vmul.f32 %v2967, 0.044715
        %v2971 = vmul.f32 %v2968, 0.044715
        %v2972 = vmul.f32 %v2969, 0.044715
        %v2973 = vadd.f32 %v2961, %v2970
        %v2974 = vadd.f32 %v2962, %v2971
        %v2975 = vadd.f32 %v2963, %v2972
        %v2976 = vmul.f32 %v2973, 0.7978846
        %v2977 = vmul.f32 %v2974, 0.7978846
        %v2978 = vmul.f32 %v2975, 0.7978846
        %v2979 = vtanh.pop %v2976
        %v2980 = vtanh.pop %v2977
        %v2981 = vtanh.pop %v2978
        %v2982 = vadd.f32 %v2979, 1.0
        %v2983 = vadd.f32 %v2980, 1.0
        %v2984 = vadd.f32 %v2981, 1.0
        %v2985 = vmul.f32 %v2982, 0.5
        %v2986 = vmul.f32 %v2983, 0.5
        %v2987 = vmul.f32 %v2984, 0.5
        %v2988 = vmul.f32 %v2961, %v2985
        %v2989 = vmul.f32 %v2962, %v2986
        %v2990 = vmul.f32 %v2963, %v2987
        %v2992 = vsel %vm940, %v2990, 0
        %2994 = vmatprep.subr.mxu0 0.0
        %2995 = vmatpush1.msra.mxu0 %v2988
        %2996 = vmatprep.subr.mxu0 0.0
        %2997 = vmatpush1.msra.mxu0 %v2989
        %2998 = vmatprep.subr.mxu0 0.0
        %2999 = vmatpush1.msra.mxu0 %v2992
        %3000 = vmatprep.subr.mxu0 0.0
        %3001 = vmatpush1.msra.mxu0 0.0
        %3002 = vmatprep.subr.mxu0 0.0
        %3003 = vmatpush1.msra.mxu0 0.0
        %3004 = vmatprep.subr.mxu0 0.0
        %3005 = vmatpush1.msra.mxu0 0.0
        %3006 = vmatprep.subr.mxu0 0.0
        %3007 = vmatpush1.msra.mxu0 0.0
        %3008 = vmatprep.subr.mxu0 0.0
        %3009 = vmatpush1.msra.mxu0 0.0
        %3010 = vmatprep.subr.mxu0 0.0
        %3011 = vmatpush1.msra.mxu0 0.0
        %3012 = vmatprep.subr.mxu0 0.0
        %3013 = vmatpush1.msra.mxu0 0.0
        %3014 = vmatprep.subr.mxu0 0.0
        %3015 = vmatpush1.msra.mxu0 0.0
        %3016 = vmatprep.subr.mxu0 0.0
        %3017 = vmatpush1.msra.mxu0 0.0
        %3018 = vmatprep.subr.mxu0 0.0
        %3019 = vmatpush1.msra.mxu0 0.0
        %3020 = vmatprep.subr.mxu0 0.0
        %3021 = vmatpush1.msra.mxu0 0.0
        %3022 = vmatprep.subr.mxu0 0.0
        %3023 = vmatpush1.msra.mxu0 0.0
        %3024 = vmatprep.subr.mxu0 0.0
        %3025 = vmatpush1.msra.mxu0 0.0
        %3026 = vmatprep.subr.mxu0 0.0
        %3027 = vmatpush1.msra.mxu0 0.0
        %3028 = vmatprep.subr.mxu0 0.0
        %3029 = vmatpush1.msra.mxu0 0.0
        %3030 = vmatprep.subr.mxu0 0.0
        %3031 = vmatpush1.msra.mxu0 0.0
        %3032 = vmatprep.subr.mxu0 0.0
        %3033 = vmatpush1.msra.mxu0 0.0
        %3034 = vmatprep.subr.mxu0 0.0
        %3035 = vmatpush1.msra.mxu0 0.0
        %3036 = vmatprep.subr.mxu0 0.0
        %3037 = vmatpush1.msra.mxu0 0.0
        %3038 = vmatprep.subr.mxu0 0.0
        %3039 = vmatpush1.msra.mxu0 0.0
        %3040 = vmatprep.subr.mxu0 0.0
        %3041 = vmatpush1.msra.mxu0 0.0
        %3042 = vmatprep.subr.mxu0 0.0
        %3043 = vmatpush1.msra.mxu0 0.0
        %3044 = vmatprep.subr.mxu0 0.0
        %3045 = vmatpush1.msra.mxu0 0.0
        %3046 = vmatprep.subr.mxu0 0.0
        %3047 = vmatpush1.msra.mxu0 0.0
        %3048 = vmatprep.subr.mxu0 0.0
        %3049 = vmatpush1.msra.mxu0 0.0
        %3050 = vmatprep.subr.mxu0 0.0
        %3051 = vmatpush1.msra.mxu0 0.0
        %3052 = vmatprep.subr.mxu0 0.0
        %3053 = vmatpush1.msra.mxu0 0.0
        %3054 = vmatprep.subr.mxu0 0.0
        %3055 = vmatpush1.msra.mxu0 0.0
        %3056 = vmatprep.subr.mxu0 0.0
        %3057 = vmatpush1.msra.mxu0 0.0
        %3058 = vmatprep.mubr.f32.mxu0 0.0
        %3059 = vmatmul.mubr.f32.gmra.mrb[0].mxu0 %v1285
        %v3060 = vpop.f32.mrb[0].mxu0
        %v3061 = vadd.f32 0.0, %v3060
        %v3062 = vpop.f32.mrb[0].mxu0
        %3063 = vmatprep.mubr.f32.mxu0 0.0
        %3064 = vmatmul.mubr.f32.gmra.mrb[0].mxu0 %v1288
        %v3065 = vpop.f32.mrb[0].mxu0
        %v3066 = vpop.f32.mrb[0].mxu0
        %3067 = vmatprep.mubr.f32.mxu0 0.0
        %3068 = vmatmul.mubr.f32.gmra.mrb[0].mxu0 %v1291
        %v3069 = vpop.f32.mrb[0].mxu0
        %v3070 = vpop.f32.mrb[0].mxu0
        %3071 = vdwg.mxu0
        %3072 = vmatprep.subr.mxu0 0.0
        %3073 = vmatpush1.msra.mxu0 %v2988
        %3074 = vmatprep.subr.mxu0 0.0
        %3075 = vmatpush1.msra.mxu0 %v2989
        %3076 = vmatprep.subr.mxu0 0.0
        %3077 = vmatpush1.msra.mxu0 %v2992
        %3078 = vmatprep.subr.mxu0 0.0
        %3079 = vmatpush1.msra.mxu0 0.0
        %3080 = vmatprep.subr.mxu0 0.0
        %3081 = vmatpush1.msra.mxu0 0.0
        %3082 = vmatprep.subr.mxu0 0.0
        %3083 = vmatpush1.msra.mxu0 0.0
        %3084 = vmatprep.subr.mxu0 0.0
        %3085 = vmatpush1.msra.mxu0 0.0
        %3086 = vmatprep.subr.mxu0 0.0
        %3087 = vmatpush1.msra.mxu0 0.0
        %3088 = vmatprep.subr.mxu0 0.0
        %3089 = vmatpush1.msra.mxu0 0.0
        %3090 = vmatprep.subr.mxu0 0.0
        %3091 = vmatpush1.msra.mxu0 0.0
        %3092 = vmatprep.subr.mxu0 0.0
        %3093 = vmatpush1.msra.mxu0 0.0
        %3094 = vmatprep.subr.mxu0 0.0
        %3095 = vmatpush1.msra.mxu0 0.0
        %3096 = vmatprep.subr.mxu0 0.0
        %3097 = vmatpush1.msra.mxu0 0.0
        %3098 = vmatprep.subr.mxu0 0.0
        %3099 = vmatpush1.msra.mxu0 0.0
        %3100 = vmatprep.subr.mxu0 0.0
        %3101 = vmatpush1.msra.mxu0 0.0
        %3102 = vmatprep.subr.mxu0 0.0
        %3103 = vmatpush1.msra.mxu0 0.0
        %3104 = vmatprep.subr.mxu0 0.0
        %3105 = vmatpush1.msra.mxu0 0.0
        %3106 = vmatprep.subr.mxu0 0.0
        %3107 = vmatpush1.msra.mxu0 0.0
        %3108 = vmatprep.subr.mxu0 0.0
        %3109 = vmatpush1.msra.mxu0 0.0
        %3110 = vmatprep.subr.mxu0 0.0
        %3111 = vmatpush1.msra.mxu0 0.0
        %3112 = vmatprep.subr.mxu0 0.0
        %3113 = vmatpush1.msra.mxu0 0.0
        %3114 = vmatprep.subr.mxu0 0.0
        %3115 = vmatpush1.msra.mxu0 0.0
        %3116 = vmatprep.subr.mxu0 0.0
        %3117 = vmatpush1.msra.mxu0 0.0
        %3118 = vmatprep.subr.mxu0 0.0
        %3119 = vmatpush1.msra.mxu0 0.0
        %3120 = vmatprep.subr.mxu0 0.0
        %3121 = vmatpush1.msra.mxu0 0.0
        %3122 = vmatprep.subr.mxu0 0.0
        %3123 = vmatpush1.msra.mxu0 0.0
        %3124 = vmatprep.subr.mxu0 0.0
        %3125 = vmatpush1.msra.mxu0 0.0
        %3126 = vmatprep.subr.mxu0 0.0
        %3127 = vmatpush1.msra.mxu0 0.0
        %3128 = vmatprep.subr.mxu0 0.0
        %3129 = vmatpush1.msra.mxu0 0.0
        %3130 = vmatprep.subr.mxu0 0.0
        %3131 = vmatpush1.msra.mxu0 0.0
        %3132 = vmatprep.subr.mxu0 0.0
        %3133 = vmatpush1.msra.mxu0 0.0
        %3134 = vmatprep.subr.mxu0 0.0
        %3135 = vmatpush1.msra.mxu0 0.0
        %3136 = vmatprep.mubr.f32.mxu0 0.0
        %3137 = vmatmul.mubr.f32.gmra.mrb[0].mxu0 %v1377
        %v3138 = vpop.f32.mrb[0].mxu0
        %v3139 = vadd.f32 0.0, %v3138
        %v3140 = vpop.f32.mrb[0].mxu0
        %3141 = vmatprep.mubr.f32.mxu0 0.0
        %3142 = vmatmul.mubr.f32.gmra.mrb[0].mxu0 %v1380
        %v3143 = vpop.f32.mrb[0].mxu0
        %v3144 = vpop.f32.mrb[0].mxu0
        %3145 = vmatprep.mubr.f32.mxu0 0.0
        %3146 = vmatmul.mubr.f32.gmra.mrb[0].mxu0 %v1383
        %v3147 = vpop.f32.mrb[0].mxu0
        %v3148 = vpop.f32.mrb[0].mxu0
        %3149 = vdwg.mxu0
        %v3150 = vlaneseq
        %v3151 = vshrl.u32 %v3150, 7
        %v3152 = vsub.s32 3, %v3151
        %v3153 = vrot.slane %v2011, %v3152
        %v3154 = vmul.f32 %v3153, %v3061
        %v3155 = vlaneseq
        %v3156 = vshrl.u32 %v3155, 7
        %v3157 = vsub.s32 4, %v3156
        %v3158 = vrot.slane %v2011, %v3157
        %v3159 = vmul.f32 %v3158, %v2988
        %v3160 = vadd.f32 %v3154, %v3159
        %v3161 = vlaneseq
        %v3162 = vshrl.u32 %v3161, 7
        %v3163 = vsub.s32 5, %v3162
        %v3164 = vrot.slane %v2011, %v3163
        %v3165 = vmul.f32 %v3164, %v3139
        %v3166 = vadd.f32 %v3160, %v3165
        %v3167 = vlaneseq
        %v3168 = vshrl.u32 %v3167, 7
        %v3169 = vsub.s32 6, %v3168
        %v3170 = vrot.slane %v2011, %v3169
        %v3171 = vadd.f32 %v3166, %v3170
        %v3172 = vadd.f32 %v3171, %v2006
        %v3173 = vsel %vm533, %v3172, 0.0
        %3174 = vadd.xlane.f32.xlu0 %v3173
        %v3175 = vpop.xlane.xlu0 %3174
        %v3176 = vmul.f32 %v3175, %v537
        %v3177 = vsub.f32 %v3172, %v3176
        %v3178 = vmul.f32 %v3177, %v3177
        %v3179 = vsel %vm533, %v3178, 0.0
        %3180 = vadd.xlane.f32.xlu0 %v3179
        %v3181 = vpop.xlane.xlu0 %3180
        %v3182 = vmul.f32 %v3181, %v537
        %v3183 = vadd.f32 %v3182, 1e-05
        %v3184 = vrsqrt.pop %v3183
        %v3185 = vmul.f32 %v3177, %v3184
        %v3187 = vrot.slane %v2011, 7
        %v3189 = vmul.f32 %v3185, %v3187
        %v3190 = vadd.f32 %v3189, %v2012
        %s3191 = scalar_lea.vmem %s5, 32
        %v3192 = vld [vmem:[%s3191] sm:$0xff]
        %v3193 = vld [vmem:[%s3191 + $0x8] sm:$0xff]
        %v3194 = vld [vmem:[%s3191 + $0x10] sm:$0xff]
        %v3195 = vld [vmem:[%s3191 + $0x18] sm:$0xff]
        %s3196 = scalar_lea.vmem %s6, 1
        %v3197 = vld [vmem:[%s3196] sm:$0x1]
        %v3199 = vsel %vm526, %v3190, 0
        %3201 = vmatprep.subr.mxu0 0.0
        %3202 = vmatpush1.msra.mxu0 %v3192
        %3203 = vmatprep.subr.mxu0 0.0
        %3204 = vmatpush1.msra.mxu0 %v3193
        %3205 = vmatprep.subr.mxu0 0.0
        %3206 = vmatpush1.msra.mxu0 %v3194
        %3207 = vmatprep.subr.mxu0 0.0
        %3208 = vmatpush1.msra.mxu0 %v3195
        %3209 = vmatprep.subr.mxu0 0.0
        %3210 = vmatpush1.msra.mxu0 0.0
        %3211 = vmatprep.subr.mxu0 0.0
        %3212 = vmatpush1.msra.mxu0 0.0
        %3213 = vmatprep.subr.mxu0 0.0
        %3214 = vmatpush1.msra.mxu0 0.0
        %3215 = vmatprep.subr.mxu0 0.0
        %3216 = vmatpush1.msra.mxu0 0.0
        %3217 = vmatprep.subr.mxu0 0.0
        %3218 = vmatpush1.msra.mxu0 0.0
        %3219 = vmatprep.subr.mxu0 0.0
        %3220 = vmatpush1.msra.mxu0 0.0
        %3221 = vmatprep.subr.mxu0 0.0
        %3222 = vmatpush1.msra.mxu0 0.0
        %3223 = vmatprep.subr.mxu0 0.0
        %3224 = vmatpush1.msra.mxu0 0.0
        %3225 = vmatprep.subr.mxu0 0.0
        %3226 = vmatpush1.msra.mxu0 0.0
        %3227 = vmatprep.subr.mxu0 0.0
        %3228 = vmatpush1.msra.mxu0 0.0
        %3229 = vmatprep.subr.mxu0 0.0
        %3230 = vmatpush1.msra.mxu0 0.0
        %3231 = vmatprep.subr.mxu0 0.0
        %3232 = vmatpush1.msra.mxu0 0.0
        %3233 = vmatprep.subr.mxu0 0.0
        %3234 = vmatpush1.msra.mxu0 0.0
        %3235 = vmatprep.subr.mxu0 0.0
        %3236 = vmatpush1.msra.mxu0 0.0
        %3237 = vmatprep.subr.mxu0 0.0
        %3238 = vmatpush1.msra.mxu0 0.0
        %3239 = vmatprep.subr.mxu0 0.0
        %3240 = vmatpush1.msra.mxu0 0.0
        %3241 = vmatprep.subr.mxu0 0.0
        %3242 = vmatpush1.msra.mxu0 0.0
        %3243 = vmatprep.subr.mxu0 0.0
        %3244 = vmatpush1.msra.mxu0 0.0
        %3245 = vmatprep.subr.mxu0 0.0
        %3246 = vmatpush1.msra.mxu0 0.0
        %3247 = vmatprep.subr.mxu0 0.0
        %3248 = vmatpush1.msra.mxu0 0.0
        %3249 = vmatprep.subr.mxu0 0.0
        %3250 = vmatpush1.msra.mxu0 0.0
        %3251 = vmatprep.subr.mxu0 0.0
        %3252 = vmatpush1.msra.mxu0 0.0
        %3253 = vmatprep.subr.mxu0 0.0
        %3254 = vmatpush1.msra.mxu0 0.0
        %3255 = vmatprep.subr.mxu0 0.0
        %3256 = vmatpush1.msra.mxu0 0.0
        %3257 = vmatprep.subr.mxu0 0.0
        %3258 = vmatpush1.msra.mxu0 0.0
        %3259 = vmatprep.subr.mxu0 0.0
        %3260 = vmatpush1.msra.mxu0 0.0
        %3261 = vmatprep.subr.mxu0 0.0
        %3262 = vmatpush1.msra.mxu0 0.0
        %3263 = vmatprep.subr.mxu0 0.0
        %3264 = vmatpush1.msra.mxu0 0.0
        %3265 = vmatprep.mubr.f32.mxu0 0.0
        %3266 = vmatmul.mubr.f32.gmra.mrb[0].mxu0 %v3199
        %v3267 = vpop.f32.mrb[0].mxu0
        %v3268 = vadd.f32 %v3197, %v3267
        %v3269 = vpop.f32.mrb[0].mxu0
        %3270 = vdwg.mxu0
        %v3271 = vmul.f32 %v3268, %v3268
        %v3272 = vmul.f32 %v3268, %v3271
        %v3273 = vmul.f32 %v3272, 0.044715
        %v3274 = vadd.f32 %v3268, %v3273
        %v3275 = vmul.f32 %v3274, 0.7978846
        %v3276 = vtanh.pop %v3275
        %v3277 = vadd.f32 %v3276, 1.0
        %v3278 = vmul.f32 %v3277, 0.5
        %v3279 = vmul.f32 %v3268, %v3278
        %s3280 = scalar_lea.vmem %s7, 128
        %v3281 = vld [vmem:[%s3280] sm:$0xff]
        %v3282 = vld [vmem:[%s3280 + $0x8] sm:$0xff]
        %v3283 = vld [vmem:[%s3280 + $0x10] sm:$0xff]
        %v3284 = vld [vmem:[%s3280 + $0x18] sm:$0xff]
        %v3285 = vld [vmem:[%s3280 + $0x20] sm:$0xff]
        %v3286 = vld [vmem:[%s3280 + $0x28] sm:$0xff]
        %v3287 = vld [vmem:[%s3280 + $0x30] sm:$0xff]
        %v3288 = vld [vmem:[%s3280 + $0x38] sm:$0xff]
        %v3289 = vld [vmem:[%s3280 + $0x40] sm:$0xff]
        %v3290 = vld [vmem:[%s3280 + $0x48] sm:$0xff]
        %v3291 = vld [vmem:[%s3280 + $0x50] sm:$0xff]
        %v3292 = vld [vmem:[%s3280 + $0x58] sm:$0xff]
        %v3293 = vld [vmem:[%s3280 + $0x60] sm:$0xff]
        %v3294 = vld [vmem:[%s3280 + $0x68] sm:$0xff]
        %v3295 = vld [vmem:[%s3280 + $0x70] sm:$0xff]
        %v3296 = vld [vmem:[%s3280 + $0x78] sm:$0xff]
        %v3298 = vrot.slane %v2012, 1
        %3300 = vmatprep.subr.mxu0 0.0
        %3301 = vmatpush1.msra.mxu0 %v3281
        %3302 = vmatprep.subr.mxu0 0.0
        %3303 = vmatpush1.msra.mxu0 %v3282
        %3304 = vmatprep.subr.mxu0 0.0
        %3305 = vmatpush1.msra.mxu0 %v3283
        %3306 = vmatprep.subr.mxu0 0.0
        %3307 = vmatpush1.msra.mxu0 %v3284
        %3308 = vmatprep.subr.mxu0 0.0
        %3309 = vmatpush1.msra.mxu0 %v3285
        %3310 = vmatprep.subr.mxu0 0.0
        %3311 = vmatpush1.msra.mxu0 %v3286
        %3312 = vmatprep.subr.mxu0 0.0
        %3313 = vmatpush1.msra.mxu0 %v3287
        %3314 = vmatprep.subr.mxu0 0.0
        %3315 = vmatpush1.msra.mxu0 %v3288
        %3316 = vmatprep.subr.mxu0 0.0
        %3317 = vmatpush1.msra.mxu0 %v3289
        %3318 = vmatprep.subr.mxu0 0.0
        %3319 = vmatpush1.msra.mxu0 %v3290
        %3320 = vmatprep.subr.mxu0 0.0
        %3321 = vmatpush1.msra.mxu0 %v3291
        %3322 = vmatprep.subr.mxu0 0.0
        %3323 = vmatpush1.msra.mxu0 %v3292
        %3324 = vmatprep.subr.mxu0 0.0
        %3325 = vmatpush1.msra.mxu0 %v3293
        %3326 = vmatprep.subr.mxu0 0.0
        %3327 = vmatpush1.msra.mxu0 %v3294
        %3328 = vmatprep.subr.mxu0 0.0
        %3329 = vmatpush1.msra.mxu0 %v3295
        %3330 = vmatprep.subr.mxu0 0.0
        %3331 = vmatpush1.msra.mxu0 %v3296
        %3332 = vmatprep.subr.mxu0 0.0
        %3333 = vmatpush1.msra.mxu0 0.0
        %3334 = vmatprep.subr.mxu0 0.0
        %3335 = vmatpush1.msra.mxu0 0.0
        %3336 = vmatprep.subr.mxu0 0.0
        %3337 = vmatpush1.msra.mxu0 0.0
        %3338 = vmatprep.subr.mxu0 0.0
        %3339 = vmatpush1.msra.mxu0 0.0
        %3340 = vmatprep.subr.mxu0 0.0
        %3341 = vmatpush1.msra.mxu0 0.0
        %3342 = vmatprep.subr.mxu0 0.0
        %3343 = vmatpush1.msra.mxu0 0.0
        %3344 = vmatprep.subr.mxu0 0.0
        %3345 = vmatpush1.msra.mxu0 0.0
        %3346 = vmatprep.subr.mxu0 0.0
        %3347 = vmatpush1.msra.mxu0 0.0
        %3348 = vmatprep.subr.mxu0 0.0
        %3349 = vmatpush1.msra.mxu0 0.0
        %3350 = vmatprep.subr.mxu0 0.0
        %3351 = vmatpush1.msra.mxu0 0.0
        %3352 = vmatprep.subr.mxu0 0.0
        %3353 = vmatpush1.msra.mxu0 0.0
        %3354 = vmatprep.subr.mxu0 0.0
        %3355 = vmatpush1.msra.mxu0 0.0
        %3356 = vmatprep.subr.mxu0 0.0
        %3357 = vmatpush1.msra.mxu0 0.0
        %3358 = vmatprep.subr.mxu0 0.0
        %3359 = vmatpush1.msra.mxu0 0.0
        %3360 = vmatprep.subr.mxu0 0.0
        %3361 = vmatpush1.msra.mxu0 0.0
        %3362 = vmatprep.subr.mxu0 0.0
        %3363 = vmatpush1.msra.mxu0 0.0
        %3364 = vmatprep.mubr.f32.mxu0 0.0
        %3365 = vmatmul.mubr.f32.gmra.mrb[0].mxu0 %v3279
        %v3366 = vpop.f32.mrb[0].mxu0
        %v3367 = vadd.f32 %v3298, %v3366
        %v3368 = vpop.f32.mrb[0].mxu0
        %3369 = vdwg.mxu0
        %v3370 = vadd.f32 %v3367, %v3172
        %v3371 = vld [vmem:[%s8] sm:$0x1]
        %v3372 = vld [vmem:[%s8 + $0x1] sm:$0x1]
        %v3373 = vsel %vm533, %v3370, 0.0
        %3374 = vadd.xlane.f32.xlu0 %v3373
        %v3375 = vpop.xlane.xlu0 %3374
        %v3376 = vmul.f32 %v3375, %v537
        %v3377 = vsub.f32 %v3370, %v3376
        %v3378 = vmul.f32 %v3377, %v3377
        %v3379 = vsel %vm533, %v3378, 0.0
        %3380 = vadd.xlane.f32.xlu0 %v3379
        %v3381 = vpop.xlane.xlu0 %3380
        %v3382 = vmul.f32 %v3381, %v537
        %v3383 = vadd.f32 %v3382, 1e-05
        %v3384 = vrsqrt.pop %v3383
        %v3385 = vmul.f32 %v3377, %v3384
        %v3386 = vmul.f32 %v3385, %v3371
        %v3387 = vadd.f32 %v3386, %v3372
        %v3388 = vld [vmem:[%s9] sm:$0xff]
        %v3389 = vld [vmem:[%s9 + $0x8] sm:$0xff]
        %v3390 = vld [vmem:[%s9 + $0x10] sm:$0xff]
        %v3391 = vld [vmem:[%s9 + $0x18] sm:$0xff]
        %v3392 = vld [vmem:[%s10] sm:$0x1]
        %v3394 = vsel %vm526, %v3387, 0
        %3396 = vmatprep.subr.mxu0 0.0
        %3397 = vmatpush1.msra.mxu0 %v3388
        %3398 = vmatprep.subr.mxu0 0.0
        %3399 = vmatpush1.msra.mxu0 %v3389
        %3400 = vmatprep.subr.mxu0 0.0
        %3401 = vmatpush1.msra.mxu0 %v3390
        %3402 = vmatprep.subr.mxu0 0.0
        %3403 = vmatpush1.msra.mxu0 %v3391
        %3404 = vmatprep.subr.mxu0 0.0
        %3405 = vmatpush1.msra.mxu0 0.0
        %3406 = vmatprep.subr.mxu0 0.0
        %3407 = vmatpush1.msra.mxu0 0.0
        %3408 = vmatprep.subr.mxu0 0.0
        %3409 = vmatpush1.msra.mxu0 0.0
        %3410 = vmatprep.subr.mxu0 0.0
        %3411 = vmatpush1.msra.mxu0 0.0
        %3412 = vmatprep.subr.mxu0 0.0
        %3413 = vmatpush1.msra.mxu0 0.0
        %3414 = vmatprep.subr.mxu0 0.0
        %3415 = vmatpush1.msra.mxu0 0.0
        %3416 = vmatprep.subr.mxu0 0.0
        %3417 = vmatpush1.msra.mxu0 0.0
        %3418 = vmatprep.subr.mxu0 0.0
        %3419 = vmatpush1.msra.mxu0 0.0
        %3420 = vmatprep.subr.mxu0 0.0
        %3421 = vmatpush1.msra.mxu0 0.0
        %3422 = vmatprep.subr.mxu0 0.0
        %3423 = vmatpush1.msra.mxu0 0.0
        %3424 = vmatprep.subr.mxu0 0.0
        %3425 = vmatpush1.msra.mxu0 0.0
        %3426 = vmatprep.subr.mxu0 0.0
        %3427 = vmatpush1.msra.mxu0 0.0
        %3428 = vmatprep.subr.mxu0 0.0
        %3429 = vmatpush1.msra.mxu0 0.0
        %3430 = vmatprep.subr.mxu0 0.0
        %3431 = vmatpush1.msra.mxu0 0.0
        %3432 = vmatprep.subr.mxu0 0.0
        %3433 = vmatpush1.msra.mxu0 0.0
        %3434 = vmatprep.subr.mxu0 0.0
        %3435 = vmatpush1.msra.mxu0 0.0
        %3436 = vmatprep.subr.mxu0 0.0
        %3437 = vmatpush1.msra.mxu0 0.0
        %3438 = vmatprep.subr.mxu0 0.0
        %3439 = vmatpush1.msra.mxu0 0.0
        %3440 = vmatprep.subr.mxu0 0.0
        %3441 = vmatpush1.msra.mxu0 0.0
        %3442 = vmatprep.subr.mxu0 0.0
        %3443 = vmatpush1.msra.mxu0 0.0
        %3444 = vmatprep.subr.mxu0 0.0
        %3445 = vmatpush1.msra.mxu0 0.0
        %3446 = vmatprep.subr.mxu0 0.0
        %3447 = vmatpush1.msra.mxu0 0.0
        %3448 = vmatprep.subr.mxu0 0.0
        %3449 = vmatpush1.msra.mxu0 0.0
        %3450 = vmatprep.subr.mxu0 0.0
        %3451 = vmatpush1.msra.mxu0 0.0
        %3452 = vmatprep.subr.mxu0 0.0
        %3453 = vmatpush1.msra.mxu0 0.0
        %3454 = vmatprep.subr.mxu0 0.0
        %3455 = vmatpush1.msra.mxu0 0.0
        %3456 = vmatprep.subr.mxu0 0.0
        %3457 = vmatpush1.msra.mxu0 0.0
        %3458 = vmatprep.subr.mxu0 0.0
        %3459 = vmatpush1.msra.mxu0 0.0
        %3460 = vmatprep.mubr.f32.mxu0 0.0
        %3461 = vmatmul.mubr.f32.gmra.mrb[0].mxu0 %v3394
        %v3462 = vpop.f32.mrb[0].mxu0
        %v3463 = vadd.f32 %v3392, %v3462
        %v3464 = vpop.f32.mrb[0].mxu0
        %3465 = vdwg.mxu0
        %3466 = vst [vmem:[%s378] sm:$0x1] %v3463
        %s3467 = sand.u32 %s269, 1
        %s3468 = scalar_lea.sflag [#allocation3], %s3467
        %s3469 = sand.u32 %s269, 1
        %s3470 = scalar_lea.vmem [#allocation2], %s3469
        // Predicated region
        $region65: #{vit_forward.1} parent=63 // pred_check
          %p3471 = pneg %p279
        $region66: #{vit_forward.1} parent=63 // pred_check_branch
          %3473 = sbr.rel (%p3471) target = $region68
        $region67: #{vit_forward.1} parent=63 // pred_region
          %s3475 = ssub.s32 16, 16
          %3476 = vsyncadd %s3468, %s3475
          %s3477 = smul.addr %s25, 16
          %s3478 = scalar_lea.hbm %s11, %s3477
          %s3480 = sshll.u32 %s3470, 4
          %s3481 = int_to_ptr.vmem [resolvable:$true] %s3480
          %3483 = dma.vmem_to_hbm [thread:$0]  %s3481, 16, %s3478, %s3468
        $region68: #{vit_forward.1} parent=63 // pred_fallthru
          _
      $region64: #{vit_forward.1} parent=5 // pred_fallthru
        _
      %p3484 = scmp.le.s32.totalorder 2, %s20
      // Predicated region
      $region69: #{vit_forward.1} parent=5 // pred_check
        %p3485 = pneg %p3484
      $region70: #{vit_forward.1} parent=5 // pred_check_branch
        %3487 = sbr.rel (%p3485) target = $region72
      $region71: #{vit_forward.1} parent=5 // pred_region
        %s3488 = ssub.s32 %s20, 2
        // Predicated region
        $region73: #{vit_forward.1} parent=71 // pred_check
          %p3489 = pneg %p285
        $region74: #{vit_forward.1} parent=71 // pred_check_branch
          %3491 = sbr.rel (%p3489) target = $region76
        $region75: #{vit_forward.1} parent=71 // pred_region
          %s3492 = sand.u32 %s270, 1
          %s3493 = scalar_lea.sflag [#allocation3], %s3492
          %s3494 = sand.u32 %s270, 1
          %s3495 = scalar_lea.vmem [#allocation2], %s3494
          %3496 = dma.done %s3493, 16
        $region76: #{vit_forward.1} parent=71 // pred_fallthru
          _
      $region72: #{vit_forward.1} parent=5 // pred_fallthru
        _
    $region6: #{vit_forward.1} parent=1 // loop_footer
      %s24 = sadd.s32 1, %s20
    $region7: #{vit_forward.1} parent=1 // loop_footer_branch
      %19 = sbr.rel target = $region3
    $region8: #{vit_forward.1} parent=1 // loop_exit
      _
    %3497 = vsyncpa [#allocation3], 1
    %s3498 = scalar_lea.sflag [#allocation3], 1
    %3499 = vsyncpa %s3498, 1

</llo_original>
